<compile_context>
chip_gen: v7x
topology: tpu7x:2x2x1
jax: 0.10.0
libtpu: 0.0.40
codegen_flags: <defaults>
</compile_context>

<pallas_src>
import functools

import jax
import jax.numpy as jnp
from jax import lax
from jax.experimental import pallas as pl
from jax.experimental.pallas import tpu as pltpu


def _bottleneck_kernel(x_ref, s1_ref, b1_ref, w1_ref, b2_ref, w2_ref,
                       b3_ref, w3_ref, o_ref, pad_ref, *, H, W):
    HW = H * W
    Cm = w2_ref.shape[2]            # padded mid-channel count (lane multiple)
    TOP = W + 8                     # zero halo rows above h2 inside pad_ref
    Rp = pad_ref.shape[0]           # = HW + 2*(W+8)

    # --- BN1 + ReLU + 1x1 conv (bf16 MXU, f32 accum).  BN2 scale is folded into w1. ---
    x = x_ref[0].astype(jnp.float32)                                   # (HW, Cp)
    a = jnp.maximum(x * s1_ref[...] + b1_ref[...], 0.0).astype(jnp.bfloat16)
    h1 = jnp.dot(a, w1_ref[...], preferred_element_type=jnp.float32)   # (HW, Cm) f32

    # --- BN2 bias + ReLU (f32), single cast to bf16 ---
    h2 = jnp.maximum(h1 + b2_ref[...], 0.0).astype(jnp.bfloat16)       # (HW, Cm)

    # Vertically zero-padded copy of h2.  The halo zeroing is intentionally done every
    # iteration (not @pl.when(program_id==0)): under "parallel" grid semantics each
    # TensorCore has its own scratch and only one core would execute iteration 0.
    pad_ref[0:TOP, :] = jnp.zeros((TOP, Cm), jnp.bfloat16)
    pad_ref[TOP + HW:Rp, :] = jnp.zeros((Rp - TOP - HW, Cm), jnp.bfloat16)
    pad_ref[TOP:TOP + HW, :] = h2

    # --- 3x3 conv, stride 1, padding 1: 9 per-tap matmuls accumulated in f32. ---
    # Output position p = y*W + x reads h2[y+ky-1, x+kx-1] = pad_ref[TOP + p + (ky-1)*W + dx].
    # Vertical out-of-range taps hit the zero halo rows; horizontal wrap-around is killed
    # by a column mask on the HW-row slice.  BN3 scale is folded into w2.
    col = lax.broadcasted_iota(jnp.int32, (HW, 1), 0) % W              # output column
    acc = jnp.zeros((HW, Cm), jnp.float32)
    for kx in range(3):
        dx = kx - 1
        mask = None
        if dx != 0:
            mask = (col + dx >= 0) & (col + dx < W)
        for ky in range(3):
            k = ky * 3 + kx
            start = TOP + (ky - 1) * W + dx                            # static, >= 0
            tap = pad_ref[start:start + HW, :]                         # (HW, Cm) bf16
            if mask is not None:
                tap = jnp.where(mask, tap, jnp.zeros_like(tap))
            acc = acc + jnp.dot(tap, w2_ref[k],
                                preferred_element_type=jnp.float32)

    # --- BN3 bias + ReLU + final 1x1 conv ---
    h3 = jnp.maximum(acc + b3_ref[...], 0.0).astype(jnp.bfloat16)
    o_ref[0] = jnp.dot(h3, w3_ref[...],
                       preferred_element_type=jnp.float32).astype(o_ref.dtype)


def _fold_bn(gamma, beta, mean, var, eps=1e-5):
    scale = gamma / jnp.sqrt(var + eps)
    bias = beta - mean * scale
    return scale.reshape(1, -1), bias.reshape(1, -1)


def _round_up(x, m):
    return (x + m - 1) // m * m


def _pad_axis(a, axis, target):
    amt = target - a.shape[axis]
    if amt == 0:
        return a
    widths = [(0, 0)] * a.ndim
    widths[axis] = (0, amt)
    return jnp.pad(a, widths)


def _vmem_limit_bytes():
    # ~3/4 of physical VMEM, capped at 96 MiB: 96 MiB on v5e/v6e (128 MiB), 48 MiB on
    # v7x (64 MiB).  Fallback if the query is unavailable.
    try:
        cap = pltpu.get_tpu_info().vmem_capacity_bytes
    except Exception:
        cap = 128 * 1024 * 1024
    return int(min(96 * 1024 * 1024, (cap * 3) // 4))


def bottleneck_ru_forward(x_nchw, params):
    (g1, be1, m1, v1, w1,
     g2, be2, m2, v2, w2,
     g3, be3, m3, v3, w3) = params
    N, C, H, W = x_nchw.shape
    Cmid = w1.shape[0]
    Cout = w3.shape[0]
    HW = H * W

    LANE = 128
    Cp = _round_up(C, LANE)
    Mp = _round_up(Cmid, LANE)
    Op = _round_up(Cout, LANE)

    # NCHW -> NHWC -> (N, HW, C), channels zero-padded to a lane multiple, bf16 at the
    # HBM boundary (halves input DMA bytes; kernel upcasts before BN1).        (glue)
    x2d = jnp.transpose(x_nchw, (0, 2, 3, 1)).reshape(N, HW, C)
    x2d = _pad_axis(x2d, 2, Cp).astype(jnp.bfloat16)

    s1, b1 = _fold_bn(g1, be1, m1, v1)
    s2, b2 = _fold_bn(g2, be2, m2, v2)
    s3, b3 = _fold_bn(g3, be3, m3, v3)

    # Fold the BN2 / BN3 scales into the preceding conv weights (convs are linear per
    # output channel); only the bias adds + ReLU remain in the kernel.
    w1m = jnp.transpose(w1[:, :, 0, 0]) * s2                              # (C, Cmid)
    w2t = jnp.transpose(w2, (2, 3, 1, 0)) * s3.reshape(1, 1, 1, -1)       # (3,3,Cin,Cout)
    w3m = jnp.transpose(w3[:, :, 0, 0])                                   # (Cmid, Cout)

    # Pad + cast weights to bf16 for the MXU.
    w1p = _pad_axis(_pad_axis(w1m, 0, Cp), 1, Mp).astype(jnp.bfloat16)            # (Cp, Mp)
    w2p = (jnp.zeros((9, Mp, Mp), jnp.float32)
           .at[:, :Cmid, :Cmid].set(w2t.reshape(9, Cmid, Cmid))
           .astype(jnp.bfloat16))                                                 # (9, Mp, Mp)
    w3p = _pad_axis(_pad_axis(w3m, 0, Mp), 1, Op).astype(jnp.bfloat16)            # (Mp, Op)

    s1p = _pad_axis(s1, 1, Cp)
    b1p = _pad_axis(b1, 1, Cp)
    b2p = _pad_axis(b2, 1, Mp)
    b3p = _pad_axis(b3, 1, Mp)

    kernel = functools.partial(_bottleneck_kernel, H=H, W=W)
    Rp = HW + 2 * (W + 8)            # vertically padded scratch rows

    def full(shape):
        # Constant-index operand.  (Ideally single-buffered via pipeline_mode=
        # pl.Buffered(1) at large channel counts; footprint is negligible here.)
        return pl.BlockSpec(shape, lambda n: (0,) * len(shape))

    # TODO(synk): for ResNet-scale HW x channels on v7x (64 MiB VMEM) the HW axis should
    # additionally be tiled over a second grid dimension with 1-row halos; unnecessary
    # at these test shapes.
    out = pl.pallas_call(
        kernel,
        out_shape=jax.ShapeDtypeStruct((N, HW, Op), jnp.bfloat16),
        grid=(N,),
        in_specs=[
            pl.BlockSpec((1, HW, Cp), lambda n: (n, 0, 0)),
            full((1, Cp)), full((1, Cp)), full((Cp, Mp)),
            full((1, Mp)), full((9, Mp, Mp)),
            full((1, Mp)), full((Mp, Op)),
        ],
        out_specs=pl.BlockSpec((1, HW, Op), lambda n: (n, 0, 0)),
        scratch_shapes=[
            pltpu.VMEM((Rp, Mp), jnp.bfloat16),   # vertically padded h2 (bf16)
        ],
        compiler_params=pltpu.CompilerParams(
            dimension_semantics=("parallel",),
            vmem_limit_bytes=_vmem_limit_bytes()),
    )(x2d, s1p, b1p, w1p, b2p, w2p, b3p, w3p)

    # (N, HW, Op) -> NCHW, drop channel padding.  Output stays bf16.
    return jnp.transpose(out.reshape(N, H, W, Op)[:, :, :, :Cout], (0, 3, 1, 2))


# ------------------------- pure-JAX reference -------------------------
def _conv(x, w, padding):
    return lax.conv_general_dilated(
        x, w, window_strides=(1, 1), padding=padding,
        dimension_numbers=('NCHW', 'OIHW', 'NCHW'),
        precision=lax.Precision.HIGHEST)


def bottleneck_ru_reference(x, params):
    (g1, be1, m1, v1, w1,
     g2, be2, m2, v2, w2,
     g3, be3, m3, v3, w3) = params

    def bn(x, g, b, m, v, eps=1e-5):
        s = g / jnp.sqrt(v + eps)
        return x * s[None, :, None, None] + (b - m * s)[None, :, None, None]

    h = jax.nn.relu(bn(x, g1, be1, m1, v1))
    h = _conv(h, w1, 'VALID')
    h = jax.nn.relu(bn(h, g2, be2, m2, v2))
    h = _conv(h, w2, ((1, 1), (1, 1)))
    h = jax.nn.relu(bn(h, g3, be3, m3, v3))
    return _conv(h, w3, 'VALID')


if __name__ == "__main__":
    key = jax.random.PRNGKey(0)
    N, C, H, W = 2, 8, 16, 16
    ratio = 2
    Cmid = C // 2
    Cout = int(C * ratio)

    keys = jax.random.split(key, 16)
    x = jax.random.normal(keys[0], (N, C, H, W), jnp.float32)

    def bn_params(kg, kb, km, kv, ch):
        g = 0.5 + jax.random.uniform(kg, (ch,), jnp.float32)
        b = 0.1 * jax.random.normal(kb, (ch,), jnp.float32)
        m = 0.1 * jax.random.normal(km, (ch,), jnp.float32)
        v = 0.5 + jax.random.uniform(kv, (ch,), jnp.float32)
        return g, b, m, v

    g1, be1, m1, v1 = bn_params(keys[1], keys[2], keys[3], keys[4], C)
    w1 = 0.2 * jax.random.normal(keys[5], (Cmid, C, 1, 1), jnp.float32)
    g2, be2, m2, v2 = bn_params(keys[6], keys[7], keys[8], keys[9], Cmid)
    w2 = 0.2 * jax.random.normal(keys[10], (Cmid, Cmid, 3, 3), jnp.float32)
    g3, be3, m3, v3 = bn_params(keys[11], keys[12], keys[13], keys[14], Cmid)
    w3 = 0.2 * jax.random.normal(keys[15], (Cout, Cmid, 1, 1), jnp.float32)

    params = (g1, be1, m1, v1, w1,
              g2, be2, m2, v2, w2,
              g3, be3, m3, v3, w3)

    out = bottleneck_ru_forward(x, params)
    out = jax.block_until_ready(out)

    ref = bottleneck_ru_reference(x, params)
    assert out.shape == (N, Cout, H, W), out.shape
    out_f32 = out.astype(jnp.float32)
    max_err = float(jnp.max(jnp.abs(out_f32 - ref)))
    # bf16 input/output + bf16 MXU matmuls: tolerate bf16-level error.
    assert jnp.allclose(out_f32, ref, atol=5e-2, rtol=5e-2), f"max abs err = {max_err}"
    print("KERNEL_OK")
</pallas_src>

<mosaic_0001>
module attributes {stable_mosaic.version = 11 : i64} {
  func.func @_bottleneck_kernel(%arg0: i32, %arg1: memref<1x256x128xbf16, #tpu.memory_space<vmem>>, %arg2: memref<1x128xf32, #tpu.memory_space<vmem>>, %arg3: memref<1x128xf32, #tpu.memory_space<vmem>>, %arg4: memref<128x128xbf16, #tpu.memory_space<vmem>>, %arg5: memref<1x128xf32, #tpu.memory_space<vmem>>, %arg6: memref<9x128x128xbf16, #tpu.memory_space<vmem>>, %arg7: memref<1x128xf32, #tpu.memory_space<vmem>>, %arg8: memref<128x128xbf16, #tpu.memory_space<vmem>>, %arg9: memref<1x256x128xbf16, #tpu.memory_space<vmem>>, %arg10: memref<304x128xbf16, #tpu.memory_space<vmem>>) attributes {dimension_semantics = [#tpu.dimension_semantics<parallel>], iteration_bounds = array<i64: 2>, scalar_prefetch = 0 : i64, scratch_operands = 1 : i64, tpu.core_type = #tpu.core_type<tc>, window_params = [{transform_indices = @transform_0, window_bounds = array<i64: 1, 256, 128>}, {pipeline_mode = #tpu.pipeline_mode<synchronous>, transform_indices = @transform_1, window_bounds = array<i64: 1, 128>}, {pipeline_mode = #tpu.pipeline_mode<synchronous>, transform_indices = @transform_2, window_bounds = array<i64: 1, 128>}, {pipeline_mode = #tpu.pipeline_mode<synchronous>, transform_indices = @transform_3, window_bounds = array<i64: 128, 128>}, {pipeline_mode = #tpu.pipeline_mode<synchronous>, transform_indices = @transform_4, window_bounds = array<i64: 1, 128>}, {pipeline_mode = #tpu.pipeline_mode<synchronous>, transform_indices = @transform_5, window_bounds = array<i64: 9, 128, 128>}, {pipeline_mode = #tpu.pipeline_mode<synchronous>, transform_indices = @transform_6, window_bounds = array<i64: 1, 128>}, {pipeline_mode = #tpu.pipeline_mode<synchronous>, transform_indices = @transform_7, window_bounds = array<i64: 128, 128>}, {transform_indices = @transform_8, window_bounds = array<i64: 1, 256, 128>}]} {
    %c0 = arith.constant 0 : index
    %c0_0 = arith.constant 0 : index
    %c0_1 = arith.constant 0 : index
    %0 = vector.load %arg1[%c0, %c0_0, %c0_1] : memref<1x256x128xbf16, #tpu.memory_space<vmem>>, vector<1x256x128xbf16>
    %1 = vector.shape_cast %0 : vector<1x256x128xbf16> to vector<256x128xbf16>
    %2 = arith.extf %1 : vector<256x128xbf16> to vector<256x128xf32>
    %c0_2 = arith.constant 0 : index
    %c0_3 = arith.constant 0 : index
    %3 = vector.load %arg2[%c0_2, %c0_3] : memref<1x128xf32, #tpu.memory_space<vmem>>, vector<1x128xf32>
    %4 = vector.broadcast %3 : vector<1x128xf32> to vector<256x128xf32>
    %5 = arith.mulf %2, %4 : vector<256x128xf32>
    %c0_4 = arith.constant 0 : index
    %c0_5 = arith.constant 0 : index
    %6 = vector.load %arg3[%c0_4, %c0_5] : memref<1x128xf32, #tpu.memory_space<vmem>>, vector<1x128xf32>
    %7 = vector.broadcast %6 : vector<1x128xf32> to vector<256x128xf32>
    %8 = arith.addf %5, %7 : vector<256x128xf32>
    %cst = arith.constant 0.000000e+00 : f32
    %9 = vector.broadcast %cst : f32 to vector<256x128xf32>
    %10 = arith.maximumf %8, %9 : vector<256x128xf32>
    %11 = arith.truncf %10 : vector<256x128xf32> to vector<256x128xbf16>
    %c0_6 = arith.constant 0 : index
    %c0_7 = arith.constant 0 : index
    %12 = vector.load %arg4[%c0_6, %c0_7] : memref<128x128xbf16, #tpu.memory_space<vmem>>, vector<128x128xbf16>
    %cst_8 = arith.constant dense<0.000000e+00> : vector<256x128xf32>
    %13 = tpu.matmul %11, %12, %cst_8 {dimension_numbers = #tpu.dot_dimension_numbers<[1], [0], [0], [1], [0, 0, 1, 1], [], []>} : vector<256x128xbf16>, vector<128x128xbf16>, vector<256x128xf32> -> vector<256x128xf32>
    %c0_9 = arith.constant 0 : index
    %c0_10 = arith.constant 0 : index
    %14 = vector.load %arg5[%c0_9, %c0_10] : memref<1x128xf32, #tpu.memory_space<vmem>>, vector<1x128xf32>
    %15 = vector.broadcast %14 : vector<1x128xf32> to vector<256x128xf32>
    %16 = arith.addf %13, %15 : vector<256x128xf32>
    %cst_11 = arith.constant 0.000000e+00 : f32
    %17 = vector.broadcast %cst_11 : f32 to vector<256x128xf32>
    %18 = arith.maximumf %16, %17 : vector<256x128xf32>
    %19 = arith.truncf %18 : vector<256x128xf32> to vector<256x128xbf16>
    %cst_12 = arith.constant 0.000000e+00 : bf16
    %20 = vector.broadcast %cst_12 : bf16 to vector<24x128xbf16>
    %c0_13 = arith.constant 0 : index
    %c0_14 = arith.constant 0 : index
    %21 = vector.load %arg10[%c0_13, %c0_14] : memref<304x128xbf16, #tpu.memory_space<vmem>>, vector<24x128xbf16>
    tpu.vector_store %arg10[%c0_13, %c0_14], %20 {strides = array<i32>} : memref<304x128xbf16, #tpu.memory_space<vmem>>, vector<24x128xbf16>,
    %cst_15 = arith.constant 0.000000e+00 : bf16
    %22 = vector.broadcast %cst_15 : bf16 to vector<24x128xbf16>
    %c280 = arith.constant 280 : index
    %c0_16 = arith.constant 0 : index
    %23 = vector.load %arg10[%c280, %c0_16] : memref<304x128xbf16, #tpu.memory_space<vmem>>, vector<24x128xbf16>
    tpu.vector_store %arg10[%c280, %c0_16], %22 {strides = array<i32>} : memref<304x128xbf16, #tpu.memory_space<vmem>>, vector<24x128xbf16>,
    %c24 = arith.constant 24 : index
    %c0_17 = arith.constant 0 : index
    %24 = vector.load %arg10[%c24, %c0_17] : memref<304x128xbf16, #tpu.memory_space<vmem>>, vector<256x128xbf16>
    tpu.vector_store %arg10[%c24, %c0_17], %19 {strides = array<i32>} : memref<304x128xbf16, #tpu.memory_space<vmem>>, vector<256x128xbf16>,
    %25 = tpu.iota {dimensions = array<i32: 0>} : vector<256x1xi32>
    %c16_i32 = arith.constant 16 : i32
    %c0_i32 = arith.constant 0 : i32
    %26 = arith.cmpi eq, %c16_i32, %c0_i32 : i32
    %c1_i32 = arith.constant 1 : i32
    %27 = arith.select %26, %c1_i32, %c16_i32 : i32
    %28 = vector.broadcast %27 : i32 to vector<256x1xi32>
    %29 = arith.remsi %25, %28 : vector<256x1xi32>
    %c0_i32_18 = arith.constant 0 : i32
    %30 = vector.broadcast %c0_i32_18 : i32 to vector<256x1xi32>
    %31 = arith.cmpi ne, %29, %30 : vector<256x1xi32>
    %c0_i32_19 = arith.constant 0 : i32
    %32 = vector.broadcast %c0_i32_19 : i32 to vector<256x1xi32>
    %33 = arith.cmpi slt, %29, %32 : vector<256x1xi32>
    %c0_i32_20 = arith.constant 0 : i32
    %34 = arith.cmpi slt, %27, %c0_i32_20 : i32
    %35 = vector.broadcast %34 : i1 to vector<256x1xi1>
    %36 = vector.broadcast %35 : vector<256x1xi1> to vector<256x1xi1>
    %37 = arith.xori %33, %36 : vector<256x1xi1>
    %38 = arith.andi %37, %31 : vector<256x1xi1>
    %39 = vector.broadcast %27 : i32 to vector<256x1xi32>
    %40 = arith.addi %29, %39 : vector<256x1xi32>
    %41 = arith.select %38, %40, %29 : vector<256x1xi1>, vector<256x1xi32>
    %cst_21 = arith.constant 0.000000e+00 : f32
    %42 = vector.broadcast %cst_21 : f32 to vector<256x128xf32>
    %c-1_i32 = arith.constant -1 : i32
    %43 = vector.broadcast %c-1_i32 : i32 to vector<256x1xi32>
    %44 = arith.addi %41, %43 : vector<256x1xi32>
    %c0_i32_22 = arith.constant 0 : i32
    %45 = vector.broadcast %c0_i32_22 : i32 to vector<256x1xi32>
    %46 = arith.cmpi sge, %44, %45 : vector<256x1xi32>
    %c-1_i32_23 = arith.constant -1 : i32
    %47 = vector.broadcast %c-1_i32_23 : i32 to vector<256x1xi32>
    %48 = arith.addi %41, %47 : vector<256x1xi32>
    %c16_i32_24 = arith.constant 16 : i32
    %49 = vector.broadcast %c16_i32_24 : i32 to vector<256x1xi32>
    %50 = arith.cmpi slt, %48, %49 : vector<256x1xi32>
    %51 = arith.andi %46, %50 : vector<256x1xi1>
    %c7 = arith.constant 7 : index
    %c0_25 = arith.constant 0 : index
    %52 = vector.load %arg10[%c7, %c0_25] : memref<304x128xbf16, #tpu.memory_space<vmem>>, vector<256x128xbf16>
    %cst_26 = arith.constant 0.000000e+00 : bf16
    %53 = vector.broadcast %cst_26 : bf16 to vector<256x128xbf16>
    %54 = vector.shape_cast %51 : vector<256x1xi1> to vector<256x1xi1>
    %55 = vector.broadcast %54 : vector<256x1xi1> to vector<256x128xi1>
    %56 = arith.select %55, %52, %53 : vector<256x128xi1>, vector<256x128xbf16>
    %c0_27 = arith.constant 0 : index
    %c0_28 = arith.constant 0 : index
    %c0_29 = arith.constant 0 : index
    %57 = vector.load %arg6[%c0_27, %c0_28, %c0_29] : memref<9x128x128xbf16, #tpu.memory_space<vmem>>, vector<1x128x128xbf16>
    %58 = vector.shape_cast %57 : vector<1x128x128xbf16> to vector<128x128xbf16>
    %cst_30 = arith.constant dense<0.000000e+00> : vector<256x128xf32>
    %59 = tpu.matmul %56, %58, %cst_30 {dimension_numbers = #tpu.dot_dimension_numbers<[1], [0], [0], [1], [0, 0, 1, 1], [], []>} : vector<256x128xbf16>, vector<128x128xbf16>, vector<256x128xf32> -> vector<256x128xf32>
    %60 = arith.addf %42, %59 : vector<256x128xf32>
    %c23 = arith.constant 23 : index
    %c0_31 = arith.constant 0 : index
    %61 = vector.load %arg10[%c23, %c0_31] : memref<304x128xbf16, #tpu.memory_space<vmem>>, vector<256x128xbf16>
    %cst_32 = arith.constant 0.000000e+00 : bf16
    %62 = vector.broadcast %cst_32 : bf16 to vector<256x128xbf16>
    %63 = vector.shape_cast %51 : vector<256x1xi1> to vector<256x1xi1>
    %64 = vector.broadcast %63 : vector<256x1xi1> to vector<256x128xi1>
    %65 = arith.select %64, %61, %62 : vector<256x128xi1>, vector<256x128xbf16>
    %c3 = arith.constant 3 : index
    %c0_33 = arith.constant 0 : index
    %c0_34 = arith.constant 0 : index
    %66 = vector.load %arg6[%c3, %c0_33, %c0_34] : memref<9x128x128xbf16, #tpu.memory_space<vmem>>, vector<1x128x128xbf16>
    %67 = vector.shape_cast %66 : vector<1x128x128xbf16> to vector<128x128xbf16>
    %cst_35 = arith.constant dense<0.000000e+00> : vector<256x128xf32>
    %68 = tpu.matmul %65, %67, %cst_35 {dimension_numbers = #tpu.dot_dimension_numbers<[1], [0], [0], [1], [0, 0, 1, 1], [], []>} : vector<256x128xbf16>, vector<128x128xbf16>, vector<256x128xf32> -> vector<256x128xf32>
    %69 = arith.addf %60, %68 : vector<256x128xf32>
    %c39 = arith.constant 39 : index
    %c0_36 = arith.constant 0 : index
    %70 = vector.load %arg10[%c39, %c0_36] : memref<304x128xbf16, #tpu.memory_space<vmem>>, vector<256x128xbf16>
    %cst_37 = arith.constant 0.000000e+00 : bf16
    %71 = vector.broadcast %cst_37 : bf16 to vector<256x128xbf16>
    %72 = vector.shape_cast %51 : vector<256x1xi1> to vector<256x1xi1>
    %73 = vector.broadcast %72 : vector<256x1xi1> to vector<256x128xi1>
    %74 = arith.select %73, %70, %71 : vector<256x128xi1>, vector<256x128xbf16>
    %c6 = arith.constant 6 : index
    %c0_38 = arith.constant 0 : index
    %c0_39 = arith.constant 0 : index
    %75 = vector.load %arg6[%c6, %c0_38, %c0_39] : memref<9x128x128xbf16, #tpu.memory_space<vmem>>, vector<1x128x128xbf16>
    %76 = vector.shape_cast %75 : vector<1x128x128xbf16> to vector<128x128xbf16>
    %cst_40 = arith.constant dense<0.000000e+00> : vector<256x128xf32>
    %77 = tpu.matmul %74, %76, %cst_40 {dimension_numbers = #tpu.dot_dimension_numbers<[1], [0], [0], [1], [0, 0, 1, 1], [], []>} : vector<256x128xbf16>, vector<128x128xbf16>, vector<256x128xf32> -> vector<256x128xf32>
    %78 = arith.addf %69, %77 : vector<256x128xf32>
    %c8 = arith.constant 8 : index
    %c0_41 = arith.constant 0 : index
    %79 = vector.load %arg10[%c8, %c0_41] : memref<304x128xbf16, #tpu.memory_space<vmem>>, vector<256x128xbf16>
    %c1 = arith.constant 1 : index
    %c0_42 = arith.constant 0 : index
    %c0_43 = arith.constant 0 : index
    %80 = vector.load %arg6[%c1, %c0_42, %c0_43] : memref<9x128x128xbf16, #tpu.memory_space<vmem>>, vector<1x128x128xbf16>
    %81 = vector.shape_cast %80 : vector<1x128x128xbf16> to vector<128x128xbf16>
    %cst_44 = arith.constant dense<0.000000e+00> : vector<256x128xf32>
    %82 = tpu.matmul %79, %81, %cst_44 {dimension_numbers = #tpu.dot_dimension_numbers<[1], [0], [0], [1], [0, 0, 1, 1], [], []>} : vector<256x128xbf16>, vector<128x128xbf16>, vector<256x128xf32> -> vector<256x128xf32>
    %83 = arith.addf %78, %82 : vector<256x128xf32>
    %c24_45 = arith.constant 24 : index
    %c0_46 = arith.constant 0 : index
    %84 = vector.load %arg10[%c24_45, %c0_46] : memref<304x128xbf16, #tpu.memory_space<vmem>>, vector<256x128xbf16>
    %c4 = arith.constant 4 : index
    %c0_47 = arith.constant 0 : index
    %c0_48 = arith.constant 0 : index
    %85 = vector.load %arg6[%c4, %c0_47, %c0_48] : memref<9x128x128xbf16, #tpu.memory_space<vmem>>, vector<1x128x128xbf16>
    %86 = vector.shape_cast %85 : vector<1x128x128xbf16> to vector<128x128xbf16>
    %cst_49 = arith.constant dense<0.000000e+00> : vector<256x128xf32>
    %87 = tpu.matmul %84, %86, %cst_49 {dimension_numbers = #tpu.dot_dimension_numbers<[1], [0], [0], [1], [0, 0, 1, 1], [], []>} : vector<256x128xbf16>, vector<128x128xbf16>, vector<256x128xf32> -> vector<256x128xf32>
    %88 = arith.addf %83, %87 : vector<256x128xf32>
    %c40 = arith.constant 40 : index
    %c0_50 = arith.constant 0 : index
    %89 = vector.load %arg10[%c40, %c0_50] : memref<304x128xbf16, #tpu.memory_space<vmem>>, vector<256x128xbf16>
    %c7_51 = arith.constant 7 : index
    %c0_52 = arith.constant 0 : index
    %c0_53 = arith.constant 0 : index
    %90 = vector.load %arg6[%c7_51, %c0_52, %c0_53] : memref<9x128x128xbf16, #tpu.memory_space<vmem>>, vector<1x128x128xbf16>
    %91 = vector.shape_cast %90 : vector<1x128x128xbf16> to vector<128x128xbf16>
    %cst_54 = arith.constant dense<0.000000e+00> : vector<256x128xf32>
    %92 = tpu.matmul %89, %91, %cst_54 {dimension_numbers = #tpu.dot_dimension_numbers<[1], [0], [0], [1], [0, 0, 1, 1], [], []>} : vector<256x128xbf16>, vector<128x128xbf16>, vector<256x128xf32> -> vector<256x128xf32>
    %93 = arith.addf %88, %92 : vector<256x128xf32>
    %c1_i32_55 = arith.constant 1 : i32
    %94 = vector.broadcast %c1_i32_55 : i32 to vector<256x1xi32>
    %95 = arith.addi %41, %94 : vector<256x1xi32>
    %c0_i32_56 = arith.constant 0 : i32
    %96 = vector.broadcast %c0_i32_56 : i32 to vector<256x1xi32>
    %97 = arith.cmpi sge, %95, %96 : vector<256x1xi32>
    %c1_i32_57 = arith.constant 1 : i32
    %98 = vector.broadcast %c1_i32_57 : i32 to vector<256x1xi32>
    %99 = arith.addi %41, %98 : vector<256x1xi32>
    %c16_i32_58 = arith.constant 16 : i32
    %100 = vector.broadcast %c16_i32_58 : i32 to vector<256x1xi32>
    %101 = arith.cmpi slt, %99, %100 : vector<256x1xi32>
    %102 = arith.andi %97, %101 : vector<256x1xi1>
    %c9 = arith.constant 9 : index
    %c0_59 = arith.constant 0 : index
    %103 = vector.load %arg10[%c9, %c0_59] : memref<304x128xbf16, #tpu.memory_space<vmem>>, vector<256x128xbf16>
    %cst_60 = arith.constant 0.000000e+00 : bf16
    %104 = vector.broadcast %cst_60 : bf16 to vector<256x128xbf16>
    %105 = vector.shape_cast %102 : vector<256x1xi1> to vector<256x1xi1>
    %106 = vector.broadcast %105 : vector<256x1xi1> to vector<256x128xi1>
    %107 = arith.select %106, %103, %104 : vector<256x128xi1>, vector<256x128xbf16>
    %c2 = arith.constant 2 : index
    %c0_61 = arith.constant 0 : index
    %c0_62 = arith.constant 0 : index
    %108 = vector.load %arg6[%c2, %c0_61, %c0_62] : memref<9x128x128xbf16, #tpu.memory_space<vmem>>, vector<1x128x128xbf16>
    %109 = vector.shape_cast %108 : vector<1x128x128xbf16> to vector<128x128xbf16>
    %cst_63 = arith.constant dense<0.000000e+00> : vector<256x128xf32>
    %110 = tpu.matmul %107, %109, %cst_63 {dimension_numbers = #tpu.dot_dimension_numbers<[1], [0], [0], [1], [0, 0, 1, 1], [], []>} : vector<256x128xbf16>, vector<128x128xbf16>, vector<256x128xf32> -> vector<256x128xf32>
    %111 = arith.addf %93, %110 : vector<256x128xf32>
    %c25 = arith.constant 25 : index
    %c0_64 = arith.constant 0 : index
    %112 = vector.load %arg10[%c25, %c0_64] : memref<304x128xbf16, #tpu.memory_space<vmem>>, vector<256x128xbf16>
    %cst_65 = arith.constant 0.000000e+00 : bf16
    %113 = vector.broadcast %cst_65 : bf16 to vector<256x128xbf16>
    %114 = vector.shape_cast %102 : vector<256x1xi1> to vector<256x1xi1>
    %115 = vector.broadcast %114 : vector<256x1xi1> to vector<256x128xi1>
    %116 = arith.select %115, %112, %113 : vector<256x128xi1>, vector<256x128xbf16>
    %c5 = arith.constant 5 : index
    %c0_66 = arith.constant 0 : index
    %c0_67 = arith.constant 0 : index
    %117 = vector.load %arg6[%c5, %c0_66, %c0_67] : memref<9x128x128xbf16, #tpu.memory_space<vmem>>, vector<1x128x128xbf16>
    %118 = vector.shape_cast %117 : vector<1x128x128xbf16> to vector<128x128xbf16>
    %cst_68 = arith.constant dense<0.000000e+00> : vector<256x128xf32>
    %119 = tpu.matmul %116, %118, %cst_68 {dimension_numbers = #tpu.dot_dimension_numbers<[1], [0], [0], [1], [0, 0, 1, 1], [], []>} : vector<256x128xbf16>, vector<128x128xbf16>, vector<256x128xf32> -> vector<256x128xf32>
    %120 = arith.addf %111, %119 : vector<256x128xf32>
    %c41 = arith.constant 41 : index
    %c0_69 = arith.constant 0 : index
    %121 = vector.load %arg10[%c41, %c0_69] : memref<304x128xbf16, #tpu.memory_space<vmem>>, vector<256x128xbf16>
    %cst_70 = arith.constant 0.000000e+00 : bf16
    %122 = vector.broadcast %cst_70 : bf16 to vector<256x128xbf16>
    %123 = vector.shape_cast %102 : vector<256x1xi1> to vector<256x1xi1>
    %124 = vector.broadcast %123 : vector<256x1xi1> to vector<256x128xi1>
    %125 = arith.select %124, %121, %122 : vector<256x128xi1>, vector<256x128xbf16>
    %c8_71 = arith.constant 8 : index
    %c0_72 = arith.constant 0 : index
    %c0_73 = arith.constant 0 : index
    %126 = vector.load %arg6[%c8_71, %c0_72, %c0_73] : memref<9x128x128xbf16, #tpu.memory_space<vmem>>, vector<1x128x128xbf16>
    %127 = vector.shape_cast %126 : vector<1x128x128xbf16> to vector<128x128xbf16>
    %cst_74 = arith.constant dense<0.000000e+00> : vector<256x128xf32>
    %128 = tpu.matmul %125, %127, %cst_74 {dimension_numbers = #tpu.dot_dimension_numbers<[1], [0], [0], [1], [0, 0, 1, 1], [], []>} : vector<256x128xbf16>, vector<128x128xbf16>, vector<256x128xf32> -> vector<256x128xf32>
    %129 = arith.addf %120, %128 : vector<256x128xf32>
    %c0_75 = arith.constant 0 : index
    %c0_76 = arith.constant 0 : index
    %130 = vector.load %arg7[%c0_75, %c0_76] : memref<1x128xf32, #tpu.memory_space<vmem>>, vector<1x128xf32>
    %131 = vector.broadcast %130 : vector<1x128xf32> to vector<256x128xf32>
    %132 = arith.addf %129, %131 : vector<256x128xf32>
    %cst_77 = arith.constant 0.000000e+00 : f32
    %133 = vector.broadcast %cst_77 : f32 to vector<256x128xf32>
    %134 = arith.maximumf %132, %133 : vector<256x128xf32>
    %135 = arith.truncf %134 : vector<256x128xf32> to vector<256x128xbf16>
    %c0_78 = arith.constant 0 : index
    %c0_79 = arith.constant 0 : index
    %136 = vector.load %arg8[%c0_78, %c0_79] : memref<128x128xbf16, #tpu.memory_space<vmem>>, vector<128x128xbf16>
    %cst_80 = arith.constant dense<0.000000e+00> : vector<256x128xf32>
    %137 = tpu.matmul %135, %136, %cst_80 {dimension_numbers = #tpu.dot_dimension_numbers<[1], [0], [0], [1], [0, 0, 1, 1], [], []>} : vector<256x128xbf16>, vector<128x128xbf16>, vector<256x128xf32> -> vector<256x128xf32>
    %138 = arith.truncf %137 : vector<256x128xf32> to vector<256x128xbf16>
    %c0_81 = arith.constant 0 : index
    %c0_82 = arith.constant 0 : index
    %c0_83 = arith.constant 0 : index
    %139 = vector.load %arg9[%c0_81, %c0_82, %c0_83] : memref<1x256x128xbf16, #tpu.memory_space<vmem>>, vector<1x256x128xbf16>
    %140 = vector.shape_cast %139 : vector<1x256x128xbf16> to vector<256x128xbf16>
    %141 = vector.shape_cast %138 : vector<256x128xbf16> to vector<1x256x128xbf16>
    tpu.vector_store %arg9[%c0_81, %c0_82, %c0_83], %141 {strides = array<i32>} : memref<1x256x128xbf16, #tpu.memory_space<vmem>>, vector<1x256x128xbf16>,
    return
  }
  func.func @transform_0(%arg0: i32) -> (i32, i32, i32) {
    %c0_i32 = arith.constant 0 : i32
    %c0_i32_0 = arith.constant 0 : i32
    %c0_i32_1 = arith.constant 0 : i32
    return %arg0, %c0_i32, %c0_i32_0 : i32, i32, i32
  }
  func.func @transform_1(%arg0: i32) -> (i32, i32) {
    %c0_i32 = arith.constant 0 : i32
    %c0_i32_0 = arith.constant 0 : i32
    %c0_i32_1 = arith.constant 0 : i32
    return %c0_i32, %c0_i32_0 : i32, i32
  }
  func.func @transform_2(%arg0: i32) -> (i32, i32) {
    %c0_i32 = arith.constant 0 : i32
    %c0_i32_0 = arith.constant 0 : i32
    %c0_i32_1 = arith.constant 0 : i32
    return %c0_i32, %c0_i32_0 : i32, i32
  }
  func.func @transform_3(%arg0: i32) -> (i32, i32) {
    %c0_i32 = arith.constant 0 : i32
    %c0_i32_0 = arith.constant 0 : i32
    %c0_i32_1 = arith.constant 0 : i32
    return %c0_i32, %c0_i32_0 : i32, i32
  }
  func.func @transform_4(%arg0: i32) -> (i32, i32) {
    %c0_i32 = arith.constant 0 : i32
    %c0_i32_0 = arith.constant 0 : i32
    %c0_i32_1 = arith.constant 0 : i32
    return %c0_i32, %c0_i32_0 : i32, i32
  }
  func.func @transform_5(%arg0: i32) -> (i32, i32, i32) {
    %c0_i32 = arith.constant 0 : i32
    %c0_i32_0 = arith.constant 0 : i32
    %c0_i32_1 = arith.constant 0 : i32
    %c0_i32_2 = arith.constant 0 : i32
    return %c0_i32, %c0_i32_0, %c0_i32_1 : i32, i32, i32
  }
  func.func @transform_6(%arg0: i32) -> (i32, i32) {
    %c0_i32 = arith.constant 0 : i32
    %c0_i32_0 = arith.constant 0 : i32
    %c0_i32_1 = arith.constant 0 : i32
    return %c0_i32, %c0_i32_0 : i32, i32
  }
  func.func @transform_7(%arg0: i32) -> (i32, i32) {
    %c0_i32 = arith.constant 0 : i32
    %c0_i32_0 = arith.constant 0 : i32
    %c0_i32_1 = arith.constant 0 : i32
    return %c0_i32, %c0_i32_0 : i32, i32
  }
  func.func @transform_8(%arg0: i32) -> (i32, i32, i32) {
    %c0_i32 = arith.constant 0 : i32
    %c0_i32_0 = arith.constant 0 : i32
    %c0_i32_1 = arith.constant 0 : i32
    return %arg0, %c0_i32, %c0_i32_0 : i32, i32, i32
  }
}

</mosaic_0001>

<llo_original>
// kernel: tpu_custom_call.1
$region0: #{tpu_custom_call.1}
  #allocation0 [shape = 'u32[]', space=smem, size = 0x4, offset = 0x4, fixed_abs, tag = 'smem constant byte address 0x4 - core index']
  #allocation1 [shape = 'u32[144,128]{1,0:T(1,128)}', space=vmem, size = 0x12000, scoped, tag = 'internal scratch']
  #allocation2 [shape = 'bf16[304,128]{1,0:T(16,128)(2,1)}', space=vmem, size = 0x13000, scoped, tag = 'scratch operand']
  %s0 = inlined_call_operand.hbm [shape: bf16[2,256,128], index: 0, kind: input, shape index: {}]
  %s1 = inlined_call_operand.hbm [shape: f32[1,128], index: 1, kind: input, shape index: {}]
  %s2 = inlined_call_operand.hbm [shape: f32[1,128], index: 2, kind: input, shape index: {}]
  %s3 = inlined_call_operand.hbm [shape: bf16[128,128], index: 3, kind: input, shape index: {}]
  %s4 = inlined_call_operand.hbm [shape: f32[1,128], index: 4, kind: input, shape index: {}]
  %s5 = inlined_call_operand.hbm [shape: bf16[9,128,128], index: 5, kind: input, shape index: {}]
  %s6 = inlined_call_operand.hbm [shape: f32[1,128], index: 6, kind: input, shape index: {}]
  %s7 = inlined_call_operand.hbm [shape: bf16[128,128], index: 7, kind: input, shape index: {}]
  %s8 = inlined_call_operand.hbm [shape: bf16[2,256,128], index: 8, kind: output, shape index: {}]
  %s9 = sld [smem:[#allocation0]]
  $region97: #{tpu_custom_call.1} parent=0
    _
  %s11 = ssub.s32 1, %s9
  %s12 = scalar_select 0, %s11, %s9
  $region1: #{tpu_custom_call.1} parent=0
    #allocation3 [shape = 'u8[131072]{0}', space=vmem, size = 0x20000, scoped, tag = 'input window, operand 0']
    #allocation4 [shape = 's32[2]{0}', space=sflag, size = 0x8, scoped, tag = 'scoped memory for tpu_custom_call.1']
    #allocation5 [shape = 's32[2]{0}', space=sflag, size = 0x8, scoped, tag = 'scoped memory for tpu_custom_call.1']
    #allocation6 [shape = 'u8[512]{0}', space=vmem, size = 0x400, scoped, tag = 'input window, operand 1, single buffered']
    #allocation7 [shape = 's32[1]{0}', space=sflag, size = 0x4, scoped, tag = 'scoped memory for tpu_custom_call.1']
    #allocation8 [shape = 'u8[512]{0}', space=vmem, size = 0x400, scoped, tag = 'input window, operand 2, single buffered']
    #allocation9 [shape = 'u8[32768]{0}', space=vmem, size = 0x8000, scoped, tag = 'input window, operand 3, single buffered']
    #allocation10 [shape = 's32[1]{0}', space=sflag, size = 0x4, scoped, tag = 'scoped memory for tpu_custom_call.1']
    #allocation11 [shape = 'u8[512]{0}', space=vmem, size = 0x400, scoped, tag = 'input window, operand 4, single buffered']
    #allocation12 [shape = 'u8[294912]{0}', space=vmem, size = 0x48000, scoped, tag = 'input window, operand 5, single buffered']
    #allocation13 [shape = 's32[1]{0}', space=sflag, size = 0x4, scoped, tag = 'scoped memory for tpu_custom_call.1']
    #allocation14 [shape = 'u8[512]{0}', space=vmem, size = 0x400, scoped, tag = 'input window, operand 6, single buffered']
    #allocation15 [shape = 'u8[32768]{0}', space=vmem, size = 0x8000, scoped, tag = 'input window, operand 7, single buffered']
    #allocation16 [shape = 's32[1]{0}', space=sflag, size = 0x4, scoped, tag = 'scoped memory for tpu_custom_call.1']
    #allocation17 [shape = 'u8[131072]{0}', space=vmem, size = 0x20000, scoped, tag = 'output window, operand 0']
    %13 = vsyncpa [#allocation4], 0
    %s14 = scalar_lea.sflag [#allocation4], 1
    %15 = vsyncpa %s14, 0
    %16 = vsyncpa [#allocation7], 0
    %17 = vsyncpa [#allocation10], 0
    %18 = vsyncpa [#allocation13], 0
    %19 = vsyncpa [#allocation16], 0
    %20 = vsyncpa [#allocation5], 0
    %s21 = scalar_lea.sflag [#allocation5], 1
    %22 = vsyncpa %s21, 0
    loop: start=0, step=1, limit=4
    $region2: #{tpu_custom_call.1} parent=1 // loop_pre_header
      _
    $region3: #{tpu_custom_call.1} parent=1 // loop_header
      %s24 = sphi 0, %s28
      %p25 = scmp.ge.s32.totalorder %s24, 4
      %s34 = sphi 0, %s36
      %s37 = sphi 0, %s34
      %s38 = sphi 0, %s37
      %s54 = sphi 0, %s38
      %s58 = sphi 0, %s58
      %s60 = sphi 0, %s58
      %s61 = sphi 0, %s60
      %s75 = sphi 0, %s61
      %s79 = sphi 0, %s79
      %s81 = sphi 0, %s79
      %s82 = sphi 0, %s81
      %s96 = sphi 0, %s82
      %s100 = sphi 0, %s100
      %s102 = sphi 0, %s100
      %s103 = sphi 0, %s102
      %s117 = sphi 0, %s103
      %s121 = sphi 0, %s121
      %s123 = sphi 0, %s121
      %s124 = sphi 0, %s123
      %s138 = sphi 0, %s124
      %s142 = sphi 0, %s142
      %s144 = sphi 0, %s142
      %s145 = sphi 0, %s144
      %s159 = sphi 0, %s145
      %s163 = sphi 0, %s163
      %s165 = sphi 0, %s163
      %s166 = sphi 0, %s165
      %s180 = sphi 0, %s166
      %s184 = sphi 0, %s184
      %s186 = sphi 0, %s184
      %s187 = sphi 0, %s186
      %s201 = sphi 0, %s187
      %s207 = sphi 0, %s209
      %s210 = sphi 0, %s207
      %s211 = sphi 0, %s210
      %s227 = sphi 0, %s211
    $region4: #{tpu_custom_call.1} parent=1 // loop_header_branch
      %27 = sbr.rel (%p25) target = $region8
    $region5: #{tpu_custom_call.1} parent=1 // loop_body
      %s29 = ssub.s32 %s24, 1
      %s30 = ssub.s32 %s24, 2
      %s31 = sadd.s32 %s24, 1
      %s32 = ssub.s32 %s24, %s31
      %p33 = scmp.eq.s32.totalorder %s32, 0
      %s35 = sadd.s32 %s34, 1
      %s36 = scalar_select %p33, %s34, %s35
      %p39 = pneg %p33
      %p40 = scmp.eq.s32.totalorder %s24, 1
      %p41 = por %p39, %p40
      %p42 = scmp.ne.s32.totalorder %s34, %s37
      %p43 = scmp.eq.s32.totalorder %s24, 0
      %p44 = por %p42, %p43
      %p45 = scmp.ne.s32.totalorder %s34, %s37
      %p46 = scmp.eq.s32.totalorder %s29, 1
      %p47 = por %p45, %p46
      %p48 = scmp.ne.s32.totalorder %s37, %s38
      %p49 = scmp.eq.s32.totalorder %s29, 0
      %p50 = por %p48, %p49
      %p51 = scmp.ne.s32.totalorder %s37, %s38
      %p52 = scmp.eq.s32.totalorder %s30, 1
      %p53 = por %p51, %p52
      %p55 = scmp.ne.s32.totalorder %s38, %s54
      %p56 = scmp.eq.s32.totalorder %s30, 0
      %p57 = por %p55, %p56
      %s59 = sadd.s32 %s58, 1
      %p62 = scmp.eq.s32.totalorder %s24, 1
      %p63 = scmp.ne.s32.totalorder %s58, %s60
      %p64 = scmp.eq.s32.totalorder %s24, 0
      %p65 = por %p63, %p64
      %p66 = scmp.ne.s32.totalorder %s58, %s60
      %p67 = scmp.eq.s32.totalorder %s29, 1
      %p68 = por %p66, %p67
      %p69 = scmp.ne.s32.totalorder %s60, %s61
      %p70 = scmp.eq.s32.totalorder %s29, 0
      %p71 = por %p69, %p70
      %p72 = scmp.ne.s32.totalorder %s60, %s61
      %p73 = scmp.eq.s32.totalorder %s30, 1
      %p74 = por %p72, %p73
      %p76 = scmp.ne.s32.totalorder %s61, %s75
      %p77 = scmp.eq.s32.totalorder %s30, 0
      %p78 = por %p76, %p77
      %s80 = sadd.s32 %s79, 1
      %p83 = scmp.eq.s32.totalorder %s24, 1
      %p84 = scmp.ne.s32.totalorder %s79, %s81
      %p85 = scmp.eq.s32.totalorder %s24, 0
      %p86 = por %p84, %p85
      %p87 = scmp.ne.s32.totalorder %s79, %s81
      %p88 = scmp.eq.s32.totalorder %s29, 1
      %p89 = por %p87, %p88
      %p90 = scmp.ne.s32.totalorder %s81, %s82
      %p91 = scmp.eq.s32.totalorder %s29, 0
      %p92 = por %p90, %p91
      %p93 = scmp.ne.s32.totalorder %s81, %s82
      %p94 = scmp.eq.s32.totalorder %s30, 1
      %p95 = por %p93, %p94
      %p97 = scmp.ne.s32.totalorder %s82, %s96
      %p98 = scmp.eq.s32.totalorder %s30, 0
      %p99 = por %p97, %p98
      %s101 = sadd.s32 %s100, 1
      %p104 = scmp.eq.s32.totalorder %s24, 1
      %p105 = scmp.ne.s32.totalorder %s100, %s102
      %p106 = scmp.eq.s32.totalorder %s24, 0
      %p107 = por %p105, %p106
      %p108 = scmp.ne.s32.totalorder %s100, %s102
      %p109 = scmp.eq.s32.totalorder %s29, 1
      %p110 = por %p108, %p109
      %p111 = scmp.ne.s32.totalorder %s102, %s103
      %p112 = scmp.eq.s32.totalorder %s29, 0
      %p113 = por %p111, %p112
      %p114 = scmp.ne.s32.totalorder %s102, %s103
      %p115 = scmp.eq.s32.totalorder %s30, 1
      %p116 = por %p114, %p115
      %p118 = scmp.ne.s32.totalorder %s103, %s117
      %p119 = scmp.eq.s32.totalorder %s30, 0
      %p120 = por %p118, %p119
      %s122 = sadd.s32 %s121, 1
      %p125 = scmp.eq.s32.totalorder %s24, 1
      %p126 = scmp.ne.s32.totalorder %s121, %s123
      %p127 = scmp.eq.s32.totalorder %s24, 0
      %p128 = por %p126, %p127
      %p129 = scmp.ne.s32.totalorder %s121, %s123
      %p130 = scmp.eq.s32.totalorder %s29, 1
      %p131 = por %p129, %p130
      %p132 = scmp.ne.s32.totalorder %s123, %s124
      %p133 = scmp.eq.s32.totalorder %s29, 0
      %p134 = por %p132, %p133
      %p135 = scmp.ne.s32.totalorder %s123, %s124
      %p136 = scmp.eq.s32.totalorder %s30, 1
      %p137 = por %p135, %p136
      %p139 = scmp.ne.s32.totalorder %s124, %s138
      %p140 = scmp.eq.s32.totalorder %s30, 0
      %p141 = por %p139, %p140
      %s143 = sadd.s32 %s142, 1
      %p146 = scmp.eq.s32.totalorder %s24, 1
      %p147 = scmp.ne.s32.totalorder %s142, %s144
      %p148 = scmp.eq.s32.totalorder %s24, 0
      %p149 = por %p147, %p148
      %p150 = scmp.ne.s32.totalorder %s142, %s144
      %p151 = scmp.eq.s32.totalorder %s29, 1
      %p152 = por %p150, %p151
      %p153 = scmp.ne.s32.totalorder %s144, %s145
      %p154 = scmp.eq.s32.totalorder %s29, 0
      %p155 = por %p153, %p154
      %p156 = scmp.ne.s32.totalorder %s144, %s145
      %p157 = scmp.eq.s32.totalorder %s30, 1
      %p158 = por %p156, %p157
      %p160 = scmp.ne.s32.totalorder %s145, %s159
      %p161 = scmp.eq.s32.totalorder %s30, 0
      %p162 = por %p160, %p161
      %s164 = sadd.s32 %s163, 1
      %p167 = scmp.eq.s32.totalorder %s24, 1
      %p168 = scmp.ne.s32.totalorder %s163, %s165
      %p169 = scmp.eq.s32.totalorder %s24, 0
      %p170 = por %p168, %p169
      %p171 = scmp.ne.s32.totalorder %s163, %s165
      %p172 = scmp.eq.s32.totalorder %s29, 1
      %p173 = por %p171, %p172
      %p174 = scmp.ne.s32.totalorder %s165, %s166
      %p175 = scmp.eq.s32.totalorder %s29, 0
      %p176 = por %p174, %p175
      %p177 = scmp.ne.s32.totalorder %s165, %s166
      %p178 = scmp.eq.s32.totalorder %s30, 1
      %p179 = por %p177, %p178
      %p181 = scmp.ne.s32.totalorder %s166, %s180
      %p182 = scmp.eq.s32.totalorder %s30, 0
      %p183 = por %p181, %p182
      %s185 = sadd.s32 %s184, 1
      %p188 = scmp.eq.s32.totalorder %s24, 1
      %p189 = scmp.ne.s32.totalorder %s184, %s186
      %p190 = scmp.eq.s32.totalorder %s24, 0
      %p191 = por %p189, %p190
      %p192 = scmp.ne.s32.totalorder %s184, %s186
      %p193 = scmp.eq.s32.totalorder %s29, 1
      %p194 = por %p192, %p193
      %p195 = scmp.ne.s32.totalorder %s186, %s187
      %p196 = scmp.eq.s32.totalorder %s29, 0
      %p197 = por %p195, %p196
      %p198 = scmp.ne.s32.totalorder %s186, %s187
      %p199 = scmp.eq.s32.totalorder %s30, 1
      %p200 = por %p198, %p199
      %p202 = scmp.ne.s32.totalorder %s187, %s201
      %p203 = scmp.eq.s32.totalorder %s30, 0
      %p204 = por %p202, %p203
      %s205 = ssub.s32 %s24, %s31
      %p206 = scmp.eq.s32.totalorder %s205, 0
      %s208 = sadd.s32 %s207, 1
      %s209 = scalar_select %p206, %s207, %s208
      %p212 = pneg %p206
      %p213 = scmp.eq.s32.totalorder %s24, 1
      %p214 = por %p212, %p213
      %p215 = scmp.ne.s32.totalorder %s207, %s210
      %p216 = scmp.eq.s32.totalorder %s24, 0
      %p217 = por %p215, %p216
      %p218 = scmp.ne.s32.totalorder %s207, %s210
      %p219 = scmp.eq.s32.totalorder %s29, 1
      %p220 = por %p218, %p219
      %p221 = scmp.ne.s32.totalorder %s210, %s211
      %p222 = scmp.eq.s32.totalorder %s29, 0
      %p223 = por %p221, %p222
      %p224 = scmp.ne.s32.totalorder %s210, %s211
      %p225 = scmp.eq.s32.totalorder %s30, 1
      %p226 = por %p224, %p225
      %p228 = scmp.ne.s32.totalorder %s211, %s227
      %p229 = scmp.eq.s32.totalorder %s30, 0
      %p230 = por %p228, %p229
      %p231 = scmp.le.s32.totalorder 1, %s24
      %p232 = scmp.lt.s32.totalorder %s24, 3
      %p233 = pnand %p231, %p232
      %p234 = pneg %p233
      // Predicated region
      $region9: #{tpu_custom_call.1} parent=5 // pred_check
        _
      $region10: #{tpu_custom_call.1} parent=5 // pred_check_branch
        %236 = sbr.rel (%p233) target = $region12
      $region11: #{tpu_custom_call.1} parent=5 // pred_region
        %s237 = ssub.s32 %s24, 1
        // Predicated region
        $region13: #{tpu_custom_call.1} parent=11 // pred_check
          %p238 = pneg %p71
        $region14: #{tpu_custom_call.1} parent=11 // pred_check_branch
          %240 = sbr.rel (%p238) target = $region16
        $region15: #{tpu_custom_call.1} parent=11 // pred_region
          %s242 = ssub.s32 16, 16
          %243 = vsyncadd [#allocation7], %s242
          %s245 = sshll.u32 [#allocation6], 4
          %s246 = int_to_ptr.vmem [resolvable:$true] %s245
          %248 = dma.hbm_to_vmem [thread:$0]  %s1, 16, %s246, [#allocation7]
        $region16: #{tpu_custom_call.1} parent=11 // pred_fallthru
          _
        // Predicated region
        $region17: #{tpu_custom_call.1} parent=11 // pred_check
          %p249 = pneg %p92
        $region18: #{tpu_custom_call.1} parent=11 // pred_check_branch
          %251 = sbr.rel (%p249) target = $region20
        $region19: #{tpu_custom_call.1} parent=11 // pred_region
          %s253 = ssub.s32 16, 16
          %254 = vsyncadd [#allocation7], %s253
          %s256 = sshll.u32 [#allocation8], 4
          %s257 = int_to_ptr.vmem [resolvable:$true] %s256
          %259 = dma.hbm_to_vmem [thread:$0]  %s2, 16, %s257, [#allocation7]
        $region20: #{tpu_custom_call.1} parent=11 // pred_fallthru
          _
        // Predicated region
        $region21: #{tpu_custom_call.1} parent=11 // pred_check
          %p260 = pneg %p113
        $region22: #{tpu_custom_call.1} parent=11 // pred_check_branch
          %262 = sbr.rel (%p260) target = $region24
        $region23: #{tpu_custom_call.1} parent=11 // pred_region
          %s264 = ssub.s32 1024, 1024
          %265 = vsyncadd [#allocation10], %s264
          %s266 = sshll.u32 [#allocation9], 4
          %s267 = int_to_ptr.vmem [resolvable:$true] %s266
          %272 = dma.hbm_to_vmem [thread:$0]  %s3, 1024, %s267, [#allocation10], 64, 64, 4
        $region24: #{tpu_custom_call.1} parent=11 // pred_fallthru
          _
        // Predicated region
        $region25: #{tpu_custom_call.1} parent=11 // pred_check
          %p273 = pneg %p134
        $region26: #{tpu_custom_call.1} parent=11 // pred_check_branch
          %275 = sbr.rel (%p273) target = $region28
        $region27: #{tpu_custom_call.1} parent=11 // pred_region
          %s277 = ssub.s32 16, 16
          %278 = vsyncadd [#allocation10], %s277
          %s280 = sshll.u32 [#allocation11], 4
          %s281 = int_to_ptr.vmem [resolvable:$true] %s280
          %283 = dma.hbm_to_vmem [thread:$0]  %s4, 16, %s281, [#allocation10]
        $region28: #{tpu_custom_call.1} parent=11 // pred_fallthru
          _
        // Predicated region
        $region29: #{tpu_custom_call.1} parent=11 // pred_check
          %p284 = pneg %p155
        $region30: #{tpu_custom_call.1} parent=11 // pred_check_branch
          %286 = sbr.rel (%p284) target = $region32
        $region31: #{tpu_custom_call.1} parent=11 // pred_region
          %s288 = ssub.s32 9216, 9216
          %289 = vsyncadd [#allocation13], %s288
          %s290 = sshll.u32 [#allocation12], 4
          %s291 = int_to_ptr.vmem [resolvable:$true] %s290
          %296 = dma.hbm_to_vmem [thread:$0]  %s5, 9216, %s291, [#allocation13], 64, 64, 4
        $region32: #{tpu_custom_call.1} parent=11 // pred_fallthru
          _
        // Predicated region
        $region33: #{tpu_custom_call.1} parent=11 // pred_check
          %p297 = pneg %p176
        $region34: #{tpu_custom_call.1} parent=11 // pred_check_branch
          %299 = sbr.rel (%p297) target = $region36
        $region35: #{tpu_custom_call.1} parent=11 // pred_region
          %s301 = ssub.s32 16, 16
          %302 = vsyncadd [#allocation13], %s301
          %s304 = sshll.u32 [#allocation14], 4
          %s305 = int_to_ptr.vmem [resolvable:$true] %s304
          %307 = dma.hbm_to_vmem [thread:$0]  %s6, 16, %s305, [#allocation13]
        $region36: #{tpu_custom_call.1} parent=11 // pred_fallthru
          _
        // Predicated region
        $region37: #{tpu_custom_call.1} parent=11 // pred_check
          %p308 = pneg %p197
        $region38: #{tpu_custom_call.1} parent=11 // pred_check_branch
          %310 = sbr.rel (%p308) target = $region40
        $region39: #{tpu_custom_call.1} parent=11 // pred_region
          %s312 = ssub.s32 1024, 1024
          %313 = vsyncadd [#allocation16], %s312
          %s314 = sshll.u32 [#allocation15], 4
          %s315 = int_to_ptr.vmem [resolvable:$true] %s314
          %320 = dma.hbm_to_vmem [thread:$0]  %s7, 1024, %s315, [#allocation16], 64, 64, 4
        $region40: #{tpu_custom_call.1} parent=11 // pred_fallthru
          _
      $region12: #{tpu_custom_call.1} parent=5 // pred_fallthru
        _
      %p321 = scmp.lt.s32.totalorder %s24, 2
      // Predicated region
      $region41: #{tpu_custom_call.1} parent=5 // pred_check
        %p322 = pneg %p321
      $region42: #{tpu_custom_call.1} parent=5 // pred_check_branch
        %324 = sbr.rel (%p322) target = $region44
      $region43: #{tpu_custom_call.1} parent=5 // pred_region
        // Predicated region
        $region45: #{tpu_custom_call.1} parent=43 // pred_check
          %p325 = pneg %p44
        $region46: #{tpu_custom_call.1} parent=43 // pred_check_branch
          %327 = sbr.rel (%p325) target = $region48
        $region47: #{tpu_custom_call.1} parent=43 // pred_region
          %s328 = sand.u32 %s34, 1
          %s329 = scalar_lea.sflag [#allocation4], %s328
          %s330 = sand.u32 %s34, 1
          %s331 = smul.addr %s330, 128
          %s332 = scalar_lea.vmem [#allocation3], %s331
          %s334 = ssub.s32 2048, 2048
          %335 = vsyncadd %s329, %s334
          %s336 = smul.addr %s24, 32
          %s337 = smul.addr %s336, 64
          %s338 = scalar_lea.hbm %s0, %s337
          %s339 = sshll.u32 %s332, 4
          %s340 = int_to_ptr.vmem [resolvable:$true] %s339
          %345 = dma.hbm_to_vmem [thread:$0]  %s338, 2048, %s340, %s329, 64, 64, 4
        $region48: #{tpu_custom_call.1} parent=43 // pred_fallthru
          _
      $region44: #{tpu_custom_call.1} parent=5 // pred_fallthru
        _
      %p346 = scmp.le.s32.totalorder 1, %s24
      %p347 = scmp.lt.s32.totalorder %s24, 3
      %p348 = pnand %p346, %p347
      %p349 = pneg %p348
      // Predicated region
      $region49: #{tpu_custom_call.1} parent=5 // pred_check
        _
      $region50: #{tpu_custom_call.1} parent=5 // pred_check_branch
        %351 = sbr.rel (%p348) target = $region52
      $region51: #{tpu_custom_call.1} parent=5 // pred_region
        %s352 = ssub.s32 %s24, 1
        %s353 = sand.u32 %s37, 1
        %s354 = scalar_lea.sflag [#allocation4], %s353
        %s355 = sand.u32 %s37, 1
        %s356 = smul.addr %s355, 128
        %s357 = scalar_lea.vmem [#allocation3], %s356
        // Predicated region
        $region53: #{tpu_custom_call.1} parent=51 // pred_check
          %p358 = pneg %p50
        $region54: #{tpu_custom_call.1} parent=51 // pred_check_branch
          %360 = sbr.rel (%p358) target = $region56
        $region55: #{tpu_custom_call.1} parent=51 // pred_region
          %361 = dma.done %s354, 2048
        $region56: #{tpu_custom_call.1} parent=51 // pred_fallthru
          _
        // Predicated region
        $region57: #{tpu_custom_call.1} parent=51 // pred_check
          %p362 = pneg %p71
        $region58: #{tpu_custom_call.1} parent=51 // pred_check_branch
          %364 = sbr.rel (%p362) target = $region60
        $region59: #{tpu_custom_call.1} parent=51 // pred_region
          %365 = dma.done [#allocation7], 16
        $region60: #{tpu_custom_call.1} parent=51 // pred_fallthru
          _
        // Predicated region
        $region61: #{tpu_custom_call.1} parent=51 // pred_check
          %p366 = pneg %p92
        $region62: #{tpu_custom_call.1} parent=51 // pred_check_branch
          %368 = sbr.rel (%p366) target = $region64
        $region63: #{tpu_custom_call.1} parent=51 // pred_region
          %369 = dma.done [#allocation7], 16
        $region64: #{tpu_custom_call.1} parent=51 // pred_fallthru
          _
        // Predicated region
        $region65: #{tpu_custom_call.1} parent=51 // pred_check
          %p370 = pneg %p113
        $region66: #{tpu_custom_call.1} parent=51 // pred_check_branch
          %372 = sbr.rel (%p370) target = $region68
        $region67: #{tpu_custom_call.1} parent=51 // pred_region
          %373 = dma.done [#allocation10], 1024
        $region68: #{tpu_custom_call.1} parent=51 // pred_fallthru
          _
        // Predicated region
        $region69: #{tpu_custom_call.1} parent=51 // pred_check
          %p374 = pneg %p134
        $region70: #{tpu_custom_call.1} parent=51 // pred_check_branch
          %376 = sbr.rel (%p374) target = $region72
        $region71: #{tpu_custom_call.1} parent=51 // pred_region
          %377 = dma.done [#allocation10], 16
        $region72: #{tpu_custom_call.1} parent=51 // pred_fallthru
          _
        // Predicated region
        $region73: #{tpu_custom_call.1} parent=51 // pred_check
          %p378 = pneg %p155
        $region74: #{tpu_custom_call.1} parent=51 // pred_check_branch
          %380 = sbr.rel (%p378) target = $region76
        $region75: #{tpu_custom_call.1} parent=51 // pred_region
          %381 = dma.done [#allocation13], 9216
        $region76: #{tpu_custom_call.1} parent=51 // pred_fallthru
          _
        // Predicated region
        $region77: #{tpu_custom_call.1} parent=51 // pred_check
          %p382 = pneg %p176
        $region78: #{tpu_custom_call.1} parent=51 // pred_check_branch
          %384 = sbr.rel (%p382) target = $region80
        $region79: #{tpu_custom_call.1} parent=51 // pred_region
          %385 = dma.done [#allocation13], 16
        $region80: #{tpu_custom_call.1} parent=51 // pred_fallthru
          _
        // Predicated region
        $region81: #{tpu_custom_call.1} parent=51 // pred_check
          %p386 = pneg %p197
        $region82: #{tpu_custom_call.1} parent=51 // pred_check_branch
          %388 = sbr.rel (%p386) target = $region84
        $region83: #{tpu_custom_call.1} parent=51 // pred_region
          %389 = dma.done [#allocation16], 1024
        $region84: #{tpu_custom_call.1} parent=51 // pred_fallthru
          _
        %s390 = sand.u32 %s37, 1
        %s391 = scalar_lea.sflag [#allocation4], %s390
        %s392 = sand.u32 %s37, 1
        %s393 = smul.addr %s392, 128
        %s394 = scalar_lea.vmem [#allocation3], %s393
        %p395 = pneg %p50
        %p396 = pneg %p47
        %p397 = pneg %p71
        %p398 = pneg %p68
        %p399 = pneg %p92
        %p400 = pneg %p89
        %p401 = pneg %p113
        %p402 = pneg %p110
        %p403 = pneg %p134
        %p404 = pneg %p131
        %p405 = pneg %p155
        %p406 = pneg %p152
        %p407 = pneg %p176
        %p408 = pneg %p173
        %p409 = pneg %p197
        %p410 = pneg %p194
        %p411 = pneg %p223
        %p412 = pneg %p220
        %s413 = sand.u32 %s210, 1
        %s414 = scalar_lea.sflag [#allocation5], %s413
        %s415 = sand.u32 %s210, 1
        %s416 = smul.addr %s415, 128
        %s417 = scalar_lea.vmem [#allocation17], %s416
        %v421 = vld [vmem:[%s357] sm:$0xf]
        %v422 = vld [vmem:[%s357 + $0x4] sm:$0xf]
        %v423 = vld [vmem:[%s357 + $0x8] sm:$0xf]
        %v424 = vld [vmem:[%s357 + $0xc] sm:$0xf]
        %v425 = vld [vmem:[%s357 + $0x10] sm:$0xf]
        %v426 = vld [vmem:[%s357 + $0x14] sm:$0xf]
        %v427 = vld [vmem:[%s357 + $0x18] sm:$0xf]
        %v428 = vld [vmem:[%s357 + $0x1c] sm:$0xf]
        %v429 = vld [vmem:[%s357 + $0x20] sm:$0xf]
        %v430 = vld [vmem:[%s357 + $0x24] sm:$0xf]
        %v431 = vld [vmem:[%s357 + $0x28] sm:$0xf]
        %v432 = vld [vmem:[%s357 + $0x2c] sm:$0xf]
        %v433 = vld [vmem:[%s357 + $0x30] sm:$0xf]
        %v434 = vld [vmem:[%s357 + $0x34] sm:$0xf]
        %v435 = vld [vmem:[%s357 + $0x38] sm:$0xf]
        %v436 = vld [vmem:[%s357 + $0x3c] sm:$0xf]
        %v437 = vld [vmem:[%s357 + $0x40] sm:$0xf]
        %v438 = vld [vmem:[%s357 + $0x44] sm:$0xf]
        %v439 = vld [vmem:[%s357 + $0x48] sm:$0xf]
        %v440 = vld [vmem:[%s357 + $0x4c] sm:$0xf]
        %v441 = vld [vmem:[%s357 + $0x50] sm:$0xf]
        %v442 = vld [vmem:[%s357 + $0x54] sm:$0xf]
        %v443 = vld [vmem:[%s357 + $0x58] sm:$0xf]
        %v444 = vld [vmem:[%s357 + $0x5c] sm:$0xf]
        %v445 = vld [vmem:[%s357 + $0x60] sm:$0xf]
        %v446 = vld [vmem:[%s357 + $0x64] sm:$0xf]
        %v447 = vld [vmem:[%s357 + $0x68] sm:$0xf]
        %v448 = vld [vmem:[%s357 + $0x6c] sm:$0xf]
        %v449 = vld [vmem:[%s357 + $0x70] sm:$0xf]
        %v450 = vld [vmem:[%s357 + $0x74] sm:$0xf]
        %v451 = vld [vmem:[%s357 + $0x78] sm:$0xf]
        %v452 = vld [vmem:[%s357 + $0x7c] sm:$0xf]
        %v453 = vunpack.c.l.bf16 %v421
        %v454 = vunpack.c.l.bf16 %v422
        %v455 = vunpack.c.l.bf16 %v423
        %v456 = vunpack.c.l.bf16 %v424
        %v457 = vunpack.c.l.bf16 %v425
        %v458 = vunpack.c.l.bf16 %v426
        %v459 = vunpack.c.l.bf16 %v427
        %v460 = vunpack.c.l.bf16 %v428
        %v461 = vunpack.c.l.bf16 %v429
        %v462 = vunpack.c.l.bf16 %v430
        %v463 = vunpack.c.l.bf16 %v431
        %v464 = vunpack.c.l.bf16 %v432
        %v465 = vunpack.c.l.bf16 %v433
        %v466 = vunpack.c.l.bf16 %v434
        %v467 = vunpack.c.l.bf16 %v435
        %v468 = vunpack.c.l.bf16 %v436
        %v469 = vunpack.c.l.bf16 %v437
        %v470 = vunpack.c.l.bf16 %v438
        %v471 = vunpack.c.l.bf16 %v439
        %v472 = vunpack.c.l.bf16 %v440
        %v473 = vunpack.c.l.bf16 %v441
        %v474 = vunpack.c.l.bf16 %v442
        %v475 = vunpack.c.l.bf16 %v443
        %v476 = vunpack.c.l.bf16 %v444
        %v477 = vunpack.c.l.bf16 %v445
        %v478 = vunpack.c.l.bf16 %v446
        %v479 = vunpack.c.l.bf16 %v447
        %v480 = vunpack.c.l.bf16 %v448
        %v481 = vunpack.c.l.bf16 %v449
        %v482 = vunpack.c.l.bf16 %v450
        %v483 = vunpack.c.l.bf16 %v451
        %v484 = vunpack.c.l.bf16 %v452
        %v485 = vld [vmem:[#allocation6] sm:$0x1]
        %v487 = vlaneseq
        %v488 = vshrl.u32 %v487, 7
        %v489 = vsub.s32 0, %v488
        %v490 = vrot.slane %v485, %v489
        %v492 = vmul.f32 %v453, %v490
        %v493 = vmul.f32 %v454, %v490
        %v494 = vmul.f32 %v455, %v490
        %v495 = vmul.f32 %v456, %v490
        %v496 = vmul.f32 %v457, %v490
        %v497 = vmul.f32 %v458, %v490
        %v498 = vmul.f32 %v459, %v490
        %v499 = vmul.f32 %v460, %v490
        %v500 = vmul.f32 %v461, %v490
        %v501 = vmul.f32 %v462, %v490
        %v502 = vmul.f32 %v463, %v490
        %v503 = vmul.f32 %v464, %v490
        %v504 = vmul.f32 %v465, %v490
        %v505 = vmul.f32 %v466, %v490
        %v506 = vmul.f32 %v467, %v490
        %v507 = vmul.f32 %v468, %v490
        %v508 = vmul.f32 %v469, %v490
        %v509 = vmul.f32 %v470, %v490
        %v510 = vmul.f32 %v471, %v490
        %v511 = vmul.f32 %v472, %v490
        %v512 = vmul.f32 %v473, %v490
        %v513 = vmul.f32 %v474, %v490
        %v514 = vmul.f32 %v475, %v490
        %v515 = vmul.f32 %v476, %v490
        %v516 = vmul.f32 %v477, %v490
        %v517 = vmul.f32 %v478, %v490
        %v518 = vmul.f32 %v479, %v490
        %v519 = vmul.f32 %v480, %v490
        %v520 = vmul.f32 %v481, %v490
        %v521 = vmul.f32 %v482, %v490
        %v522 = vmul.f32 %v483, %v490
        %v523 = vmul.f32 %v484, %v490
        %v524 = vld [vmem:[#allocation8] sm:$0x1]
        %v526 = vlaneseq
        %v527 = vshrl.u32 %v526, 7
        %v528 = vsub.s32 0, %v527
        %v529 = vrot.slane %v524, %v528
        %v531 = vadd.f32 %v492, %v529
        %v532 = vadd.f32 %v493, %v529
        %v533 = vadd.f32 %v494, %v529
        %v534 = vadd.f32 %v495, %v529
        %v535 = vadd.f32 %v496, %v529
        %v536 = vadd.f32 %v497, %v529
        %v537 = vadd.f32 %v498, %v529
        %v538 = vadd.f32 %v499, %v529
        %v539 = vadd.f32 %v500, %v529
        %v540 = vadd.f32 %v501, %v529
        %v541 = vadd.f32 %v502, %v529
        %v542 = vadd.f32 %v503, %v529
        %v543 = vadd.f32 %v504, %v529
        %v544 = vadd.f32 %v505, %v529
        %v545 = vadd.f32 %v506, %v529
        %v546 = vadd.f32 %v507, %v529
        %v547 = vadd.f32 %v508, %v529
        %v548 = vadd.f32 %v509, %v529
        %v549 = vadd.f32 %v510, %v529
        %v550 = vadd.f32 %v511, %v529
        %v551 = vadd.f32 %v512, %v529
        %v552 = vadd.f32 %v513, %v529
        %v553 = vadd.f32 %v514, %v529
        %v554 = vadd.f32 %v515, %v529
        %v555 = vadd.f32 %v516, %v529
        %v556 = vadd.f32 %v517, %v529
        %v557 = vadd.f32 %v518, %v529
        %v558 = vadd.f32 %v519, %v529
        %v559 = vadd.f32 %v520, %v529
        %v560 = vadd.f32 %v521, %v529
        %v561 = vadd.f32 %v522, %v529
        %v562 = vadd.f32 %v523, %v529
        %v563 = vmax.f32 %v531, 0.0
        %v564 = vmax.f32 %v532, 0.0
        %v565 = vmax.f32 %v533, 0.0
        %v566 = vmax.f32 %v534, 0.0
        %v567 = vmax.f32 %v535, 0.0
        %v568 = vmax.f32 %v536, 0.0
        %v569 = vmax.f32 %v537, 0.0
        %v570 = vmax.f32 %v538, 0.0
        %v571 = vmax.f32 %v539, 0.0
        %v572 = vmax.f32 %v540, 0.0
        %v573 = vmax.f32 %v541, 0.0
        %v574 = vmax.f32 %v542, 0.0
        %v575 = vmax.f32 %v543, 0.0
        %v576 = vmax.f32 %v544, 0.0
        %v577 = vmax.f32 %v545, 0.0
        %v578 = vmax.f32 %v546, 0.0
        %v579 = vmax.f32 %v547, 0.0
        %v580 = vmax.f32 %v548, 0.0
        %v581 = vmax.f32 %v549, 0.0
        %v582 = vmax.f32 %v550, 0.0
        %v583 = vmax.f32 %v551, 0.0
        %v584 = vmax.f32 %v552, 0.0
        %v585 = vmax.f32 %v553, 0.0
        %v586 = vmax.f32 %v554, 0.0
        %v587 = vmax.f32 %v555, 0.0
        %v588 = vmax.f32 %v556, 0.0
        %v589 = vmax.f32 %v557, 0.0
        %v590 = vmax.f32 %v558, 0.0
        %v591 = vmax.f32 %v559, 0.0
        %v592 = vmax.f32 %v560, 0.0
        %v593 = vmax.f32 %v561, 0.0
        %v594 = vmax.f32 %v562, 0.0
        %v595 = vpack.c.bf16 %v564, %v563
        %v596 = vpack.c.bf16 %v566, %v565
        %v597 = vpack.c.bf16 %v568, %v567
        %v598 = vpack.c.bf16 %v570, %v569
        %v599 = vpack.c.bf16 %v572, %v571
        %v600 = vpack.c.bf16 %v574, %v573
        %v601 = vpack.c.bf16 %v576, %v575
        %v602 = vpack.c.bf16 %v578, %v577
        %v603 = vpack.c.bf16 %v580, %v579
        %v604 = vpack.c.bf16 %v582, %v581
        %v605 = vpack.c.bf16 %v584, %v583
        %v606 = vpack.c.bf16 %v586, %v585
        %v607 = vpack.c.bf16 %v588, %v587
        %v608 = vpack.c.bf16 %v590, %v589
        %v609 = vpack.c.bf16 %v592, %v591
        %v610 = vpack.c.bf16 %v594, %v593
        %v611 = vld [vmem:[#allocation9] sm:$0xf]
        %v612 = vld [vmem:[#allocation9 + $0x4] sm:$0xf]
        %v613 = vld [vmem:[#allocation9 + $0x8] sm:$0xf]
        %v614 = vld [vmem:[#allocation9 + $0xc] sm:$0xf]
        %v615 = vld [vmem:[#allocation9 + $0x10] sm:$0xf]
        %v616 = vld [vmem:[#allocation9 + $0x14] sm:$0xf]
        %v617 = vld [vmem:[#allocation9 + $0x18] sm:$0xf]
        %v618 = vld [vmem:[#allocation9 + $0x1c] sm:$0xf]
        %v619 = vld [vmem:[#allocation9 + $0x20] sm:$0xf]
        %v620 = vld [vmem:[#allocation9 + $0x24] sm:$0xf]
        %v621 = vld [vmem:[#allocation9 + $0x28] sm:$0xf]
        %v622 = vld [vmem:[#allocation9 + $0x2c] sm:$0xf]
        %v623 = vld [vmem:[#allocation9 + $0x30] sm:$0xf]
        %v624 = vld [vmem:[#allocation9 + $0x34] sm:$0xf]
        %v625 = vld [vmem:[#allocation9 + $0x38] sm:$0xf]
        %v626 = vld [vmem:[#allocation9 + $0x3c] sm:$0xf]
        %v627 = vld [vmem:[#allocation11] sm:$0x1]
        %v629 = vlaneseq
        %v630 = vshrl.u32 %v629, 7
        %v631 = vsub.s32 0, %v630
        %v632 = vrot.slane %v627, %v631
        %v650 = vunpack.c.l.b16 %v611
        %v651 = vunpack.c.l.b16 %v612
        %v652 = vunpack.c.l.b16 %v613
        %v653 = vunpack.c.l.b16 %v614
        %v654 = vunpack.c.l.b16 %v615
        %v655 = vunpack.c.l.b16 %v616
        %v656 = vunpack.c.l.b16 %v617
        %v657 = vunpack.c.l.b16 %v618
        %v658 = vunpack.c.l.b16 %v619
        %v659 = vunpack.c.l.b16 %v620
        %v660 = vunpack.c.l.b16 %v621
        %v661 = vunpack.c.l.b16 %v622
        %v662 = vunpack.c.l.b16 %v623
        %v663 = vunpack.c.l.b16 %v624
        %v664 = vunpack.c.l.b16 %v625
        %v665 = vunpack.c.l.b16 %v626
        %v666 = vpack.c.b16 %v651, %v650
        %v667 = vpack.c.b16 %v653, %v652
        %v668 = vpack.c.b16 %v655, %v654
        %v669 = vpack.c.b16 %v657, %v656
        %v670 = vpack.c.b16 %v659, %v658
        %v671 = vpack.c.b16 %v661, %v660
        %v672 = vpack.c.b16 %v663, %v662
        %v673 = vpack.c.b16 %v665, %v664
        %682 = vmatprep.subr.bf16.mxu0 0
        %683 = vmatpush1.bf16.msra.mxu0 %v666
        %684 = vmatprep.subr.bf16.mxu0 0
        %685 = vmatpush1.bf16.msra.mxu0 %v667
        %686 = vmatprep.subr.bf16.mxu0 0
        %687 = vmatpush1.bf16.msra.mxu0 %v668
        %688 = vmatprep.subr.bf16.mxu0 0
        %689 = vmatpush1.bf16.msra.mxu0 %v669
        %690 = vmatprep.subr.bf16.mxu0 0
        %691 = vmatpush1.bf16.msra.mxu0 %v670
        %692 = vmatprep.subr.bf16.mxu0 0
        %693 = vmatpush1.bf16.msra.mxu0 %v671
        %694 = vmatprep.subr.bf16.mxu0 0
        %695 = vmatpush1.bf16.msra.mxu0 %v672
        %696 = vmatprep.subr.bf16.mxu0 0
        %697 = vmatpush1.bf16.msra.mxu0 %v673
        %698 = vmatprep.subr.bf16.mxu0 0
        %699 = vmatpush1.bf16.msra.mxu0 0
        %700 = vmatprep.subr.bf16.mxu0 0
        %701 = vmatpush1.bf16.msra.mxu0 0
        %702 = vmatprep.subr.bf16.mxu0 0
        %703 = vmatpush1.bf16.msra.mxu0 0
        %704 = vmatprep.subr.bf16.mxu0 0
        %705 = vmatpush1.bf16.msra.mxu0 0
        %706 = vmatprep.subr.bf16.mxu0 0
        %707 = vmatpush1.bf16.msra.mxu0 0
        %708 = vmatprep.subr.bf16.mxu0 0
        %709 = vmatpush1.bf16.msra.mxu0 0
        %710 = vmatprep.subr.bf16.mxu0 0
        %711 = vmatpush1.bf16.msra.mxu0 0
        %712 = vmatprep.subr.bf16.mxu0 0
        %713 = vmatpush1.bf16.msra.mxu0 0
        %714 = vmatprep.mubr.bf16.mxu0 0
        %715 = vmatmul.mubr.bf16.gmra.mrb[0].mxu0 %v595
        %v716 = vpop.f32.mrb[0].mxu0
        %v717 = vadd.f32 %v632, %v716
        %v718 = vpop.f32.mrb[0].mxu0
        %v719 = vpop.f32.mrb[0].mxu0
        %v720 = vadd.f32 %v632, %v719
        %v721 = vpop.f32.mrb[0].mxu0
        %722 = vmatprep.mubr.bf16.mxu0 0
        %723 = vmatmul.mubr.bf16.gmra.mrb[0].mxu0 %v596
        %v724 = vpop.f32.mrb[0].mxu0
        %v725 = vadd.f32 %v632, %v724
        %v726 = vpop.f32.mrb[0].mxu0
        %v727 = vpop.f32.mrb[0].mxu0
        %v728 = vadd.f32 %v632, %v727
        %v729 = vpop.f32.mrb[0].mxu0
        %730 = vmatprep.mubr.bf16.mxu0 0
        %731 = vmatmul.mubr.bf16.gmra.mrb[0].mxu0 %v597
        %v732 = vpop.f32.mrb[0].mxu0
        %v733 = vadd.f32 %v632, %v732
        %v734 = vpop.f32.mrb[0].mxu0
        %v735 = vpop.f32.mrb[0].mxu0
        %v736 = vadd.f32 %v632, %v735
        %v737 = vpop.f32.mrb[0].mxu0
        %738 = vmatprep.mubr.bf16.mxu0 0
        %739 = vmatmul.mubr.bf16.gmra.mrb[0].mxu0 %v598
        %v740 = vpop.f32.mrb[0].mxu0
        %v741 = vadd.f32 %v632, %v740
        %v742 = vpop.f32.mrb[0].mxu0
        %v743 = vpop.f32.mrb[0].mxu0
        %v744 = vadd.f32 %v632, %v743
        %v745 = vpop.f32.mrb[0].mxu0
        %746 = vmatprep.mubr.bf16.mxu0 0
        %747 = vmatmul.mubr.bf16.gmra.mrb[0].mxu0 %v599
        %v748 = vpop.f32.mrb[0].mxu0
        %v749 = vadd.f32 %v632, %v748
        %v750 = vpop.f32.mrb[0].mxu0
        %v751 = vpop.f32.mrb[0].mxu0
        %v752 = vadd.f32 %v632, %v751
        %v753 = vpop.f32.mrb[0].mxu0
        %754 = vmatprep.mubr.bf16.mxu0 0
        %755 = vmatmul.mubr.bf16.gmra.mrb[0].mxu0 %v600
        %v756 = vpop.f32.mrb[0].mxu0
        %v757 = vadd.f32 %v632, %v756
        %v758 = vpop.f32.mrb[0].mxu0
        %v759 = vpop.f32.mrb[0].mxu0
        %v760 = vadd.f32 %v632, %v759
        %v761 = vpop.f32.mrb[0].mxu0
        %762 = vmatprep.mubr.bf16.mxu0 0
        %763 = vmatmul.mubr.bf16.gmra.mrb[0].mxu0 %v601
        %v764 = vpop.f32.mrb[0].mxu0
        %v765 = vadd.f32 %v632, %v764
        %v766 = vpop.f32.mrb[0].mxu0
        %v767 = vpop.f32.mrb[0].mxu0
        %v768 = vadd.f32 %v632, %v767
        %v769 = vpop.f32.mrb[0].mxu0
        %770 = vmatprep.mubr.bf16.mxu0 0
        %771 = vmatmul.mubr.bf16.gmra.mrb[0].mxu0 %v602
        %v772 = vpop.f32.mrb[0].mxu0
        %v773 = vadd.f32 %v632, %v772
        %v774 = vpop.f32.mrb[0].mxu0
        %v775 = vpop.f32.mrb[0].mxu0
        %v776 = vadd.f32 %v632, %v775
        %v777 = vpop.f32.mrb[0].mxu0
        %778 = vmatprep.mubr.bf16.mxu0 0
        %779 = vmatmul.mubr.bf16.gmra.mrb[0].mxu0 %v603
        %v780 = vpop.f32.mrb[0].mxu0
        %v781 = vadd.f32 %v632, %v780
        %v782 = vpop.f32.mrb[0].mxu0
        %v783 = vpop.f32.mrb[0].mxu0
        %v784 = vadd.f32 %v632, %v783
        %v785 = vpop.f32.mrb[0].mxu0
        %786 = vmatprep.mubr.bf16.mxu0 0
        %787 = vmatmul.mubr.bf16.gmra.mrb[0].mxu0 %v604
        %v788 = vpop.f32.mrb[0].mxu0
        %v789 = vadd.f32 %v632, %v788
        %v790 = vpop.f32.mrb[0].mxu0
        %v791 = vpop.f32.mrb[0].mxu0
        %v792 = vadd.f32 %v632, %v791
        %v793 = vpop.f32.mrb[0].mxu0
        %794 = vmatprep.mubr.bf16.mxu0 0
        %795 = vmatmul.mubr.bf16.gmra.mrb[0].mxu0 %v605
        %v796 = vpop.f32.mrb[0].mxu0
        %v797 = vadd.f32 %v632, %v796
        %v798 = vpop.f32.mrb[0].mxu0
        %v799 = vpop.f32.mrb[0].mxu0
        %v800 = vadd.f32 %v632, %v799
        %v801 = vpop.f32.mrb[0].mxu0
        %802 = vmatprep.mubr.bf16.mxu0 0
        %803 = vmatmul.mubr.bf16.gmra.mrb[0].mxu0 %v606
        %v804 = vpop.f32.mrb[0].mxu0
        %v805 = vadd.f32 %v632, %v804
        %v806 = vpop.f32.mrb[0].mxu0
        %v807 = vpop.f32.mrb[0].mxu0
        %v808 = vadd.f32 %v632, %v807
        %v809 = vpop.f32.mrb[0].mxu0
        %810 = vmatprep.mubr.bf16.mxu0 0
        %811 = vmatmul.mubr.bf16.gmra.mrb[0].mxu0 %v607
        %v812 = vpop.f32.mrb[0].mxu0
        %v813 = vadd.f32 %v632, %v812
        %v814 = vpop.f32.mrb[0].mxu0
        %v815 = vpop.f32.mrb[0].mxu0
        %v816 = vadd.f32 %v632, %v815
        %v817 = vpop.f32.mrb[0].mxu0
        %818 = vmatprep.mubr.bf16.mxu0 0
        %819 = vmatmul.mubr.bf16.gmra.mrb[0].mxu0 %v608
        %v820 = vpop.f32.mrb[0].mxu0
        %v821 = vadd.f32 %v632, %v820
        %v822 = vpop.f32.mrb[0].mxu0
        %v823 = vpop.f32.mrb[0].mxu0
        %v824 = vadd.f32 %v632, %v823
        %v825 = vpop.f32.mrb[0].mxu0
        %826 = vmatprep.mubr.bf16.mxu0 0
        %827 = vmatmul.mubr.bf16.gmra.mrb[0].mxu0 %v609
        %v828 = vpop.f32.mrb[0].mxu0
        %v829 = vadd.f32 %v632, %v828
        %v830 = vpop.f32.mrb[0].mxu0
        %v831 = vpop.f32.mrb[0].mxu0
        %v832 = vadd.f32 %v632, %v831
        %v833 = vpop.f32.mrb[0].mxu0
        %834 = vmatprep.mubr.bf16.mxu0 0
        %835 = vmatmul.mubr.bf16.gmra.mrb[0].mxu0 %v610
        %v836 = vpop.f32.mrb[0].mxu0
        %v837 = vadd.f32 %v632, %v836
        %v838 = vpop.f32.mrb[0].mxu0
        %v839 = vpop.f32.mrb[0].mxu0
        %v840 = vadd.f32 %v632, %v839
        %v841 = vpop.f32.mrb[0].mxu0
        %842 = vdwg.mxu0
        %v843 = vmax.f32 %v717, 0.0
        %v844 = vmax.f32 %v720, 0.0
        %v845 = vmax.f32 %v725, 0.0
        %v846 = vmax.f32 %v728, 0.0
        %v847 = vmax.f32 %v733, 0.0
        %v848 = vmax.f32 %v736, 0.0
        %v849 = vmax.f32 %v741, 0.0
        %v850 = vmax.f32 %v744, 0.0
        %v851 = vmax.f32 %v749, 0.0
        %v852 = vmax.f32 %v752, 0.0
        %v853 = vmax.f32 %v757, 0.0
        %v854 = vmax.f32 %v760, 0.0
        %v855 = vmax.f32 %v765, 0.0
        %v856 = vmax.f32 %v768, 0.0
        %v857 = vmax.f32 %v773, 0.0
        %v858 = vmax.f32 %v776, 0.0
        %v859 = vmax.f32 %v781, 0.0
        %v860 = vmax.f32 %v784, 0.0
        %v861 = vmax.f32 %v789, 0.0
        %v862 = vmax.f32 %v792, 0.0
        %v863 = vmax.f32 %v797, 0.0
        %v864 = vmax.f32 %v800, 0.0
        %v865 = vmax.f32 %v805, 0.0
        %v866 = vmax.f32 %v808, 0.0
        %v867 = vmax.f32 %v813, 0.0
        %v868 = vmax.f32 %v816, 0.0
        %v869 = vmax.f32 %v821, 0.0
        %v870 = vmax.f32 %v824, 0.0
        %v871 = vmax.f32 %v829, 0.0
        %v872 = vmax.f32 %v832, 0.0
        %v873 = vmax.f32 %v837, 0.0
        %v874 = vmax.f32 %v840, 0.0
        %v875 = vpack.c.bf16 %v844, %v843
        %v876 = vpack.c.bf16 %v846, %v845
        %v877 = vpack.c.bf16 %v848, %v847
        %v878 = vpack.c.bf16 %v850, %v849
        %v879 = vpack.c.bf16 %v852, %v851
        %v880 = vpack.c.bf16 %v854, %v853
        %v881 = vpack.c.bf16 %v856, %v855
        %v882 = vpack.c.bf16 %v858, %v857
        %v883 = vpack.c.bf16 %v860, %v859
        %v884 = vpack.c.bf16 %v862, %v861
        %v885 = vpack.c.bf16 %v864, %v863
        %v886 = vpack.c.bf16 %v866, %v865
        %v887 = vpack.c.bf16 %v868, %v867
        %v888 = vpack.c.bf16 %v870, %v869
        %v889 = vpack.c.bf16 %v872, %v871
        %v890 = vpack.c.bf16 %v874, %v873
        %891 = vst [vmem:[#allocation2] sm:$0xff] 0
        %892 = vst [vmem:[#allocation2 + $0x8] sm:$0xf] 0
        %893 = vst [vmem:[#allocation2 + $0x88] sm:$0xf0] 0
        %894 = vst [vmem:[#allocation2 + $0x90] sm:$0xff] 0
        %vm911 = vcmask 1043456
        %v912 = vrot.slane %v875, 4
        %v913 = vrot.slane %v876, 4
        %v914 = vsel %vm911, %v912, %v913
        %v915 = vrot.slane %v877, 4
        %v916 = vsel %vm911, %v913, %v915
        %v917 = vrot.slane %v878, 4
        %v918 = vsel %vm911, %v915, %v917
        %v919 = vrot.slane %v879, 4
        %v920 = vsel %vm911, %v917, %v919
        %v921 = vrot.slane %v880, 4
        %v922 = vsel %vm911, %v919, %v921
        %v923 = vrot.slane %v881, 4
        %v924 = vsel %vm911, %v921, %v923
        %v925 = vrot.slane %v882, 4
        %v926 = vsel %vm911, %v923, %v925
        %v927 = vrot.slane %v883, 4
        %v928 = vsel %vm911, %v925, %v927
        %v929 = vrot.slane %v884, 4
        %v930 = vsel %vm911, %v927, %v929
        %v931 = vrot.slane %v885, 4
        %v932 = vsel %vm911, %v929, %v931
        %v933 = vrot.slane %v886, 4
        %v934 = vsel %vm911, %v931, %v933
        %v935 = vrot.slane %v887, 4
        %v936 = vsel %vm911, %v933, %v935
        %v937 = vrot.slane %v888, 4
        %v938 = vsel %vm911, %v935, %v937
        %v939 = vrot.slane %v889, 4
        %v940 = vsel %vm911, %v937, %v939
        %v941 = vrot.slane %v890, 4
        %v942 = vsel %vm911, %v939, %v941
        %960 = vst [vmem:[#allocation2 + $0x8] sm:$0xf0] %v912
        %961 = vst [vmem:[#allocation2 + $0x10] sm:$0xff] %v914
        %962 = vst [vmem:[#allocation2 + $0x18] sm:$0xff] %v916
        %963 = vst [vmem:[#allocation2 + $0x20] sm:$0xff] %v918
        %964 = vst [vmem:[#allocation2 + $0x28] sm:$0xff] %v920
        %965 = vst [vmem:[#allocation2 + $0x30] sm:$0xff] %v922
        %966 = vst [vmem:[#allocation2 + $0x38] sm:$0xff] %v924
        %967 = vst [vmem:[#allocation2 + $0x40] sm:$0xff] %v926
        %968 = vst [vmem:[#allocation2 + $0x48] sm:$0xff] %v928
        %969 = vst [vmem:[#allocation2 + $0x50] sm:$0xff] %v930
        %970 = vst [vmem:[#allocation2 + $0x58] sm:$0xff] %v932
        %971 = vst [vmem:[#allocation2 + $0x60] sm:$0xff] %v934
        %972 = vst [vmem:[#allocation2 + $0x68] sm:$0xff] %v936
        %973 = vst [vmem:[#allocation2 + $0x70] sm:$0xff] %v938
        %974 = vst [vmem:[#allocation2 + $0x78] sm:$0xff] %v940
        %975 = vst [vmem:[#allocation2 + $0x80] sm:$0xff] %v942
        %976 = vst [vmem:[#allocation2 + $0x88] sm:$0xf] %v941
        %v977 = vlaneseq
        %v978 = vshrl.u32 %v977, 7
        %v979 = vadd.s32 %v978, 8
        %v980 = vadd.s32 %v978, 16
        %v981 = vadd.s32 %v978, 24
        %v982 = vadd.s32 %v978, 32
        %v983 = vadd.s32 %v978, 40
        %v984 = vadd.s32 %v978, 48
        %v985 = vadd.s32 %v978, 56
        %v986 = vadd.s32 %v978, 64
        %v987 = vadd.s32 %v978, 72
        %v988 = vadd.s32 %v978, 80
        %v989 = vadd.s32 %v978, 88
        %v990 = vadd.s32 %v978, 96
        %v991 = vadd.s32 %v978, 104
        %v992 = vadd.s32 %v978, 112
        %v993 = vadd.s32 %v978, 120
        %v994 = vadd.s32 %v978, 128
        %v995 = vadd.s32 %v978, 136
        %v996 = vadd.s32 %v978, 144
        %v997 = vadd.s32 %v978, 152
        %v998 = vadd.s32 %v978, 160
        %v999 = vadd.s32 %v978, 168
        %v1000 = vadd.s32 %v978, 176
        %v1001 = vadd.s32 %v978, 184
        %v1002 = vadd.s32 %v978, 192
        %v1003 = vadd.s32 %v978, 200
        %v1004 = vadd.s32 %v978, 208
        %v1005 = vadd.s32 %v978, 216
        %v1006 = vadd.s32 %v978, 224
        %v1007 = vadd.s32 %v978, 232
        %v1008 = vadd.s32 %v978, 240
        %v1009 = vadd.s32 %v978, 248
        %vm1010 = vcmp.lt.s32.totalorder %v978, 0
        %v1011 = vsub.s32 0, %v978
        %v1012 = vsel %vm1010, %v1011, %v978
        %v1013 = vshrl.u32 %v1012, 4
        %v1014 = vand.u32 %v1012, 15
        %v1015 = vsub.s32 0, %v1014
        %v1016 = vsel %vm1010, %v1015, %v1014
        %vm1017 = vcmp.lt.s32.totalorder %v979, 0
        %v1018 = vsub.s32 0, %v979
        %v1019 = vsel %vm1017, %v1018, %v979
        %v1020 = vshrl.u32 %v1019, 4
        %v1021 = vand.u32 %v1019, 15
        %v1022 = vsub.s32 0, %v1021
        %v1023 = vsel %vm1017, %v1022, %v1021
        %vm1024 = vcmp.lt.s32.totalorder %v980, 0
        %v1025 = vsub.s32 0, %v980
        %v1026 = vsel %vm1024, %v1025, %v980
        %v1027 = vshrl.u32 %v1026, 4
        %v1028 = vand.u32 %v1026, 15
        %v1029 = vsub.s32 0, %v1028
        %v1030 = vsel %vm1024, %v1029, %v1028
        %vm1031 = vcmp.lt.s32.totalorder %v981, 0
        %v1032 = vsub.s32 0, %v981
        %v1033 = vsel %vm1031, %v1032, %v981
        %v1034 = vshrl.u32 %v1033, 4
        %v1035 = vand.u32 %v1033, 15
        %v1036 = vsub.s32 0, %v1035
        %v1037 = vsel %vm1031, %v1036, %v1035
        %vm1038 = vcmp.lt.s32.totalorder %v982, 0
        %v1039 = vsub.s32 0, %v982
        %v1040 = vsel %vm1038, %v1039, %v982
        %v1041 = vshrl.u32 %v1040, 4
        %v1042 = vand.u32 %v1040, 15
        %v1043 = vsub.s32 0, %v1042
        %v1044 = vsel %vm1038, %v1043, %v1042
        %vm1045 = vcmp.lt.s32.totalorder %v983, 0
        %v1046 = vsub.s32 0, %v983
        %v1047 = vsel %vm1045, %v1046, %v983
        %v1048 = vshrl.u32 %v1047, 4
        %v1049 = vand.u32 %v1047, 15
        %v1050 = vsub.s32 0, %v1049
        %v1051 = vsel %vm1045, %v1050, %v1049
        %vm1052 = vcmp.lt.s32.totalorder %v984, 0
        %v1053 = vsub.s32 0, %v984
        %v1054 = vsel %vm1052, %v1053, %v984
        %v1055 = vshrl.u32 %v1054, 4
        %v1056 = vand.u32 %v1054, 15
        %v1057 = vsub.s32 0, %v1056
        %v1058 = vsel %vm1052, %v1057, %v1056
        %vm1059 = vcmp.lt.s32.totalorder %v985, 0
        %v1060 = vsub.s32 0, %v985
        %v1061 = vsel %vm1059, %v1060, %v985
        %v1062 = vshrl.u32 %v1061, 4
        %v1063 = vand.u32 %v1061, 15
        %v1064 = vsub.s32 0, %v1063
        %v1065 = vsel %vm1059, %v1064, %v1063
        %vm1066 = vcmp.lt.s32.totalorder %v986, 0
        %v1067 = vsub.s32 0, %v986
        %v1068 = vsel %vm1066, %v1067, %v986
        %v1069 = vshrl.u32 %v1068, 4
        %v1070 = vand.u32 %v1068, 15
        %v1071 = vsub.s32 0, %v1070
        %v1072 = vsel %vm1066, %v1071, %v1070
        %vm1073 = vcmp.lt.s32.totalorder %v987, 0
        %v1074 = vsub.s32 0, %v987
        %v1075 = vsel %vm1073, %v1074, %v987
        %v1076 = vshrl.u32 %v1075, 4
        %v1077 = vand.u32 %v1075, 15
        %v1078 = vsub.s32 0, %v1077
        %v1079 = vsel %vm1073, %v1078, %v1077
        %vm1080 = vcmp.lt.s32.totalorder %v988, 0
        %v1081 = vsub.s32 0, %v988
        %v1082 = vsel %vm1080, %v1081, %v988
        %v1083 = vshrl.u32 %v1082, 4
        %v1084 = vand.u32 %v1082, 15
        %v1085 = vsub.s32 0, %v1084
        %v1086 = vsel %vm1080, %v1085, %v1084
        %vm1087 = vcmp.lt.s32.totalorder %v989, 0
        %v1088 = vsub.s32 0, %v989
        %v1089 = vsel %vm1087, %v1088, %v989
        %v1090 = vshrl.u32 %v1089, 4
        %v1091 = vand.u32 %v1089, 15
        %v1092 = vsub.s32 0, %v1091
        %v1093 = vsel %vm1087, %v1092, %v1091
        %vm1094 = vcmp.lt.s32.totalorder %v990, 0
        %v1095 = vsub.s32 0, %v990
        %v1096 = vsel %vm1094, %v1095, %v990
        %v1097 = vshrl.u32 %v1096, 4
        %v1098 = vand.u32 %v1096, 15
        %v1099 = vsub.s32 0, %v1098
        %v1100 = vsel %vm1094, %v1099, %v1098
        %vm1101 = vcmp.lt.s32.totalorder %v991, 0
        %v1102 = vsub.s32 0, %v991
        %v1103 = vsel %vm1101, %v1102, %v991
        %v1104 = vshrl.u32 %v1103, 4
        %v1105 = vand.u32 %v1103, 15
        %v1106 = vsub.s32 0, %v1105
        %v1107 = vsel %vm1101, %v1106, %v1105
        %vm1108 = vcmp.lt.s32.totalorder %v992, 0
        %v1109 = vsub.s32 0, %v992
        %v1110 = vsel %vm1108, %v1109, %v992
        %v1111 = vshrl.u32 %v1110, 4
        %v1112 = vand.u32 %v1110, 15
        %v1113 = vsub.s32 0, %v1112
        %v1114 = vsel %vm1108, %v1113, %v1112
        %vm1115 = vcmp.lt.s32.totalorder %v993, 0
        %v1116 = vsub.s32 0, %v993
        %v1117 = vsel %vm1115, %v1116, %v993
        %v1118 = vshrl.u32 %v1117, 4
        %v1119 = vand.u32 %v1117, 15
        %v1120 = vsub.s32 0, %v1119
        %v1121 = vsel %vm1115, %v1120, %v1119
        %vm1122 = vcmp.lt.s32.totalorder %v994, 0
        %v1123 = vsub.s32 0, %v994
        %v1124 = vsel %vm1122, %v1123, %v994
        %v1125 = vshrl.u32 %v1124, 4
        %v1126 = vand.u32 %v1124, 15
        %v1127 = vsub.s32 0, %v1126
        %v1128 = vsel %vm1122, %v1127, %v1126
        %vm1129 = vcmp.lt.s32.totalorder %v995, 0
        %v1130 = vsub.s32 0, %v995
        %v1131 = vsel %vm1129, %v1130, %v995
        %v1132 = vshrl.u32 %v1131, 4
        %v1133 = vand.u32 %v1131, 15
        %v1134 = vsub.s32 0, %v1133
        %v1135 = vsel %vm1129, %v1134, %v1133
        %vm1136 = vcmp.lt.s32.totalorder %v996, 0
        %v1137 = vsub.s32 0, %v996
        %v1138 = vsel %vm1136, %v1137, %v996
        %v1139 = vshrl.u32 %v1138, 4
        %v1140 = vand.u32 %v1138, 15
        %v1141 = vsub.s32 0, %v1140
        %v1142 = vsel %vm1136, %v1141, %v1140
        %vm1143 = vcmp.lt.s32.totalorder %v997, 0
        %v1144 = vsub.s32 0, %v997
        %v1145 = vsel %vm1143, %v1144, %v997
        %v1146 = vshrl.u32 %v1145, 4
        %v1147 = vand.u32 %v1145, 15
        %v1148 = vsub.s32 0, %v1147
        %v1149 = vsel %vm1143, %v1148, %v1147
        %vm1150 = vcmp.lt.s32.totalorder %v998, 0
        %v1151 = vsub.s32 0, %v998
        %v1152 = vsel %vm1150, %v1151, %v998
        %v1153 = vshrl.u32 %v1152, 4
        %v1154 = vand.u32 %v1152, 15
        %v1155 = vsub.s32 0, %v1154
        %v1156 = vsel %vm1150, %v1155, %v1154
        %vm1157 = vcmp.lt.s32.totalorder %v999, 0
        %v1158 = vsub.s32 0, %v999
        %v1159 = vsel %vm1157, %v1158, %v999
        %v1160 = vshrl.u32 %v1159, 4
        %v1161 = vand.u32 %v1159, 15
        %v1162 = vsub.s32 0, %v1161
        %v1163 = vsel %vm1157, %v1162, %v1161
        %vm1164 = vcmp.lt.s32.totalorder %v1000, 0
        %v1165 = vsub.s32 0, %v1000
        %v1166 = vsel %vm1164, %v1165, %v1000
        %v1167 = vshrl.u32 %v1166, 4
        %v1168 = vand.u32 %v1166, 15
        %v1169 = vsub.s32 0, %v1168
        %v1170 = vsel %vm1164, %v1169, %v1168
        %vm1171 = vcmp.lt.s32.totalorder %v1001, 0
        %v1172 = vsub.s32 0, %v1001
        %v1173 = vsel %vm1171, %v1172, %v1001
        %v1174 = vshrl.u32 %v1173, 4
        %v1175 = vand.u32 %v1173, 15
        %v1176 = vsub.s32 0, %v1175
        %v1177 = vsel %vm1171, %v1176, %v1175
        %vm1178 = vcmp.lt.s32.totalorder %v1002, 0
        %v1179 = vsub.s32 0, %v1002
        %v1180 = vsel %vm1178, %v1179, %v1002
        %v1181 = vshrl.u32 %v1180, 4
        %v1182 = vand.u32 %v1180, 15
        %v1183 = vsub.s32 0, %v1182
        %v1184 = vsel %vm1178, %v1183, %v1182
        %vm1185 = vcmp.lt.s32.totalorder %v1003, 0
        %v1186 = vsub.s32 0, %v1003
        %v1187 = vsel %vm1185, %v1186, %v1003
        %v1188 = vshrl.u32 %v1187, 4
        %v1189 = vand.u32 %v1187, 15
        %v1190 = vsub.s32 0, %v1189
        %v1191 = vsel %vm1185, %v1190, %v1189
        %vm1192 = vcmp.lt.s32.totalorder %v1004, 0
        %v1193 = vsub.s32 0, %v1004
        %v1194 = vsel %vm1192, %v1193, %v1004
        %v1195 = vshrl.u32 %v1194, 4
        %v1196 = vand.u32 %v1194, 15
        %v1197 = vsub.s32 0, %v1196
        %v1198 = vsel %vm1192, %v1197, %v1196
        %vm1199 = vcmp.lt.s32.totalorder %v1005, 0
        %v1200 = vsub.s32 0, %v1005
        %v1201 = vsel %vm1199, %v1200, %v1005
        %v1202 = vshrl.u32 %v1201, 4
        %v1203 = vand.u32 %v1201, 15
        %v1204 = vsub.s32 0, %v1203
        %v1205 = vsel %vm1199, %v1204, %v1203
        %vm1206 = vcmp.lt.s32.totalorder %v1006, 0
        %v1207 = vsub.s32 0, %v1006
        %v1208 = vsel %vm1206, %v1207, %v1006
        %v1209 = vshrl.u32 %v1208, 4
        %v1210 = vand.u32 %v1208, 15
        %v1211 = vsub.s32 0, %v1210
        %v1212 = vsel %vm1206, %v1211, %v1210
        %vm1213 = vcmp.lt.s32.totalorder %v1007, 0
        %v1214 = vsub.s32 0, %v1007
        %v1215 = vsel %vm1213, %v1214, %v1007
        %v1216 = vshrl.u32 %v1215, 4
        %v1217 = vand.u32 %v1215, 15
        %v1218 = vsub.s32 0, %v1217
        %v1219 = vsel %vm1213, %v1218, %v1217
        %vm1220 = vcmp.lt.s32.totalorder %v1008, 0
        %v1221 = vsub.s32 0, %v1008
        %v1222 = vsel %vm1220, %v1221, %v1008
        %v1223 = vshrl.u32 %v1222, 4
        %v1224 = vand.u32 %v1222, 15
        %v1225 = vsub.s32 0, %v1224
        %v1226 = vsel %vm1220, %v1225, %v1224
        %vm1227 = vcmp.lt.s32.totalorder %v1009, 0
        %v1228 = vsub.s32 0, %v1009
        %v1229 = vsel %vm1227, %v1228, %v1009
        %v1230 = vshrl.u32 %v1229, 4
        %v1231 = vand.u32 %v1229, 15
        %v1232 = vsub.s32 0, %v1231
        %v1233 = vsel %vm1227, %v1232, %v1231
        %vm1234 = vcmp.ne.s32.totalorder %v1016, 0
        %vm1235 = vcmp.ne.s32.totalorder %v1023, 0
        %vm1236 = vcmp.ne.s32.totalorder %v1030, 0
        %vm1237 = vcmp.ne.s32.totalorder %v1037, 0
        %vm1238 = vcmp.ne.s32.totalorder %v1044, 0
        %vm1239 = vcmp.ne.s32.totalorder %v1051, 0
        %vm1240 = vcmp.ne.s32.totalorder %v1058, 0
        %vm1241 = vcmp.ne.s32.totalorder %v1065, 0
        %vm1242 = vcmp.ne.s32.totalorder %v1072, 0
        %vm1243 = vcmp.ne.s32.totalorder %v1079, 0
        %vm1244 = vcmp.ne.s32.totalorder %v1086, 0
        %vm1245 = vcmp.ne.s32.totalorder %v1093, 0
        %vm1246 = vcmp.ne.s32.totalorder %v1100, 0
        %vm1247 = vcmp.ne.s32.totalorder %v1107, 0
        %vm1248 = vcmp.ne.s32.totalorder %v1114, 0
        %vm1249 = vcmp.ne.s32.totalorder %v1121, 0
        %vm1250 = vcmp.ne.s32.totalorder %v1128, 0
        %vm1251 = vcmp.ne.s32.totalorder %v1135, 0
        %vm1252 = vcmp.ne.s32.totalorder %v1142, 0
        %vm1253 = vcmp.ne.s32.totalorder %v1149, 0
        %vm1254 = vcmp.ne.s32.totalorder %v1156, 0
        %vm1255 = vcmp.ne.s32.totalorder %v1163, 0
        %vm1256 = vcmp.ne.s32.totalorder %v1170, 0
        %vm1257 = vcmp.ne.s32.totalorder %v1177, 0
        %vm1258 = vcmp.ne.s32.totalorder %v1184, 0
        %vm1259 = vcmp.ne.s32.totalorder %v1191, 0
        %vm1260 = vcmp.ne.s32.totalorder %v1198, 0
        %vm1261 = vcmp.ne.s32.totalorder %v1205, 0
        %vm1262 = vcmp.ne.s32.totalorder %v1212, 0
        %vm1263 = vcmp.ne.s32.totalorder %v1219, 0
        %vm1264 = vcmp.ne.s32.totalorder %v1226, 0
        %vm1265 = vcmp.ne.s32.totalorder %v1233, 0
        %vm1266 = vcmp.lt.s32.totalorder %v1016, 0
        %vm1267 = vcmp.lt.s32.totalorder %v1023, 0
        %vm1268 = vcmp.lt.s32.totalorder %v1030, 0
        %vm1269 = vcmp.lt.s32.totalorder %v1037, 0
        %vm1270 = vcmp.lt.s32.totalorder %v1044, 0
        %vm1271 = vcmp.lt.s32.totalorder %v1051, 0
        %vm1272 = vcmp.lt.s32.totalorder %v1058, 0
        %vm1273 = vcmp.lt.s32.totalorder %v1065, 0
        %vm1274 = vcmp.lt.s32.totalorder %v1072, 0
        %vm1275 = vcmp.lt.s32.totalorder %v1079, 0
        %vm1276 = vcmp.lt.s32.totalorder %v1086, 0
        %vm1277 = vcmp.lt.s32.totalorder %v1093, 0
        %vm1278 = vcmp.lt.s32.totalorder %v1100, 0
        %vm1279 = vcmp.lt.s32.totalorder %v1107, 0
        %vm1280 = vcmp.lt.s32.totalorder %v1114, 0
        %vm1281 = vcmp.lt.s32.totalorder %v1121, 0
        %vm1282 = vcmp.lt.s32.totalorder %v1128, 0
        %vm1283 = vcmp.lt.s32.totalorder %v1135, 0
        %vm1284 = vcmp.lt.s32.totalorder %v1142, 0
        %vm1285 = vcmp.lt.s32.totalorder %v1149, 0
        %vm1286 = vcmp.lt.s32.totalorder %v1156, 0
        %vm1287 = vcmp.lt.s32.totalorder %v1163, 0
        %vm1288 = vcmp.lt.s32.totalorder %v1170, 0
        %vm1289 = vcmp.lt.s32.totalorder %v1177, 0
        %vm1290 = vcmp.lt.s32.totalorder %v1184, 0
        %vm1291 = vcmp.lt.s32.totalorder %v1191, 0
        %vm1292 = vcmp.lt.s32.totalorder %v1198, 0
        %vm1293 = vcmp.lt.s32.totalorder %v1205, 0
        %vm1294 = vcmp.lt.s32.totalorder %v1212, 0
        %vm1295 = vcmp.lt.s32.totalorder %v1219, 0
        %vm1296 = vcmp.lt.s32.totalorder %v1226, 0
        %vm1297 = vcmp.lt.s32.totalorder %v1233, 0
        %vm1298 = vmand %vm1266, %vm1234
        %vm1299 = vmand %vm1267, %vm1235
        %vm1300 = vmand %vm1268, %vm1236
        %vm1301 = vmand %vm1269, %vm1237
        %vm1302 = vmand %vm1270, %vm1238
        %vm1303 = vmand %vm1271, %vm1239
        %vm1304 = vmand %vm1272, %vm1240
        %vm1305 = vmand %vm1273, %vm1241
        %vm1306 = vmand %vm1274, %vm1242
        %vm1307 = vmand %vm1275, %vm1243
        %vm1308 = vmand %vm1276, %vm1244
        %vm1309 = vmand %vm1277, %vm1245
        %vm1310 = vmand %vm1278, %vm1246
        %vm1311 = vmand %vm1279, %vm1247
        %vm1312 = vmand %vm1280, %vm1248
        %vm1313 = vmand %vm1281, %vm1249
        %vm1314 = vmand %vm1282, %vm1250
        %vm1315 = vmand %vm1283, %vm1251
        %vm1316 = vmand %vm1284, %vm1252
        %vm1317 = vmand %vm1285, %vm1253
        %vm1318 = vmand %vm1286, %vm1254
        %vm1319 = vmand %vm1287, %vm1255
        %vm1320 = vmand %vm1288, %vm1256
        %vm1321 = vmand %vm1289, %vm1257
        %vm1322 = vmand %vm1290, %vm1258
        %vm1323 = vmand %vm1291, %vm1259
        %vm1324 = vmand %vm1292, %vm1260
        %vm1325 = vmand %vm1293, %vm1261
        %vm1326 = vmand %vm1294, %vm1262
        %vm1327 = vmand %vm1295, %vm1263
        %vm1328 = vmand %vm1296, %vm1264
        %vm1329 = vmand %vm1297, %vm1265
        %v1330 = vadd.s32 %v1016, 16
        %v1331 = vadd.s32 %v1023, 16
        %v1332 = vadd.s32 %v1030, 16
        %v1333 = vadd.s32 %v1037, 16
        %v1334 = vadd.s32 %v1044, 16
        %v1335 = vadd.s32 %v1051, 16
        %v1336 = vadd.s32 %v1058, 16
        %v1337 = vadd.s32 %v1065, 16
        %v1338 = vadd.s32 %v1072, 16
        %v1339 = vadd.s32 %v1079, 16
        %v1340 = vadd.s32 %v1086, 16
        %v1341 = vadd.s32 %v1093, 16
        %v1342 = vadd.s32 %v1100, 16
        %v1343 = vadd.s32 %v1107, 16
        %v1344 = vadd.s32 %v1114, 16
        %v1345 = vadd.s32 %v1121, 16
        %v1346 = vadd.s32 %v1128, 16
        %v1347 = vadd.s32 %v1135, 16
        %v1348 = vadd.s32 %v1142, 16
        %v1349 = vadd.s32 %v1149, 16
        %v1350 = vadd.s32 %v1156, 16
        %v1351 = vadd.s32 %v1163, 16
        %v1352 = vadd.s32 %v1170, 16
        %v1353 = vadd.s32 %v1177, 16
        %v1354 = vadd.s32 %v1184, 16
        %v1355 = vadd.s32 %v1191, 16
        %v1356 = vadd.s32 %v1198, 16
        %v1357 = vadd.s32 %v1205, 16
        %v1358 = vadd.s32 %v1212, 16
        %v1359 = vadd.s32 %v1219, 16
        %v1360 = vadd.s32 %v1226, 16
        %v1361 = vadd.s32 %v1233, 16
        %v1362 = vsel %vm1298, %v1330, %v1016
        %v1363 = vsel %vm1299, %v1331, %v1023
        %v1364 = vsel %vm1300, %v1332, %v1030
        %v1365 = vsel %vm1301, %v1333, %v1037
        %v1366 = vsel %vm1302, %v1334, %v1044
        %v1367 = vsel %vm1303, %v1335, %v1051
        %v1368 = vsel %vm1304, %v1336, %v1058
        %v1369 = vsel %vm1305, %v1337, %v1065
        %v1370 = vsel %vm1306, %v1338, %v1072
        %v1371 = vsel %vm1307, %v1339, %v1079
        %v1372 = vsel %vm1308, %v1340, %v1086
        %v1373 = vsel %vm1309, %v1341, %v1093
        %v1374 = vsel %vm1310, %v1342, %v1100
        %v1375 = vsel %vm1311, %v1343, %v1107
        %v1376 = vsel %vm1312, %v1344, %v1114
        %v1377 = vsel %vm1313, %v1345, %v1121
        %v1378 = vsel %vm1314, %v1346, %v1128
        %v1379 = vsel %vm1315, %v1347, %v1135
        %v1380 = vsel %vm1316, %v1348, %v1142
        %v1381 = vsel %vm1317, %v1349, %v1149
        %v1382 = vsel %vm1318, %v1350, %v1156
        %v1383 = vsel %vm1319, %v1351, %v1163
        %v1384 = vsel %vm1320, %v1352, %v1170
        %v1385 = vsel %vm1321, %v1353, %v1177
        %v1386 = vsel %vm1322, %v1354, %v1184
        %v1387 = vsel %vm1323, %v1355, %v1191
        %v1388 = vsel %vm1324, %v1356, %v1198
        %v1389 = vsel %vm1325, %v1357, %v1205
        %v1390 = vsel %vm1326, %v1358, %v1212
        %v1391 = vsel %vm1327, %v1359, %v1219
        %v1392 = vsel %vm1328, %v1360, %v1226
        %v1393 = vsel %vm1329, %v1361, %v1233
        %v1394 = vadd.s32 %v1362, 4294967295
        %v1395 = vadd.s32 %v1363, 4294967295
        %v1396 = vadd.s32 %v1364, 4294967295
        %v1397 = vadd.s32 %v1365, 4294967295
        %v1398 = vadd.s32 %v1366, 4294967295
        %v1399 = vadd.s32 %v1367, 4294967295
        %v1400 = vadd.s32 %v1368, 4294967295
        %v1401 = vadd.s32 %v1369, 4294967295
        %v1402 = vadd.s32 %v1370, 4294967295
        %v1403 = vadd.s32 %v1371, 4294967295
        %v1404 = vadd.s32 %v1372, 4294967295
        %v1405 = vadd.s32 %v1373, 4294967295
        %v1406 = vadd.s32 %v1374, 4294967295
        %v1407 = vadd.s32 %v1375, 4294967295
        %v1408 = vadd.s32 %v1376, 4294967295
        %v1409 = vadd.s32 %v1377, 4294967295
        %v1410 = vadd.s32 %v1378, 4294967295
        %v1411 = vadd.s32 %v1379, 4294967295
        %v1412 = vadd.s32 %v1380, 4294967295
        %v1413 = vadd.s32 %v1381, 4294967295
        %v1414 = vadd.s32 %v1382, 4294967295
        %v1415 = vadd.s32 %v1383, 4294967295
        %v1416 = vadd.s32 %v1384, 4294967295
        %v1417 = vadd.s32 %v1385, 4294967295
        %v1418 = vadd.s32 %v1386, 4294967295
        %v1419 = vadd.s32 %v1387, 4294967295
        %v1420 = vadd.s32 %v1388, 4294967295
        %v1421 = vadd.s32 %v1389, 4294967295
        %v1422 = vadd.s32 %v1390, 4294967295
        %v1423 = vadd.s32 %v1391, 4294967295
        %v1424 = vadd.s32 %v1392, 4294967295
        %v1425 = vadd.s32 %v1393, 4294967295
        %vm1426 = vcmp.ge.s32.totalorder %v1394, 0
        %vm1427 = vcmp.ge.s32.totalorder %v1395, 0
        %vm1428 = vcmp.ge.s32.totalorder %v1396, 0
        %vm1429 = vcmp.ge.s32.totalorder %v1397, 0
        %vm1430 = vcmp.ge.s32.totalorder %v1398, 0
        %vm1431 = vcmp.ge.s32.totalorder %v1399, 0
        %vm1432 = vcmp.ge.s32.totalorder %v1400, 0
        %vm1433 = vcmp.ge.s32.totalorder %v1401, 0
        %vm1434 = vcmp.ge.s32.totalorder %v1402, 0
        %vm1435 = vcmp.ge.s32.totalorder %v1403, 0
        %vm1436 = vcmp.ge.s32.totalorder %v1404, 0
        %vm1437 = vcmp.ge.s32.totalorder %v1405, 0
        %vm1438 = vcmp.ge.s32.totalorder %v1406, 0
        %vm1439 = vcmp.ge.s32.totalorder %v1407, 0
        %vm1440 = vcmp.ge.s32.totalorder %v1408, 0
        %vm1441 = vcmp.ge.s32.totalorder %v1409, 0
        %vm1442 = vcmp.ge.s32.totalorder %v1410, 0
        %vm1443 = vcmp.ge.s32.totalorder %v1411, 0
        %vm1444 = vcmp.ge.s32.totalorder %v1412, 0
        %vm1445 = vcmp.ge.s32.totalorder %v1413, 0
        %vm1446 = vcmp.ge.s32.totalorder %v1414, 0
        %vm1447 = vcmp.ge.s32.totalorder %v1415, 0
        %vm1448 = vcmp.ge.s32.totalorder %v1416, 0
        %vm1449 = vcmp.ge.s32.totalorder %v1417, 0
        %vm1450 = vcmp.ge.s32.totalorder %v1418, 0
        %vm1451 = vcmp.ge.s32.totalorder %v1419, 0
        %vm1452 = vcmp.ge.s32.totalorder %v1420, 0
        %vm1453 = vcmp.ge.s32.totalorder %v1421, 0
        %vm1454 = vcmp.ge.s32.totalorder %v1422, 0
        %vm1455 = vcmp.ge.s32.totalorder %v1423, 0
        %vm1456 = vcmp.ge.s32.totalorder %v1424, 0
        %vm1457 = vcmp.ge.s32.totalorder %v1425, 0
        %vm1458 = vcmp.lt.s32.totalorder %v1394, 16
        %vm1459 = vcmp.lt.s32.totalorder %v1395, 16
        %vm1460 = vcmp.lt.s32.totalorder %v1396, 16
        %vm1461 = vcmp.lt.s32.totalorder %v1397, 16
        %vm1462 = vcmp.lt.s32.totalorder %v1398, 16
        %vm1463 = vcmp.lt.s32.totalorder %v1399, 16
        %vm1464 = vcmp.lt.s32.totalorder %v1400, 16
        %vm1465 = vcmp.lt.s32.totalorder %v1401, 16
        %vm1466 = vcmp.lt.s32.totalorder %v1402, 16
        %vm1467 = vcmp.lt.s32.totalorder %v1403, 16
        %vm1468 = vcmp.lt.s32.totalorder %v1404, 16
        %vm1469 = vcmp.lt.s32.totalorder %v1405, 16
        %vm1470 = vcmp.lt.s32.totalorder %v1406, 16
        %vm1471 = vcmp.lt.s32.totalorder %v1407, 16
        %vm1472 = vcmp.lt.s32.totalorder %v1408, 16
        %vm1473 = vcmp.lt.s32.totalorder %v1409, 16
        %vm1474 = vcmp.lt.s32.totalorder %v1410, 16
        %vm1475 = vcmp.lt.s32.totalorder %v1411, 16
        %vm1476 = vcmp.lt.s32.totalorder %v1412, 16
        %vm1477 = vcmp.lt.s32.totalorder %v1413, 16
        %vm1478 = vcmp.lt.s32.totalorder %v1414, 16
        %vm1479 = vcmp.lt.s32.totalorder %v1415, 16
        %vm1480 = vcmp.lt.s32.totalorder %v1416, 16
        %vm1481 = vcmp.lt.s32.totalorder %v1417, 16
        %vm1482 = vcmp.lt.s32.totalorder %v1418, 16
        %vm1483 = vcmp.lt.s32.totalorder %v1419, 16
        %vm1484 = vcmp.lt.s32.totalorder %v1420, 16
        %vm1485 = vcmp.lt.s32.totalorder %v1421, 16
        %vm1486 = vcmp.lt.s32.totalorder %v1422, 16
        %vm1487 = vcmp.lt.s32.totalorder %v1423, 16
        %vm1488 = vcmp.lt.s32.totalorder %v1424, 16
        %vm1489 = vcmp.lt.s32.totalorder %v1425, 16
        %vm1490 = vmand %vm1426, %vm1458
        %vm1491 = vmand %vm1427, %vm1459
        %vm1492 = vmand %vm1428, %vm1460
        %vm1493 = vmand %vm1429, %vm1461
        %vm1494 = vmand %vm1430, %vm1462
        %vm1495 = vmand %vm1431, %vm1463
        %vm1496 = vmand %vm1432, %vm1464
        %vm1497 = vmand %vm1433, %vm1465
        %vm1498 = vmand %vm1434, %vm1466
        %vm1499 = vmand %vm1435, %vm1467
        %vm1500 = vmand %vm1436, %vm1468
        %vm1501 = vmand %vm1437, %vm1469
        %vm1502 = vmand %vm1438, %vm1470
        %vm1503 = vmand %vm1439, %vm1471
        %vm1504 = vmand %vm1440, %vm1472
        %vm1505 = vmand %vm1441, %vm1473
        %vm1506 = vmand %vm1442, %vm1474
        %vm1507 = vmand %vm1443, %vm1475
        %vm1508 = vmand %vm1444, %vm1476
        %vm1509 = vmand %vm1445, %vm1477
        %vm1510 = vmand %vm1446, %vm1478
        %vm1511 = vmand %vm1447, %vm1479
        %vm1512 = vmand %vm1448, %vm1480
        %vm1513 = vmand %vm1449, %vm1481
        %vm1514 = vmand %vm1450, %vm1482
        %vm1515 = vmand %vm1451, %vm1483
        %vm1516 = vmand %vm1452, %vm1484
        %vm1517 = vmand %vm1453, %vm1485
        %vm1518 = vmand %vm1454, %vm1486
        %vm1519 = vmand %vm1455, %vm1487
        %vm1520 = vmand %vm1456, %vm1488
        %vm1521 = vmand %vm1457, %vm1489
        %v1522 = vld [vmem:[#allocation2] sm:$0xf8]
        %v1523 = vld [vmem:[#allocation2 + $0x8] sm:$0xff]
        %v1524 = vld [vmem:[#allocation2 + $0x10] sm:$0xff]
        %v1525 = vld [vmem:[#allocation2 + $0x18] sm:$0xff]
        %v1526 = vld [vmem:[#allocation2 + $0x20] sm:$0xff]
        %v1527 = vld [vmem:[#allocation2 + $0x28] sm:$0xff]
        %v1528 = vld [vmem:[#allocation2 + $0x30] sm:$0xff]
        %v1529 = vld [vmem:[#allocation2 + $0x38] sm:$0xff]
        %v1530 = vld [vmem:[#allocation2 + $0x40] sm:$0xff]
        %v1531 = vld [vmem:[#allocation2 + $0x48] sm:$0xff]
        %v1532 = vld [vmem:[#allocation2 + $0x50] sm:$0xff]
        %v1533 = vld [vmem:[#allocation2 + $0x58] sm:$0xff]
        %v1534 = vld [vmem:[#allocation2 + $0x60] sm:$0xff]
        %v1535 = vld [vmem:[#allocation2 + $0x68] sm:$0xff]
        %v1536 = vld [vmem:[#allocation2 + $0x70] sm:$0xff]
        %v1537 = vld [vmem:[#allocation2 + $0x78] sm:$0xff]
        %v1538 = vld [vmem:[#allocation2 + $0x80] sm:$0xf]
        %v1539 = vsel %vm1490, 1, 0
        %v1540 = vsel %vm1491, 1, 0
        %v1541 = vsel %vm1492, 1, 0
        %v1542 = vsel %vm1493, 1, 0
        %v1543 = vsel %vm1494, 1, 0
        %v1544 = vsel %vm1495, 1, 0
        %v1545 = vsel %vm1496, 1, 0
        %v1546 = vsel %vm1497, 1, 0
        %v1547 = vsel %vm1498, 1, 0
        %v1548 = vsel %vm1499, 1, 0
        %v1549 = vsel %vm1500, 1, 0
        %v1550 = vsel %vm1501, 1, 0
        %v1551 = vsel %vm1502, 1, 0
        %v1552 = vsel %vm1503, 1, 0
        %v1553 = vsel %vm1504, 1, 0
        %v1554 = vsel %vm1505, 1, 0
        %v1555 = vsel %vm1506, 1, 0
        %v1556 = vsel %vm1507, 1, 0
        %v1557 = vsel %vm1508, 1, 0
        %v1558 = vsel %vm1509, 1, 0
        %v1559 = vsel %vm1510, 1, 0
        %v1560 = vsel %vm1511, 1, 0
        %v1561 = vsel %vm1512, 1, 0
        %v1562 = vsel %vm1513, 1, 0
        %v1563 = vsel %vm1514, 1, 0
        %v1564 = vsel %vm1515, 1, 0
        %v1565 = vsel %vm1516, 1, 0
        %v1566 = vsel %vm1517, 1, 0
        %v1567 = vsel %vm1518, 1, 0
        %v1568 = vsel %vm1519, 1, 0
        %v1569 = vsel %vm1520, 1, 0
        %v1570 = vsel %vm1521, 1, 0
        %vm1571 = vcmp.eq.s32.totalorder %v1539, 1
        %vm1572 = vcmp.eq.s32.totalorder %v1540, 1
        %vm1573 = vcmp.eq.s32.totalorder %v1541, 1
        %vm1574 = vcmp.eq.s32.totalorder %v1542, 1
        %vm1575 = vcmp.eq.s32.totalorder %v1543, 1
        %vm1576 = vcmp.eq.s32.totalorder %v1544, 1
        %vm1577 = vcmp.eq.s32.totalorder %v1545, 1
        %vm1578 = vcmp.eq.s32.totalorder %v1546, 1
        %vm1579 = vcmp.eq.s32.totalorder %v1547, 1
        %vm1580 = vcmp.eq.s32.totalorder %v1548, 1
        %vm1581 = vcmp.eq.s32.totalorder %v1549, 1
        %vm1582 = vcmp.eq.s32.totalorder %v1550, 1
        %vm1583 = vcmp.eq.s32.totalorder %v1551, 1
        %vm1584 = vcmp.eq.s32.totalorder %v1552, 1
        %vm1585 = vcmp.eq.s32.totalorder %v1553, 1
        %vm1586 = vcmp.eq.s32.totalorder %v1554, 1
        %vm1587 = vcmp.eq.s32.totalorder %v1555, 1
        %vm1588 = vcmp.eq.s32.totalorder %v1556, 1
        %vm1589 = vcmp.eq.s32.totalorder %v1557, 1
        %vm1590 = vcmp.eq.s32.totalorder %v1558, 1
        %vm1591 = vcmp.eq.s32.totalorder %v1559, 1
        %vm1592 = vcmp.eq.s32.totalorder %v1560, 1
        %vm1593 = vcmp.eq.s32.totalorder %v1561, 1
        %vm1594 = vcmp.eq.s32.totalorder %v1562, 1
        %vm1595 = vcmp.eq.s32.totalorder %v1563, 1
        %vm1596 = vcmp.eq.s32.totalorder %v1564, 1
        %vm1597 = vcmp.eq.s32.totalorder %v1565, 1
        %vm1598 = vcmp.eq.s32.totalorder %v1566, 1
        %vm1599 = vcmp.eq.s32.totalorder %v1567, 1
        %vm1600 = vcmp.eq.s32.totalorder %v1568, 1
        %vm1601 = vcmp.eq.s32.totalorder %v1569, 1
        %vm1602 = vcmp.eq.s32.totalorder %v1570, 1
        %vm1603 = vmpackc.low %vm1571, %vm1571
        %vm1604 = vmpackc.low %vm1572, %vm1572
        %vm1605 = vmpackc.low %vm1573, %vm1573
        %vm1606 = vmpackc.low %vm1574, %vm1574
        %vm1607 = vmpackc.low %vm1575, %vm1575
        %vm1608 = vmpackc.low %vm1576, %vm1576
        %vm1609 = vmpackc.low %vm1577, %vm1577
        %vm1610 = vmpackc.low %vm1578, %vm1578
        %vm1611 = vmpackc.low %vm1579, %vm1579
        %vm1612 = vmpackc.low %vm1580, %vm1580
        %vm1613 = vmpackc.low %vm1581, %vm1581
        %vm1614 = vmpackc.low %vm1582, %vm1582
        %vm1615 = vmpackc.low %vm1583, %vm1583
        %vm1616 = vmpackc.low %vm1584, %vm1584
        %vm1617 = vmpackc.low %vm1585, %vm1585
        %vm1618 = vmpackc.low %vm1586, %vm1586
        %vm1619 = vmpackc.low %vm1587, %vm1587
        %vm1620 = vmpackc.low %vm1588, %vm1588
        %vm1621 = vmpackc.low %vm1589, %vm1589
        %vm1622 = vmpackc.low %vm1590, %vm1590
        %vm1623 = vmpackc.low %vm1591, %vm1591
        %vm1624 = vmpackc.low %vm1592, %vm1592
        %vm1625 = vmpackc.low %vm1593, %vm1593
        %vm1626 = vmpackc.low %vm1594, %vm1594
        %vm1627 = vmpackc.low %vm1595, %vm1595
        %vm1628 = vmpackc.low %vm1596, %vm1596
        %vm1629 = vmpackc.low %vm1597, %vm1597
        %vm1630 = vmpackc.low %vm1598, %vm1598
        %vm1631 = vmpackc.low %vm1599, %vm1599
        %vm1632 = vmpackc.low %vm1600, %vm1600
        %vm1633 = vmpackc.low %vm1601, %vm1601
        %vm1634 = vmpackc.low %vm1602, %vm1602
        %v1635 = vsel %vm1603, 65537, 0
        %v1636 = vsel %vm1604, 65537, 0
        %v1637 = vsel %vm1605, 65537, 0
        %v1638 = vsel %vm1606, 65537, 0
        %v1639 = vsel %vm1607, 65537, 0
        %v1640 = vsel %vm1608, 65537, 0
        %v1641 = vsel %vm1609, 65537, 0
        %v1642 = vsel %vm1610, 65537, 0
        %v1643 = vsel %vm1611, 65537, 0
        %v1644 = vsel %vm1612, 65537, 0
        %v1645 = vsel %vm1613, 65537, 0
        %v1646 = vsel %vm1614, 65537, 0
        %v1647 = vsel %vm1615, 65537, 0
        %v1648 = vsel %vm1616, 65537, 0
        %v1649 = vsel %vm1617, 65537, 0
        %v1650 = vsel %vm1618, 65537, 0
        %v1651 = vsel %vm1619, 65537, 0
        %v1652 = vsel %vm1620, 65537, 0
        %v1653 = vsel %vm1621, 65537, 0
        %v1654 = vsel %vm1622, 65537, 0
        %v1655 = vsel %vm1623, 65537, 0
        %v1656 = vsel %vm1624, 65537, 0
        %v1657 = vsel %vm1625, 65537, 0
        %v1658 = vsel %vm1626, 65537, 0
        %v1659 = vsel %vm1627, 65537, 0
        %v1660 = vsel %vm1628, 65537, 0
        %v1661 = vsel %vm1629, 65537, 0
        %v1662 = vsel %vm1630, 65537, 0
        %v1663 = vsel %vm1631, 65537, 0
        %v1664 = vsel %vm1632, 65537, 0
        %v1665 = vsel %vm1633, 65537, 0
        %v1666 = vsel %vm1634, 65537, 0
        %v1667 = vunpack.c.l.b16 %v1635
        %v1668 = vunpack.c.l.b16 %v1636
        %v1669 = vunpack.c.l.b16 %v1637
        %v1670 = vunpack.c.l.b16 %v1638
        %v1671 = vunpack.c.l.b16 %v1639
        %v1672 = vunpack.c.l.b16 %v1640
        %v1673 = vunpack.c.l.b16 %v1641
        %v1674 = vunpack.c.l.b16 %v1642
        %v1675 = vunpack.c.l.b16 %v1643
        %v1676 = vunpack.c.l.b16 %v1644
        %v1677 = vunpack.c.l.b16 %v1645
        %v1678 = vunpack.c.l.b16 %v1646
        %v1679 = vunpack.c.l.b16 %v1647
        %v1680 = vunpack.c.l.b16 %v1648
        %v1681 = vunpack.c.l.b16 %v1649
        %v1682 = vunpack.c.l.b16 %v1650
        %v1683 = vunpack.c.l.b16 %v1651
        %v1684 = vunpack.c.l.b16 %v1652
        %v1685 = vunpack.c.l.b16 %v1653
        %v1686 = vunpack.c.l.b16 %v1654
        %v1687 = vunpack.c.l.b16 %v1655
        %v1688 = vunpack.c.l.b16 %v1656
        %v1689 = vunpack.c.l.b16 %v1657
        %v1690 = vunpack.c.l.b16 %v1658
        %v1691 = vunpack.c.l.b16 %v1659
        %v1692 = vunpack.c.l.b16 %v1660
        %v1693 = vunpack.c.l.b16 %v1661
        %v1694 = vunpack.c.l.b16 %v1662
        %v1695 = vunpack.c.l.b16 %v1663
        %v1696 = vunpack.c.l.b16 %v1664
        %v1697 = vunpack.c.l.b16 %v1665
        %v1698 = vunpack.c.l.b16 %v1666
        %v1699 = vpack.c.b16 %v1668, %v1667
        %v1700 = vpack.c.b16 %v1670, %v1669
        %v1701 = vpack.c.b16 %v1672, %v1671
        %v1702 = vpack.c.b16 %v1674, %v1673
        %v1703 = vpack.c.b16 %v1676, %v1675
        %v1704 = vpack.c.b16 %v1678, %v1677
        %v1705 = vpack.c.b16 %v1680, %v1679
        %v1706 = vpack.c.b16 %v1682, %v1681
        %v1707 = vpack.c.b16 %v1684, %v1683
        %v1708 = vpack.c.b16 %v1686, %v1685
        %v1709 = vpack.c.b16 %v1688, %v1687
        %v1710 = vpack.c.b16 %v1690, %v1689
        %v1711 = vpack.c.b16 %v1692, %v1691
        %v1712 = vpack.c.b16 %v1694, %v1693
        %v1713 = vpack.c.b16 %v1696, %v1695
        %v1714 = vpack.c.b16 %v1698, %v1697
        %vm1715 = vsmask.f32 3328
        %v1717 = vshrl.u32 %v1699, 16
        %v1719 = vrot.slane %v1717, 4
        %v1720 = vshll.u32 %v1699, 16
        %v1722 = vrot.slane %v1720, 5
        %v1723 = vor.u32 %v1719, %v1722
        %v1725 = vshrl.u32 %v1700, 16
        %v1727 = vrot.slane %v1725, 4
        %v1728 = vshll.u32 %v1700, 16
        %v1730 = vrot.slane %v1728, 5
        %v1731 = vor.u32 %v1727, %v1730
        %v1732 = vsel %vm1715, %v1723, %v1731
        %v1734 = vshrl.u32 %v1701, 16
        %v1736 = vrot.slane %v1734, 4
        %v1737 = vshll.u32 %v1701, 16
        %v1739 = vrot.slane %v1737, 5
        %v1740 = vor.u32 %v1736, %v1739
        %v1741 = vsel %vm1715, %v1731, %v1740
        %v1743 = vshrl.u32 %v1702, 16
        %v1745 = vrot.slane %v1743, 4
        %v1746 = vshll.u32 %v1702, 16
        %v1748 = vrot.slane %v1746, 5
        %v1749 = vor.u32 %v1745, %v1748
        %v1750 = vsel %vm1715, %v1740, %v1749
        %v1752 = vshrl.u32 %v1703, 16
        %v1754 = vrot.slane %v1752, 4
        %v1755 = vshll.u32 %v1703, 16
        %v1757 = vrot.slane %v1755, 5
        %v1758 = vor.u32 %v1754, %v1757
        %v1759 = vsel %vm1715, %v1749, %v1758
        %v1761 = vshrl.u32 %v1704, 16
        %v1763 = vrot.slane %v1761, 4
        %v1764 = vshll.u32 %v1704, 16
        %v1766 = vrot.slane %v1764, 5
        %v1767 = vor.u32 %v1763, %v1766
        %v1768 = vsel %vm1715, %v1758, %v1767
        %v1770 = vshrl.u32 %v1705, 16
        %v1772 = vrot.slane %v1770, 4
        %v1773 = vshll.u32 %v1705, 16
        %v1775 = vrot.slane %v1773, 5
        %v1776 = vor.u32 %v1772, %v1775
        %v1777 = vsel %vm1715, %v1767, %v1776
        %v1779 = vshrl.u32 %v1706, 16
        %v1781 = vrot.slane %v1779, 4
        %v1782 = vshll.u32 %v1706, 16
        %v1784 = vrot.slane %v1782, 5
        %v1785 = vor.u32 %v1781, %v1784
        %v1786 = vsel %vm1715, %v1776, %v1785
        %v1788 = vshrl.u32 %v1707, 16
        %v1790 = vrot.slane %v1788, 4
        %v1791 = vshll.u32 %v1707, 16
        %v1793 = vrot.slane %v1791, 5
        %v1794 = vor.u32 %v1790, %v1793
        %v1795 = vsel %vm1715, %v1785, %v1794
        %v1797 = vshrl.u32 %v1708, 16
        %v1799 = vrot.slane %v1797, 4
        %v1800 = vshll.u32 %v1708, 16
        %v1802 = vrot.slane %v1800, 5
        %v1803 = vor.u32 %v1799, %v1802
        %v1804 = vsel %vm1715, %v1794, %v1803
        %v1806 = vshrl.u32 %v1709, 16
        %v1808 = vrot.slane %v1806, 4
        %v1809 = vshll.u32 %v1709, 16
        %v1811 = vrot.slane %v1809, 5
        %v1812 = vor.u32 %v1808, %v1811
        %v1813 = vsel %vm1715, %v1803, %v1812
        %v1815 = vshrl.u32 %v1710, 16
        %v1817 = vrot.slane %v1815, 4
        %v1818 = vshll.u32 %v1710, 16
        %v1820 = vrot.slane %v1818, 5
        %v1821 = vor.u32 %v1817, %v1820
        %v1822 = vsel %vm1715, %v1812, %v1821
        %v1824 = vshrl.u32 %v1711, 16
        %v1826 = vrot.slane %v1824, 4
        %v1827 = vshll.u32 %v1711, 16
        %v1829 = vrot.slane %v1827, 5
        %v1830 = vor.u32 %v1826, %v1829
        %v1831 = vsel %vm1715, %v1821, %v1830
        %v1833 = vshrl.u32 %v1712, 16
        %v1835 = vrot.slane %v1833, 4
        %v1836 = vshll.u32 %v1712, 16
        %v1838 = vrot.slane %v1836, 5
        %v1839 = vor.u32 %v1835, %v1838
        %v1840 = vsel %vm1715, %v1830, %v1839
        %v1842 = vshrl.u32 %v1713, 16
        %v1844 = vrot.slane %v1842, 4
        %v1845 = vshll.u32 %v1713, 16
        %v1847 = vrot.slane %v1845, 5
        %v1848 = vor.u32 %v1844, %v1847
        %v1849 = vsel %vm1715, %v1839, %v1848
        %v1851 = vshrl.u32 %v1714, 16
        %v1853 = vrot.slane %v1851, 4
        %v1854 = vshll.u32 %v1714, 16
        %v1856 = vrot.slane %v1854, 5
        %v1857 = vor.u32 %v1853, %v1856
        %v1858 = vsel %vm1715, %v1848, %v1857
        %vm1859 = vcmp.ne.s16.totalorder %v1723, 0
        %vm1860 = vcmp.ne.s16.totalorder %v1732, 0
        %vm1861 = vcmp.ne.s16.totalorder %v1741, 0
        %vm1862 = vcmp.ne.s16.totalorder %v1750, 0
        %vm1863 = vcmp.ne.s16.totalorder %v1759, 0
        %vm1864 = vcmp.ne.s16.totalorder %v1768, 0
        %vm1865 = vcmp.ne.s16.totalorder %v1777, 0
        %vm1866 = vcmp.ne.s16.totalorder %v1786, 0
        %vm1867 = vcmp.ne.s16.totalorder %v1795, 0
        %vm1868 = vcmp.ne.s16.totalorder %v1804, 0
        %vm1869 = vcmp.ne.s16.totalorder %v1813, 0
        %vm1870 = vcmp.ne.s16.totalorder %v1822, 0
        %vm1871 = vcmp.ne.s16.totalorder %v1831, 0
        %vm1872 = vcmp.ne.s16.totalorder %v1840, 0
        %vm1873 = vcmp.ne.s16.totalorder %v1849, 0
        %vm1874 = vcmp.ne.s16.totalorder %v1858, 0
        %vm1875 = vcmp.ne.s16.totalorder %v1857, 0
        %v1876 = vsel %vm1859, %v1522, 0
        %v1877 = vsel %vm1860, %v1523, 0
        %v1878 = vsel %vm1861, %v1524, 0
        %v1879 = vsel %vm1862, %v1525, 0
        %v1880 = vsel %vm1863, %v1526, 0
        %v1881 = vsel %vm1864, %v1527, 0
        %v1882 = vsel %vm1865, %v1528, 0
        %v1883 = vsel %vm1866, %v1529, 0
        %v1884 = vsel %vm1867, %v1530, 0
        %v1885 = vsel %vm1868, %v1531, 0
        %v1886 = vsel %vm1869, %v1532, 0
        %v1887 = vsel %vm1870, %v1533, 0
        %v1888 = vsel %vm1871, %v1534, 0
        %v1889 = vsel %vm1872, %v1535, 0
        %v1890 = vsel %vm1873, %v1536, 0
        %v1891 = vsel %vm1874, %v1537, 0
        %v1892 = vsel %vm1875, %v1538, 0
        %v1893 = vld [vmem:[#allocation12] sm:$0xf]
        %v1894 = vld [vmem:[#allocation12 + $0x4] sm:$0xf]
        %v1895 = vld [vmem:[#allocation12 + $0x8] sm:$0xf]
        %v1896 = vld [vmem:[#allocation12 + $0xc] sm:$0xf]
        %v1897 = vld [vmem:[#allocation12 + $0x10] sm:$0xf]
        %v1898 = vld [vmem:[#allocation12 + $0x14] sm:$0xf]
        %v1899 = vld [vmem:[#allocation12 + $0x18] sm:$0xf]
        %v1900 = vld [vmem:[#allocation12 + $0x1c] sm:$0xf]
        %v1901 = vld [vmem:[#allocation12 + $0x20] sm:$0xf]
        %v1902 = vld [vmem:[#allocation12 + $0x24] sm:$0xf]
        %v1903 = vld [vmem:[#allocation12 + $0x28] sm:$0xf]
        %v1904 = vld [vmem:[#allocation12 + $0x2c] sm:$0xf]
        %v1905 = vld [vmem:[#allocation12 + $0x30] sm:$0xf]
        %v1906 = vld [vmem:[#allocation12 + $0x34] sm:$0xf]
        %v1907 = vld [vmem:[#allocation12 + $0x38] sm:$0xf]
        %v1908 = vld [vmem:[#allocation12 + $0x3c] sm:$0xf]
        %v1909 = vld [vmem:[#allocation2 + $0x8] sm:$0xf8]
        %v1910 = vld [vmem:[#allocation2 + $0x80] sm:$0xff]
        %v1911 = vld [vmem:[#allocation2 + $0x88] sm:$0xf]
        %v1912 = vsel %vm1859, %v1909, 0
        %v1913 = vsel %vm1860, %v1524, 0
        %v1914 = vsel %vm1861, %v1525, 0
        %v1915 = vsel %vm1862, %v1526, 0
        %v1916 = vsel %vm1863, %v1527, 0
        %v1917 = vsel %vm1864, %v1528, 0
        %v1918 = vsel %vm1865, %v1529, 0
        %v1919 = vsel %vm1866, %v1530, 0
        %v1920 = vsel %vm1867, %v1531, 0
        %v1921 = vsel %vm1868, %v1532, 0
        %v1922 = vsel %vm1869, %v1533, 0
        %v1923 = vsel %vm1870, %v1534, 0
        %v1924 = vsel %vm1871, %v1535, 0
        %v1925 = vsel %vm1872, %v1536, 0
        %v1926 = vsel %vm1873, %v1537, 0
        %v1927 = vsel %vm1874, %v1910, 0
        %v1928 = vsel %vm1875, %v1911, 0
        %s1929 = scalar_lea.vmem [#allocation12], 192
        %v1930 = vld [vmem:[%s1929] sm:$0xf]
        %v1931 = vld [vmem:[%s1929 + $0x4] sm:$0xf]
        %v1932 = vld [vmem:[%s1929 + $0x8] sm:$0xf]
        %v1933 = vld [vmem:[%s1929 + $0xc] sm:$0xf]
        %v1934 = vld [vmem:[%s1929 + $0x10] sm:$0xf]
        %v1935 = vld [vmem:[%s1929 + $0x14] sm:$0xf]
        %v1936 = vld [vmem:[%s1929 + $0x18] sm:$0xf]
        %v1937 = vld [vmem:[%s1929 + $0x1c] sm:$0xf]
        %v1938 = vld [vmem:[%s1929 + $0x20] sm:$0xf]
        %v1939 = vld [vmem:[%s1929 + $0x24] sm:$0xf]
        %v1940 = vld [vmem:[%s1929 + $0x28] sm:$0xf]
        %v1941 = vld [vmem:[%s1929 + $0x2c] sm:$0xf]
        %v1942 = vld [vmem:[%s1929 + $0x30] sm:$0xf]
        %v1943 = vld [vmem:[%s1929 + $0x34] sm:$0xf]
        %v1944 = vld [vmem:[%s1929 + $0x38] sm:$0xf]
        %v1945 = vld [vmem:[%s1929 + $0x3c] sm:$0xf]
        %vm1946 = vsmask.f32 4352
        %v1948 = vshrl.u32 %v1912, 16
        %v1950 = vrot.slane %v1948, 3
        %v1951 = vshll.u32 %v1912, 16
        %v1953 = vrot.slane %v1951, 4
        %v1954 = vor.u32 %v1950, %v1953
        %v1956 = vshrl.u32 %v1913, 16
        %v1958 = vrot.slane %v1956, 3
        %v1959 = vshll.u32 %v1913, 16
        %v1961 = vrot.slane %v1959, 4
        %v1962 = vor.u32 %v1958, %v1961
        %v1963 = vsel %vm1946, %v1954, %v1962
        %v1965 = vshrl.u32 %v1914, 16
        %v1967 = vrot.slane %v1965, 3
        %v1968 = vshll.u32 %v1914, 16
        %v1970 = vrot.slane %v1968, 4
        %v1971 = vor.u32 %v1967, %v1970
        %v1972 = vsel %vm1946, %v1962, %v1971
        %v1974 = vshrl.u32 %v1915, 16
        %v1976 = vrot.slane %v1974, 3
        %v1977 = vshll.u32 %v1915, 16
        %v1979 = vrot.slane %v1977, 4
        %v1980 = vor.u32 %v1976, %v1979
        %v1981 = vsel %vm1946, %v1971, %v1980
        %v1983 = vshrl.u32 %v1916, 16
        %v1985 = vrot.slane %v1983, 3
        %v1986 = vshll.u32 %v1916, 16
        %v1988 = vrot.slane %v1986, 4
        %v1989 = vor.u32 %v1985, %v1988
        %v1990 = vsel %vm1946, %v1980, %v1989
        %v1992 = vshrl.u32 %v1917, 16
        %v1994 = vrot.slane %v1992, 3
        %v1995 = vshll.u32 %v1917, 16
        %v1997 = vrot.slane %v1995, 4
        %v1998 = vor.u32 %v1994, %v1997
        %v1999 = vsel %vm1946, %v1989, %v1998
        %v2001 = vshrl.u32 %v1918, 16
        %v2003 = vrot.slane %v2001, 3
        %v2004 = vshll.u32 %v1918, 16
        %v2006 = vrot.slane %v2004, 4
        %v2007 = vor.u32 %v2003, %v2006
        %v2008 = vsel %vm1946, %v1998, %v2007
        %v2010 = vshrl.u32 %v1919, 16
        %v2012 = vrot.slane %v2010, 3
        %v2013 = vshll.u32 %v1919, 16
        %v2015 = vrot.slane %v2013, 4
        %v2016 = vor.u32 %v2012, %v2015
        %v2017 = vsel %vm1946, %v2007, %v2016
        %v2019 = vshrl.u32 %v1920, 16
        %v2021 = vrot.slane %v2019, 3
        %v2022 = vshll.u32 %v1920, 16
        %v2024 = vrot.slane %v2022, 4
        %v2025 = vor.u32 %v2021, %v2024
        %v2026 = vsel %vm1946, %v2016, %v2025
        %v2028 = vshrl.u32 %v1921, 16
        %v2030 = vrot.slane %v2028, 3
        %v2031 = vshll.u32 %v1921, 16
        %v2033 = vrot.slane %v2031, 4
        %v2034 = vor.u32 %v2030, %v2033
        %v2035 = vsel %vm1946, %v2025, %v2034
        %v2037 = vshrl.u32 %v1922, 16
        %v2039 = vrot.slane %v2037, 3
        %v2040 = vshll.u32 %v1922, 16
        %v2042 = vrot.slane %v2040, 4
        %v2043 = vor.u32 %v2039, %v2042
        %v2044 = vsel %vm1946, %v2034, %v2043
        %v2046 = vshrl.u32 %v1923, 16
        %v2048 = vrot.slane %v2046, 3
        %v2049 = vshll.u32 %v1923, 16
        %v2051 = vrot.slane %v2049, 4
        %v2052 = vor.u32 %v2048, %v2051
        %v2053 = vsel %vm1946, %v2043, %v2052
        %v2055 = vshrl.u32 %v1924, 16
        %v2057 = vrot.slane %v2055, 3
        %v2058 = vshll.u32 %v1924, 16
        %v2060 = vrot.slane %v2058, 4
        %v2061 = vor.u32 %v2057, %v2060
        %v2062 = vsel %vm1946, %v2052, %v2061
        %v2064 = vshrl.u32 %v1925, 16
        %v2066 = vrot.slane %v2064, 3
        %v2067 = vshll.u32 %v1925, 16
        %v2069 = vrot.slane %v2067, 4
        %v2070 = vor.u32 %v2066, %v2069
        %v2071 = vsel %vm1946, %v2061, %v2070
        %v2073 = vshrl.u32 %v1926, 16
        %v2075 = vrot.slane %v2073, 3
        %v2076 = vshll.u32 %v1926, 16
        %v2078 = vrot.slane %v2076, 4
        %v2079 = vor.u32 %v2075, %v2078
        %v2080 = vsel %vm1946, %v2070, %v2079
        %v2082 = vshrl.u32 %v1927, 16
        %v2084 = vrot.slane %v2082, 3
        %v2085 = vshll.u32 %v1927, 16
        %v2087 = vrot.slane %v2085, 4
        %v2088 = vor.u32 %v2084, %v2087
        %v2089 = vsel %vm1946, %v2079, %v2088
        %v2091 = vshrl.u32 %v1928, 16
        %v2093 = vrot.slane %v2091, 3
        %v2094 = vshll.u32 %v1928, 16
        %v2096 = vrot.slane %v2094, 4
        %v2097 = vor.u32 %v2093, %v2096
        %v2098 = vsel %vm1946, %v2088, %v2097
        %v2131 = vunpack.c.l.b16 %v1930
        %v2132 = vunpack.c.l.b16 %v1931
        %v2133 = vunpack.c.l.b16 %v1932
        %v2134 = vunpack.c.l.b16 %v1933
        %v2135 = vunpack.c.l.b16 %v1934
        %v2136 = vunpack.c.l.b16 %v1935
        %v2137 = vunpack.c.l.b16 %v1936
        %v2138 = vunpack.c.l.b16 %v1937
        %v2139 = vunpack.c.l.b16 %v1938
        %v2140 = vunpack.c.l.b16 %v1939
        %v2141 = vunpack.c.l.b16 %v1940
        %v2142 = vunpack.c.l.b16 %v1941
        %v2143 = vunpack.c.l.b16 %v1942
        %v2144 = vunpack.c.l.b16 %v1943
        %v2145 = vunpack.c.l.b16 %v1944
        %v2146 = vunpack.c.l.b16 %v1945
        %v2147 = vpack.c.b16 %v2132, %v2131
        %v2148 = vpack.c.b16 %v2134, %v2133
        %v2149 = vpack.c.b16 %v2136, %v2135
        %v2150 = vpack.c.b16 %v2138, %v2137
        %v2151 = vpack.c.b16 %v2140, %v2139
        %v2152 = vpack.c.b16 %v2142, %v2141
        %v2153 = vpack.c.b16 %v2144, %v2143
        %v2154 = vpack.c.b16 %v2146, %v2145
        %2163 = vmatprep.subr.bf16.mxu0 0
        %2164 = vmatpush1.bf16.msra.mxu0 %v2147
        %2165 = vmatprep.subr.bf16.mxu0 0
        %2166 = vmatpush1.bf16.msra.mxu0 %v2148
        %2167 = vmatprep.subr.bf16.mxu0 0
        %2168 = vmatpush1.bf16.msra.mxu0 %v2149
        %2169 = vmatprep.subr.bf16.mxu0 0
        %2170 = vmatpush1.bf16.msra.mxu0 %v2150
        %2171 = vmatprep.subr.bf16.mxu0 0
        %2172 = vmatpush1.bf16.msra.mxu0 %v2151
        %2173 = vmatprep.subr.bf16.mxu0 0
        %2174 = vmatpush1.bf16.msra.mxu0 %v2152
        %2175 = vmatprep.subr.bf16.mxu0 0
        %2176 = vmatpush1.bf16.msra.mxu0 %v2153
        %2177 = vmatprep.subr.bf16.mxu0 0
        %2178 = vmatpush1.bf16.msra.mxu0 %v2154
        %2179 = vmatprep.subr.bf16.mxu0 0
        %2180 = vmatpush1.bf16.msra.mxu0 0
        %2181 = vmatprep.subr.bf16.mxu0 0
        %2182 = vmatpush1.bf16.msra.mxu0 0
        %2183 = vmatprep.subr.bf16.mxu0 0
        %2184 = vmatpush1.bf16.msra.mxu0 0
        %2185 = vmatprep.subr.bf16.mxu0 0
        %2186 = vmatpush1.bf16.msra.mxu0 0
        %2187 = vmatprep.subr.bf16.mxu0 0
        %2188 = vmatpush1.bf16.msra.mxu0 0
        %2189 = vmatprep.subr.bf16.mxu0 0
        %2190 = vmatpush1.bf16.msra.mxu0 0
        %2191 = vmatprep.subr.bf16.mxu0 0
        %2192 = vmatpush1.bf16.msra.mxu0 0
        %2193 = vmatprep.subr.bf16.mxu0 0
        %2194 = vmatpush1.bf16.msra.mxu0 0
        %2195 = vmatprep.mubr.bf16.mxu0 0
        %2196 = vmatmul.mubr.bf16.gmra.mrb[0].mxu0 %v1963
        %v2197 = vpop.f32.mrb[0].mxu0
        %v2198 = vadd.f32 0.0, %v2197
        %v2199 = vpop.f32.mrb[0].mxu0
        %v2200 = vpop.f32.mrb[0].mxu0
        %v2201 = vadd.f32 0.0, %v2200
        %v2202 = vpop.f32.mrb[0].mxu0
        %2203 = vmatprep.mubr.bf16.mxu0 0
        %2204 = vmatmul.mubr.bf16.gmra.mrb[0].mxu0 %v1972
        %v2205 = vpop.f32.mrb[0].mxu0
        %v2206 = vadd.f32 0.0, %v2205
        %v2207 = vpop.f32.mrb[0].mxu0
        %v2208 = vpop.f32.mrb[0].mxu0
        %v2209 = vadd.f32 0.0, %v2208
        %v2210 = vpop.f32.mrb[0].mxu0
        %2211 = vmatprep.mubr.bf16.mxu0 0
        %2212 = vmatmul.mubr.bf16.gmra.mrb[0].mxu0 %v1981
        %v2213 = vpop.f32.mrb[0].mxu0
        %v2214 = vadd.f32 0.0, %v2213
        %v2215 = vpop.f32.mrb[0].mxu0
        %v2216 = vpop.f32.mrb[0].mxu0
        %v2217 = vadd.f32 0.0, %v2216
        %v2218 = vpop.f32.mrb[0].mxu0
        %2219 = vmatprep.mubr.bf16.mxu0 0
        %2220 = vmatmul.mubr.bf16.gmra.mrb[0].mxu0 %v1990
        %v2221 = vpop.f32.mrb[0].mxu0
        %v2222 = vadd.f32 0.0, %v2221
        %v2223 = vpop.f32.mrb[0].mxu0
        %v2224 = vpop.f32.mrb[0].mxu0
        %v2225 = vadd.f32 0.0, %v2224
        %v2226 = vpop.f32.mrb[0].mxu0
        %2227 = vmatprep.mubr.bf16.mxu0 0
        %2228 = vmatmul.mubr.bf16.gmra.mrb[0].mxu0 %v1999
        %v2229 = vpop.f32.mrb[0].mxu0
        %v2230 = vadd.f32 0.0, %v2229
        %v2231 = vpop.f32.mrb[0].mxu0
        %v2232 = vpop.f32.mrb[0].mxu0
        %v2233 = vadd.f32 0.0, %v2232
        %v2234 = vpop.f32.mrb[0].mxu0
        %2235 = vmatprep.mubr.bf16.mxu0 0
        %2236 = vmatmul.mubr.bf16.gmra.mrb[0].mxu0 %v2008
        %v2237 = vpop.f32.mrb[0].mxu0
        %v2238 = vadd.f32 0.0, %v2237
        %v2239 = vpop.f32.mrb[0].mxu0
        %v2240 = vpop.f32.mrb[0].mxu0
        %v2241 = vadd.f32 0.0, %v2240
        %v2242 = vpop.f32.mrb[0].mxu0
        %2243 = vmatprep.mubr.bf16.mxu0 0
        %2244 = vmatmul.mubr.bf16.gmra.mrb[0].mxu0 %v2017
        %v2245 = vpop.f32.mrb[0].mxu0
        %v2246 = vadd.f32 0.0, %v2245
        %v2247 = vpop.f32.mrb[0].mxu0
        %v2248 = vpop.f32.mrb[0].mxu0
        %v2249 = vadd.f32 0.0, %v2248
        %v2250 = vpop.f32.mrb[0].mxu0
        %2251 = vmatprep.mubr.bf16.mxu0 0
        %2252 = vmatmul.mubr.bf16.gmra.mrb[0].mxu0 %v2026
        %v2253 = vpop.f32.mrb[0].mxu0
        %v2254 = vadd.f32 0.0, %v2253
        %v2255 = vpop.f32.mrb[0].mxu0
        %v2256 = vpop.f32.mrb[0].mxu0
        %v2257 = vadd.f32 0.0, %v2256
        %v2258 = vpop.f32.mrb[0].mxu0
        %2259 = vmatprep.mubr.bf16.mxu0 0
        %2260 = vmatmul.mubr.bf16.gmra.mrb[0].mxu0 %v2035
        %v2261 = vpop.f32.mrb[0].mxu0
        %v2262 = vadd.f32 0.0, %v2261
        %v2263 = vpop.f32.mrb[0].mxu0
        %v2264 = vpop.f32.mrb[0].mxu0
        %v2265 = vadd.f32 0.0, %v2264
        %v2266 = vpop.f32.mrb[0].mxu0
        %2267 = vmatprep.mubr.bf16.mxu0 0
        %2268 = vmatmul.mubr.bf16.gmra.mrb[0].mxu0 %v2044
        %v2269 = vpop.f32.mrb[0].mxu0
        %v2270 = vadd.f32 0.0, %v2269
        %v2271 = vpop.f32.mrb[0].mxu0
        %v2272 = vpop.f32.mrb[0].mxu0
        %v2273 = vadd.f32 0.0, %v2272
        %v2274 = vpop.f32.mrb[0].mxu0
        %2275 = vmatprep.mubr.bf16.mxu0 0
        %2276 = vmatmul.mubr.bf16.gmra.mrb[0].mxu0 %v2053
        %v2277 = vpop.f32.mrb[0].mxu0
        %v2278 = vadd.f32 0.0, %v2277
        %v2279 = vpop.f32.mrb[0].mxu0
        %v2280 = vpop.f32.mrb[0].mxu0
        %v2281 = vadd.f32 0.0, %v2280
        %v2282 = vpop.f32.mrb[0].mxu0
        %2283 = vmatprep.mubr.bf16.mxu0 0
        %2284 = vmatmul.mubr.bf16.gmra.mrb[0].mxu0 %v2062
        %v2285 = vpop.f32.mrb[0].mxu0
        %v2286 = vadd.f32 0.0, %v2285
        %v2287 = vpop.f32.mrb[0].mxu0
        %v2288 = vpop.f32.mrb[0].mxu0
        %v2289 = vadd.f32 0.0, %v2288
        %v2290 = vpop.f32.mrb[0].mxu0
        %2291 = vmatprep.mubr.bf16.mxu0 0
        %2292 = vmatmul.mubr.bf16.gmra.mrb[0].mxu0 %v2071
        %v2293 = vpop.f32.mrb[0].mxu0
        %v2294 = vadd.f32 0.0, %v2293
        %v2295 = vpop.f32.mrb[0].mxu0
        %v2296 = vpop.f32.mrb[0].mxu0
        %v2297 = vadd.f32 0.0, %v2296
        %v2298 = vpop.f32.mrb[0].mxu0
        %2299 = vmatprep.mubr.bf16.mxu0 0
        %2300 = vmatmul.mubr.bf16.gmra.mrb[0].mxu0 %v2080
        %v2301 = vpop.f32.mrb[0].mxu0
        %v2302 = vadd.f32 0.0, %v2301
        %v2303 = vpop.f32.mrb[0].mxu0
        %v2304 = vpop.f32.mrb[0].mxu0
        %v2305 = vadd.f32 0.0, %v2304
        %v2306 = vpop.f32.mrb[0].mxu0
        %2307 = vmatprep.mubr.bf16.mxu0 0
        %2308 = vmatmul.mubr.bf16.gmra.mrb[0].mxu0 %v2089
        %v2309 = vpop.f32.mrb[0].mxu0
        %v2310 = vadd.f32 0.0, %v2309
        %v2311 = vpop.f32.mrb[0].mxu0
        %v2312 = vpop.f32.mrb[0].mxu0
        %v2313 = vadd.f32 0.0, %v2312
        %v2314 = vpop.f32.mrb[0].mxu0
        %2315 = vmatprep.mubr.bf16.mxu0 0
        %2316 = vmatmul.mubr.bf16.gmra.mrb[0].mxu0 %v2098
        %v2317 = vpop.f32.mrb[0].mxu0
        %v2318 = vadd.f32 0.0, %v2317
        %v2319 = vpop.f32.mrb[0].mxu0
        %v2320 = vpop.f32.mrb[0].mxu0
        %v2321 = vadd.f32 0.0, %v2320
        %v2322 = vpop.f32.mrb[0].mxu0
        %2323 = vdwg.mxu0
        %v2325 = vshrl.u32 %v1876, 16
        %v2327 = vrot.slane %v2325, 3
        %v2328 = vshll.u32 %v1876, 16
        %v2330 = vrot.slane %v2328, 4
        %v2331 = vor.u32 %v2327, %v2330
        %v2333 = vshrl.u32 %v1877, 16
        %v2335 = vrot.slane %v2333, 3
        %v2336 = vshll.u32 %v1877, 16
        %v2338 = vrot.slane %v2336, 4
        %v2339 = vor.u32 %v2335, %v2338
        %v2340 = vsel %vm1946, %v2331, %v2339
        %v2342 = vshrl.u32 %v1878, 16
        %v2344 = vrot.slane %v2342, 3
        %v2345 = vshll.u32 %v1878, 16
        %v2347 = vrot.slane %v2345, 4
        %v2348 = vor.u32 %v2344, %v2347
        %v2349 = vsel %vm1946, %v2339, %v2348
        %v2351 = vshrl.u32 %v1879, 16
        %v2353 = vrot.slane %v2351, 3
        %v2354 = vshll.u32 %v1879, 16
        %v2356 = vrot.slane %v2354, 4
        %v2357 = vor.u32 %v2353, %v2356
        %v2358 = vsel %vm1946, %v2348, %v2357
        %v2360 = vshrl.u32 %v1880, 16
        %v2362 = vrot.slane %v2360, 3
        %v2363 = vshll.u32 %v1880, 16
        %v2365 = vrot.slane %v2363, 4
        %v2366 = vor.u32 %v2362, %v2365
        %v2367 = vsel %vm1946, %v2357, %v2366
        %v2369 = vshrl.u32 %v1881, 16
        %v2371 = vrot.slane %v2369, 3
        %v2372 = vshll.u32 %v1881, 16
        %v2374 = vrot.slane %v2372, 4
        %v2375 = vor.u32 %v2371, %v2374
        %v2376 = vsel %vm1946, %v2366, %v2375
        %v2378 = vshrl.u32 %v1882, 16
        %v2380 = vrot.slane %v2378, 3
        %v2381 = vshll.u32 %v1882, 16
        %v2383 = vrot.slane %v2381, 4
        %v2384 = vor.u32 %v2380, %v2383
        %v2385 = vsel %vm1946, %v2375, %v2384
        %v2387 = vshrl.u32 %v1883, 16
        %v2389 = vrot.slane %v2387, 3
        %v2390 = vshll.u32 %v1883, 16
        %v2392 = vrot.slane %v2390, 4
        %v2393 = vor.u32 %v2389, %v2392
        %v2394 = vsel %vm1946, %v2384, %v2393
        %v2396 = vshrl.u32 %v1884, 16
        %v2398 = vrot.slane %v2396, 3
        %v2399 = vshll.u32 %v1884, 16
        %v2401 = vrot.slane %v2399, 4
        %v2402 = vor.u32 %v2398, %v2401
        %v2403 = vsel %vm1946, %v2393, %v2402
        %v2405 = vshrl.u32 %v1885, 16
        %v2407 = vrot.slane %v2405, 3
        %v2408 = vshll.u32 %v1885, 16
        %v2410 = vrot.slane %v2408, 4
        %v2411 = vor.u32 %v2407, %v2410
        %v2412 = vsel %vm1946, %v2402, %v2411
        %v2414 = vshrl.u32 %v1886, 16
        %v2416 = vrot.slane %v2414, 3
        %v2417 = vshll.u32 %v1886, 16
        %v2419 = vrot.slane %v2417, 4
        %v2420 = vor.u32 %v2416, %v2419
        %v2421 = vsel %vm1946, %v2411, %v2420
        %v2423 = vshrl.u32 %v1887, 16
        %v2425 = vrot.slane %v2423, 3
        %v2426 = vshll.u32 %v1887, 16
        %v2428 = vrot.slane %v2426, 4
        %v2429 = vor.u32 %v2425, %v2428
        %v2430 = vsel %vm1946, %v2420, %v2429
        %v2432 = vshrl.u32 %v1888, 16
        %v2434 = vrot.slane %v2432, 3
        %v2435 = vshll.u32 %v1888, 16
        %v2437 = vrot.slane %v2435, 4
        %v2438 = vor.u32 %v2434, %v2437
        %v2439 = vsel %vm1946, %v2429, %v2438
        %v2441 = vshrl.u32 %v1889, 16
        %v2443 = vrot.slane %v2441, 3
        %v2444 = vshll.u32 %v1889, 16
        %v2446 = vrot.slane %v2444, 4
        %v2447 = vor.u32 %v2443, %v2446
        %v2448 = vsel %vm1946, %v2438, %v2447
        %v2450 = vshrl.u32 %v1890, 16
        %v2452 = vrot.slane %v2450, 3
        %v2453 = vshll.u32 %v1890, 16
        %v2455 = vrot.slane %v2453, 4
        %v2456 = vor.u32 %v2452, %v2455
        %v2457 = vsel %vm1946, %v2447, %v2456
        %v2459 = vshrl.u32 %v1891, 16
        %v2461 = vrot.slane %v2459, 3
        %v2462 = vshll.u32 %v1891, 16
        %v2464 = vrot.slane %v2462, 4
        %v2465 = vor.u32 %v2461, %v2464
        %v2466 = vsel %vm1946, %v2456, %v2465
        %v2468 = vshrl.u32 %v1892, 16
        %v2470 = vrot.slane %v2468, 3
        %v2471 = vshll.u32 %v1892, 16
        %v2473 = vrot.slane %v2471, 4
        %v2474 = vor.u32 %v2470, %v2473
        %v2475 = vsel %vm1946, %v2465, %v2474
        %v2508 = vunpack.c.l.b16 %v1893
        %v2509 = vunpack.c.l.b16 %v1894
        %v2510 = vunpack.c.l.b16 %v1895
        %v2511 = vunpack.c.l.b16 %v1896
        %v2512 = vunpack.c.l.b16 %v1897
        %v2513 = vunpack.c.l.b16 %v1898
        %v2514 = vunpack.c.l.b16 %v1899
        %v2515 = vunpack.c.l.b16 %v1900
        %v2516 = vunpack.c.l.b16 %v1901
        %v2517 = vunpack.c.l.b16 %v1902
        %v2518 = vunpack.c.l.b16 %v1903
        %v2519 = vunpack.c.l.b16 %v1904
        %v2520 = vunpack.c.l.b16 %v1905
        %v2521 = vunpack.c.l.b16 %v1906
        %v2522 = vunpack.c.l.b16 %v1907
        %v2523 = vunpack.c.l.b16 %v1908
        %v2524 = vpack.c.b16 %v2509, %v2508
        %v2525 = vpack.c.b16 %v2511, %v2510
        %v2526 = vpack.c.b16 %v2513, %v2512
        %v2527 = vpack.c.b16 %v2515, %v2514
        %v2528 = vpack.c.b16 %v2517, %v2516
        %v2529 = vpack.c.b16 %v2519, %v2518
        %v2530 = vpack.c.b16 %v2521, %v2520
        %v2531 = vpack.c.b16 %v2523, %v2522
        %2540 = vmatprep.subr.bf16.mxu0 0
        %2541 = vmatpush1.bf16.msra.mxu0 %v2524
        %2542 = vmatprep.subr.bf16.mxu0 0
        %2543 = vmatpush1.bf16.msra.mxu0 %v2525
        %2544 = vmatprep.subr.bf16.mxu0 0
        %2545 = vmatpush1.bf16.msra.mxu0 %v2526
        %2546 = vmatprep.subr.bf16.mxu0 0
        %2547 = vmatpush1.bf16.msra.mxu0 %v2527
        %2548 = vmatprep.subr.bf16.mxu0 0
        %2549 = vmatpush1.bf16.msra.mxu0 %v2528
        %2550 = vmatprep.subr.bf16.mxu0 0
        %2551 = vmatpush1.bf16.msra.mxu0 %v2529
        %2552 = vmatprep.subr.bf16.mxu0 0
        %2553 = vmatpush1.bf16.msra.mxu0 %v2530
        %2554 = vmatprep.subr.bf16.mxu0 0
        %2555 = vmatpush1.bf16.msra.mxu0 %v2531
        %2556 = vmatprep.subr.bf16.mxu0 0
        %2557 = vmatpush1.bf16.msra.mxu0 0
        %2558 = vmatprep.subr.bf16.mxu0 0
        %2559 = vmatpush1.bf16.msra.mxu0 0
        %2560 = vmatprep.subr.bf16.mxu0 0
        %2561 = vmatpush1.bf16.msra.mxu0 0
        %2562 = vmatprep.subr.bf16.mxu0 0
        %2563 = vmatpush1.bf16.msra.mxu0 0
        %2564 = vmatprep.subr.bf16.mxu0 0
        %2565 = vmatpush1.bf16.msra.mxu0 0
        %2566 = vmatprep.subr.bf16.mxu0 0
        %2567 = vmatpush1.bf16.msra.mxu0 0
        %2568 = vmatprep.subr.bf16.mxu0 0
        %2569 = vmatpush1.bf16.msra.mxu0 0
        %2570 = vmatprep.subr.bf16.mxu0 0
        %2571 = vmatpush1.bf16.msra.mxu0 0
        %2572 = vmatprep.mubr.bf16.mxu0 0
        %2573 = vmatmul.mubr.bf16.gmra.mrb[0].mxu0 %v2340
        %v2574 = vpop.f32.mrb[0].mxu0
        %v2575 = vadd.f32 %v2198, %v2574
        %v2576 = vpop.f32.mrb[0].mxu0
        %v2577 = vpop.f32.mrb[0].mxu0
        %v2578 = vadd.f32 %v2201, %v2577
        %v2579 = vpop.f32.mrb[0].mxu0
        %2580 = vmatprep.mubr.bf16.mxu0 0
        %2581 = vmatmul.mubr.bf16.gmra.mrb[0].mxu0 %v2349
        %v2582 = vpop.f32.mrb[0].mxu0
        %v2583 = vadd.f32 %v2206, %v2582
        %v2584 = vpop.f32.mrb[0].mxu0
        %v2585 = vpop.f32.mrb[0].mxu0
        %v2586 = vadd.f32 %v2209, %v2585
        %v2587 = vpop.f32.mrb[0].mxu0
        %2588 = vmatprep.mubr.bf16.mxu0 0
        %2589 = vmatmul.mubr.bf16.gmra.mrb[0].mxu0 %v2358
        %v2590 = vpop.f32.mrb[0].mxu0
        %v2591 = vadd.f32 %v2214, %v2590
        %v2592 = vpop.f32.mrb[0].mxu0
        %v2593 = vpop.f32.mrb[0].mxu0
        %v2594 = vadd.f32 %v2217, %v2593
        %v2595 = vpop.f32.mrb[0].mxu0
        %2596 = vmatprep.mubr.bf16.mxu0 0
        %2597 = vmatmul.mubr.bf16.gmra.mrb[0].mxu0 %v2367
        %v2598 = vpop.f32.mrb[0].mxu0
        %v2599 = vadd.f32 %v2222, %v2598
        %v2600 = vpop.f32.mrb[0].mxu0
        %v2601 = vpop.f32.mrb[0].mxu0
        %v2602 = vadd.f32 %v2225, %v2601
        %v2603 = vpop.f32.mrb[0].mxu0
        %2604 = vmatprep.mubr.bf16.mxu0 0
        %2605 = vmatmul.mubr.bf16.gmra.mrb[0].mxu0 %v2376
        %v2606 = vpop.f32.mrb[0].mxu0
        %v2607 = vadd.f32 %v2230, %v2606
        %v2608 = vpop.f32.mrb[0].mxu0
        %v2609 = vpop.f32.mrb[0].mxu0
        %v2610 = vadd.f32 %v2233, %v2609
        %v2611 = vpop.f32.mrb[0].mxu0
        %2612 = vmatprep.mubr.bf16.mxu0 0
        %2613 = vmatmul.mubr.bf16.gmra.mrb[0].mxu0 %v2385
        %v2614 = vpop.f32.mrb[0].mxu0
        %v2615 = vadd.f32 %v2238, %v2614
        %v2616 = vpop.f32.mrb[0].mxu0
        %v2617 = vpop.f32.mrb[0].mxu0
        %v2618 = vadd.f32 %v2241, %v2617
        %v2619 = vpop.f32.mrb[0].mxu0
        %2620 = vmatprep.mubr.bf16.mxu0 0
        %2621 = vmatmul.mubr.bf16.gmra.mrb[0].mxu0 %v2394
        %v2622 = vpop.f32.mrb[0].mxu0
        %v2623 = vadd.f32 %v2246, %v2622
        %v2624 = vpop.f32.mrb[0].mxu0
        %v2625 = vpop.f32.mrb[0].mxu0
        %v2626 = vadd.f32 %v2249, %v2625
        %v2627 = vpop.f32.mrb[0].mxu0
        %2628 = vmatprep.mubr.bf16.mxu0 0
        %2629 = vmatmul.mubr.bf16.gmra.mrb[0].mxu0 %v2403
        %v2630 = vpop.f32.mrb[0].mxu0
        %v2631 = vadd.f32 %v2254, %v2630
        %v2632 = vpop.f32.mrb[0].mxu0
        %v2633 = vpop.f32.mrb[0].mxu0
        %v2634 = vadd.f32 %v2257, %v2633
        %v2635 = vpop.f32.mrb[0].mxu0
        %2636 = vmatprep.mubr.bf16.mxu0 0
        %2637 = vmatmul.mubr.bf16.gmra.mrb[0].mxu0 %v2412
        %v2638 = vpop.f32.mrb[0].mxu0
        %v2639 = vadd.f32 %v2262, %v2638
        %v2640 = vpop.f32.mrb[0].mxu0
        %v2641 = vpop.f32.mrb[0].mxu0
        %v2642 = vadd.f32 %v2265, %v2641
        %v2643 = vpop.f32.mrb[0].mxu0
        %2644 = vmatprep.mubr.bf16.mxu0 0
        %2645 = vmatmul.mubr.bf16.gmra.mrb[0].mxu0 %v2421
        %v2646 = vpop.f32.mrb[0].mxu0
        %v2647 = vadd.f32 %v2270, %v2646
        %v2648 = vpop.f32.mrb[0].mxu0
        %v2649 = vpop.f32.mrb[0].mxu0
        %v2650 = vadd.f32 %v2273, %v2649
        %v2651 = vpop.f32.mrb[0].mxu0
        %2652 = vmatprep.mubr.bf16.mxu0 0
        %2653 = vmatmul.mubr.bf16.gmra.mrb[0].mxu0 %v2430
        %v2654 = vpop.f32.mrb[0].mxu0
        %v2655 = vadd.f32 %v2278, %v2654
        %v2656 = vpop.f32.mrb[0].mxu0
        %v2657 = vpop.f32.mrb[0].mxu0
        %v2658 = vadd.f32 %v2281, %v2657
        %v2659 = vpop.f32.mrb[0].mxu0
        %2660 = vmatprep.mubr.bf16.mxu0 0
        %2661 = vmatmul.mubr.bf16.gmra.mrb[0].mxu0 %v2439
        %v2662 = vpop.f32.mrb[0].mxu0
        %v2663 = vadd.f32 %v2286, %v2662
        %v2664 = vpop.f32.mrb[0].mxu0
        %v2665 = vpop.f32.mrb[0].mxu0
        %v2666 = vadd.f32 %v2289, %v2665
        %v2667 = vpop.f32.mrb[0].mxu0
        %2668 = vmatprep.mubr.bf16.mxu0 0
        %2669 = vmatmul.mubr.bf16.gmra.mrb[0].mxu0 %v2448
        %v2670 = vpop.f32.mrb[0].mxu0
        %v2671 = vadd.f32 %v2294, %v2670
        %v2672 = vpop.f32.mrb[0].mxu0
        %v2673 = vpop.f32.mrb[0].mxu0
        %v2674 = vadd.f32 %v2297, %v2673
        %v2675 = vpop.f32.mrb[0].mxu0
        %2676 = vmatprep.mubr.bf16.mxu0 0
        %2677 = vmatmul.mubr.bf16.gmra.mrb[0].mxu0 %v2457
        %v2678 = vpop.f32.mrb[0].mxu0
        %v2679 = vadd.f32 %v2302, %v2678
        %v2680 = vpop.f32.mrb[0].mxu0
        %v2681 = vpop.f32.mrb[0].mxu0
        %v2682 = vadd.f32 %v2305, %v2681
        %v2683 = vpop.f32.mrb[0].mxu0
        %2684 = vmatprep.mubr.bf16.mxu0 0
        %2685 = vmatmul.mubr.bf16.gmra.mrb[0].mxu0 %v2466
        %v2686 = vpop.f32.mrb[0].mxu0
        %v2687 = vadd.f32 %v2310, %v2686
        %v2688 = vpop.f32.mrb[0].mxu0
        %v2689 = vpop.f32.mrb[0].mxu0
        %v2690 = vadd.f32 %v2313, %v2689
        %v2691 = vpop.f32.mrb[0].mxu0
        %2692 = vmatprep.mubr.bf16.mxu0 0
        %2693 = vmatmul.mubr.bf16.gmra.mrb[0].mxu0 %v2475
        %v2694 = vpop.f32.mrb[0].mxu0
        %v2695 = vadd.f32 %v2318, %v2694
        %v2696 = vpop.f32.mrb[0].mxu0
        %v2697 = vpop.f32.mrb[0].mxu0
        %v2698 = vadd.f32 %v2321, %v2697
        %v2699 = vpop.f32.mrb[0].mxu0
        %2700 = vdwg.mxu0
        %v2701 = vld [vmem:[#allocation2 + $0x10] sm:$0xf8]
        %v2702 = vld [vmem:[#allocation2 + $0x18] sm:$0xff]
        %v2703 = vld [vmem:[#allocation2 + $0x20] sm:$0xff]
        %v2704 = vld [vmem:[#allocation2 + $0x28] sm:$0xff]
        %v2705 = vld [vmem:[#allocation2 + $0x30] sm:$0xff]
        %v2706 = vld [vmem:[#allocation2 + $0x38] sm:$0xff]
        %v2707 = vld [vmem:[#allocation2 + $0x40] sm:$0xff]
        %v2708 = vld [vmem:[#allocation2 + $0x48] sm:$0xff]
        %v2709 = vld [vmem:[#allocation2 + $0x50] sm:$0xff]
        %v2710 = vld [vmem:[#allocation2 + $0x58] sm:$0xff]
        %v2711 = vld [vmem:[#allocation2 + $0x60] sm:$0xff]
        %v2712 = vld [vmem:[#allocation2 + $0x68] sm:$0xff]
        %v2713 = vld [vmem:[#allocation2 + $0x70] sm:$0xff]
        %v2714 = vld [vmem:[#allocation2 + $0x78] sm:$0xff]
        %v2715 = vld [vmem:[#allocation2 + $0x80] sm:$0xff]
        %v2716 = vld [vmem:[#allocation2 + $0x88] sm:$0xff]
        %v2717 = vld [vmem:[#allocation2 + $0x90] sm:$0xf]
        %v2718 = vsel %vm1859, %v2701, 0
        %v2719 = vsel %vm1860, %v2702, 0
        %v2720 = vsel %vm1861, %v2703, 0
        %v2721 = vsel %vm1862, %v2704, 0
        %v2722 = vsel %vm1863, %v2705, 0
        %v2723 = vsel %vm1864, %v2706, 0
        %v2724 = vsel %vm1865, %v2707, 0
        %v2725 = vsel %vm1866, %v2708, 0
        %v2726 = vsel %vm1867, %v2709, 0
        %v2727 = vsel %vm1868, %v2710, 0
        %v2728 = vsel %vm1869, %v2711, 0
        %v2729 = vsel %vm1870, %v2712, 0
        %v2730 = vsel %vm1871, %v2713, 0
        %v2731 = vsel %vm1872, %v2714, 0
        %v2732 = vsel %vm1873, %v2715, 0
        %v2733 = vsel %vm1874, %v2716, 0
        %v2734 = vsel %vm1875, %v2717, 0
        %s2735 = scalar_lea.vmem [#allocation12], 384
        %v2736 = vld [vmem:[%s2735] sm:$0xf]
        %v2737 = vld [vmem:[%s2735 + $0x4] sm:$0xf]
        %v2738 = vld [vmem:[%s2735 + $0x8] sm:$0xf]
        %v2739 = vld [vmem:[%s2735 + $0xc] sm:$0xf]
        %v2740 = vld [vmem:[%s2735 + $0x10] sm:$0xf]
        %v2741 = vld [vmem:[%s2735 + $0x14] sm:$0xf]
        %v2742 = vld [vmem:[%s2735 + $0x18] sm:$0xf]
        %v2743 = vld [vmem:[%s2735 + $0x1c] sm:$0xf]
        %v2744 = vld [vmem:[%s2735 + $0x20] sm:$0xf]
        %v2745 = vld [vmem:[%s2735 + $0x24] sm:$0xf]
        %v2746 = vld [vmem:[%s2735 + $0x28] sm:$0xf]
        %v2747 = vld [vmem:[%s2735 + $0x2c] sm:$0xf]
        %v2748 = vld [vmem:[%s2735 + $0x30] sm:$0xf]
        %v2749 = vld [vmem:[%s2735 + $0x34] sm:$0xf]
        %v2750 = vld [vmem:[%s2735 + $0x38] sm:$0xf]
        %v2751 = vld [vmem:[%s2735 + $0x3c] sm:$0xf]
        %v2753 = vshrl.u32 %v2718, 16
        %v2755 = vrot.slane %v2753, 3
        %v2756 = vshll.u32 %v2718, 16
        %v2758 = vrot.slane %v2756, 4
        %v2759 = vor.u32 %v2755, %v2758
        %v2761 = vshrl.u32 %v2719, 16
        %v2763 = vrot.slane %v2761, 3
        %v2764 = vshll.u32 %v2719, 16
        %v2766 = vrot.slane %v2764, 4
        %v2767 = vor.u32 %v2763, %v2766
        %v2768 = vsel %vm1946, %v2759, %v2767
        %v2770 = vshrl.u32 %v2720, 16
        %v2772 = vrot.slane %v2770, 3
        %v2773 = vshll.u32 %v2720, 16
        %v2775 = vrot.slane %v2773, 4
        %v2776 = vor.u32 %v2772, %v2775
        %v2777 = vsel %vm1946, %v2767, %v2776
        %v2779 = vshrl.u32 %v2721, 16
        %v2781 = vrot.slane %v2779, 3
        %v2782 = vshll.u32 %v2721, 16
        %v2784 = vrot.slane %v2782, 4
        %v2785 = vor.u32 %v2781, %v2784
        %v2786 = vsel %vm1946, %v2776, %v2785
        %v2788 = vshrl.u32 %v2722, 16
        %v2790 = vrot.slane %v2788, 3
        %v2791 = vshll.u32 %v2722, 16
        %v2793 = vrot.slane %v2791, 4
        %v2794 = vor.u32 %v2790, %v2793
        %v2795 = vsel %vm1946, %v2785, %v2794
        %v2797 = vshrl.u32 %v2723, 16
        %v2799 = vrot.slane %v2797, 3
        %v2800 = vshll.u32 %v2723, 16
        %v2802 = vrot.slane %v2800, 4
        %v2803 = vor.u32 %v2799, %v2802
        %v2804 = vsel %vm1946, %v2794, %v2803
        %v2806 = vshrl.u32 %v2724, 16
        %v2808 = vrot.slane %v2806, 3
        %v2809 = vshll.u32 %v2724, 16
        %v2811 = vrot.slane %v2809, 4
        %v2812 = vor.u32 %v2808, %v2811
        %v2813 = vsel %vm1946, %v2803, %v2812
        %v2815 = vshrl.u32 %v2725, 16
        %v2817 = vrot.slane %v2815, 3
        %v2818 = vshll.u32 %v2725, 16
        %v2820 = vrot.slane %v2818, 4
        %v2821 = vor.u32 %v2817, %v2820
        %v2822 = vsel %vm1946, %v2812, %v2821
        %v2824 = vshrl.u32 %v2726, 16
        %v2826 = vrot.slane %v2824, 3
        %v2827 = vshll.u32 %v2726, 16
        %v2829 = vrot.slane %v2827, 4
        %v2830 = vor.u32 %v2826, %v2829
        %v2831 = vsel %vm1946, %v2821, %v2830
        %v2833 = vshrl.u32 %v2727, 16
        %v2835 = vrot.slane %v2833, 3
        %v2836 = vshll.u32 %v2727, 16
        %v2838 = vrot.slane %v2836, 4
        %v2839 = vor.u32 %v2835, %v2838
        %v2840 = vsel %vm1946, %v2830, %v2839
        %v2842 = vshrl.u32 %v2728, 16
        %v2844 = vrot.slane %v2842, 3
        %v2845 = vshll.u32 %v2728, 16
        %v2847 = vrot.slane %v2845, 4
        %v2848 = vor.u32 %v2844, %v2847
        %v2849 = vsel %vm1946, %v2839, %v2848
        %v2851 = vshrl.u32 %v2729, 16
        %v2853 = vrot.slane %v2851, 3
        %v2854 = vshll.u32 %v2729, 16
        %v2856 = vrot.slane %v2854, 4
        %v2857 = vor.u32 %v2853, %v2856
        %v2858 = vsel %vm1946, %v2848, %v2857
        %v2860 = vshrl.u32 %v2730, 16
        %v2862 = vrot.slane %v2860, 3
        %v2863 = vshll.u32 %v2730, 16
        %v2865 = vrot.slane %v2863, 4
        %v2866 = vor.u32 %v2862, %v2865
        %v2867 = vsel %vm1946, %v2857, %v2866
        %v2869 = vshrl.u32 %v2731, 16
        %v2871 = vrot.slane %v2869, 3
        %v2872 = vshll.u32 %v2731, 16
        %v2874 = vrot.slane %v2872, 4
        %v2875 = vor.u32 %v2871, %v2874
        %v2876 = vsel %vm1946, %v2866, %v2875
        %v2878 = vshrl.u32 %v2732, 16
        %v2880 = vrot.slane %v2878, 3
        %v2881 = vshll.u32 %v2732, 16
        %v2883 = vrot.slane %v2881, 4
        %v2884 = vor.u32 %v2880, %v2883
        %v2885 = vsel %vm1946, %v2875, %v2884
        %v2887 = vshrl.u32 %v2733, 16
        %v2889 = vrot.slane %v2887, 3
        %v2890 = vshll.u32 %v2733, 16
        %v2892 = vrot.slane %v2890, 4
        %v2893 = vor.u32 %v2889, %v2892
        %v2894 = vsel %vm1946, %v2884, %v2893
        %v2896 = vshrl.u32 %v2734, 16
        %v2898 = vrot.slane %v2896, 3
        %v2899 = vshll.u32 %v2734, 16
        %v2901 = vrot.slane %v2899, 4
        %v2902 = vor.u32 %v2898, %v2901
        %v2903 = vsel %vm1946, %v2893, %v2902
        %v2936 = vunpack.c.l.b16 %v2736
        %v2937 = vunpack.c.l.b16 %v2737
        %v2938 = vunpack.c.l.b16 %v2738
        %v2939 = vunpack.c.l.b16 %v2739
        %v2940 = vunpack.c.l.b16 %v2740
        %v2941 = vunpack.c.l.b16 %v2741
        %v2942 = vunpack.c.l.b16 %v2742
        %v2943 = vunpack.c.l.b16 %v2743
        %v2944 = vunpack.c.l.b16 %v2744
        %v2945 = vunpack.c.l.b16 %v2745
        %v2946 = vunpack.c.l.b16 %v2746
        %v2947 = vunpack.c.l.b16 %v2747
        %v2948 = vunpack.c.l.b16 %v2748
        %v2949 = vunpack.c.l.b16 %v2749
        %v2950 = vunpack.c.l.b16 %v2750
        %v2951 = vunpack.c.l.b16 %v2751
        %v2952 = vpack.c.b16 %v2937, %v2936
        %v2953 = vpack.c.b16 %v2939, %v2938
        %v2954 = vpack.c.b16 %v2941, %v2940
        %v2955 = vpack.c.b16 %v2943, %v2942
        %v2956 = vpack.c.b16 %v2945, %v2944
        %v2957 = vpack.c.b16 %v2947, %v2946
        %v2958 = vpack.c.b16 %v2949, %v2948
        %v2959 = vpack.c.b16 %v2951, %v2950
        %2968 = vmatprep.subr.bf16.mxu0 0
        %2969 = vmatpush1.bf16.msra.mxu0 %v2952
        %2970 = vmatprep.subr.bf16.mxu0 0
        %2971 = vmatpush1.bf16.msra.mxu0 %v2953
        %2972 = vmatprep.subr.bf16.mxu0 0
        %2973 = vmatpush1.bf16.msra.mxu0 %v2954
        %2974 = vmatprep.subr.bf16.mxu0 0
        %2975 = vmatpush1.bf16.msra.mxu0 %v2955
        %2976 = vmatprep.subr.bf16.mxu0 0
        %2977 = vmatpush1.bf16.msra.mxu0 %v2956
        %2978 = vmatprep.subr.bf16.mxu0 0
        %2979 = vmatpush1.bf16.msra.mxu0 %v2957
        %2980 = vmatprep.subr.bf16.mxu0 0
        %2981 = vmatpush1.bf16.msra.mxu0 %v2958
        %2982 = vmatprep.subr.bf16.mxu0 0
        %2983 = vmatpush1.bf16.msra.mxu0 %v2959
        %2984 = vmatprep.subr.bf16.mxu0 0
        %2985 = vmatpush1.bf16.msra.mxu0 0
        %2986 = vmatprep.subr.bf16.mxu0 0
        %2987 = vmatpush1.bf16.msra.mxu0 0
        %2988 = vmatprep.subr.bf16.mxu0 0
        %2989 = vmatpush1.bf16.msra.mxu0 0
        %2990 = vmatprep.subr.bf16.mxu0 0
        %2991 = vmatpush1.bf16.msra.mxu0 0
        %2992 = vmatprep.subr.bf16.mxu0 0
        %2993 = vmatpush1.bf16.msra.mxu0 0
        %2994 = vmatprep.subr.bf16.mxu0 0
        %2995 = vmatpush1.bf16.msra.mxu0 0
        %2996 = vmatprep.subr.bf16.mxu0 0
        %2997 = vmatpush1.bf16.msra.mxu0 0
        %2998 = vmatprep.subr.bf16.mxu0 0
        %2999 = vmatpush1.bf16.msra.mxu0 0
        %3000 = vmatprep.mubr.bf16.mxu0 0
        %3001 = vmatmul.mubr.bf16.gmra.mrb[0].mxu0 %v2768
        %v3002 = vpop.f32.mrb[0].mxu0
        %v3003 = vadd.f32 0.0, %v3002
        %v3004 = vpop.f32.mrb[0].mxu0
        %v3005 = vpop.f32.mrb[0].mxu0
        %v3006 = vadd.f32 0.0, %v3005
        %v3007 = vpop.f32.mrb[0].mxu0
        %3008 = vmatprep.mubr.bf16.mxu0 0
        %3009 = vmatmul.mubr.bf16.gmra.mrb[0].mxu0 %v2777
        %v3010 = vpop.f32.mrb[0].mxu0
        %v3011 = vadd.f32 0.0, %v3010
        %v3012 = vpop.f32.mrb[0].mxu0
        %v3013 = vpop.f32.mrb[0].mxu0
        %v3014 = vadd.f32 0.0, %v3013
        %v3015 = vpop.f32.mrb[0].mxu0
        %3016 = vmatprep.mubr.bf16.mxu0 0
        %3017 = vmatmul.mubr.bf16.gmra.mrb[0].mxu0 %v2786
        %v3018 = vpop.f32.mrb[0].mxu0
        %v3019 = vadd.f32 0.0, %v3018
        %v3020 = vpop.f32.mrb[0].mxu0
        %v3021 = vpop.f32.mrb[0].mxu0
        %v3022 = vadd.f32 0.0, %v3021
        %v3023 = vpop.f32.mrb[0].mxu0
        %3024 = vmatprep.mubr.bf16.mxu0 0
        %3025 = vmatmul.mubr.bf16.gmra.mrb[0].mxu0 %v2795
        %v3026 = vpop.f32.mrb[0].mxu0
        %v3027 = vadd.f32 0.0, %v3026
        %v3028 = vpop.f32.mrb[0].mxu0
        %v3029 = vpop.f32.mrb[0].mxu0
        %v3030 = vadd.f32 0.0, %v3029
        %v3031 = vpop.f32.mrb[0].mxu0
        %3032 = vmatprep.mubr.bf16.mxu0 0
        %3033 = vmatmul.mubr.bf16.gmra.mrb[0].mxu0 %v2804
        %v3034 = vpop.f32.mrb[0].mxu0
        %v3035 = vadd.f32 0.0, %v3034
        %v3036 = vpop.f32.mrb[0].mxu0
        %v3037 = vpop.f32.mrb[0].mxu0
        %v3038 = vadd.f32 0.0, %v3037
        %v3039 = vpop.f32.mrb[0].mxu0
        %3040 = vmatprep.mubr.bf16.mxu0 0
        %3041 = vmatmul.mubr.bf16.gmra.mrb[0].mxu0 %v2813
        %v3042 = vpop.f32.mrb[0].mxu0
        %v3043 = vadd.f32 0.0, %v3042
        %v3044 = vpop.f32.mrb[0].mxu0
        %v3045 = vpop.f32.mrb[0].mxu0
        %v3046 = vadd.f32 0.0, %v3045
        %v3047 = vpop.f32.mrb[0].mxu0
        %3048 = vmatprep.mubr.bf16.mxu0 0
        %3049 = vmatmul.mubr.bf16.gmra.mrb[0].mxu0 %v2822
        %v3050 = vpop.f32.mrb[0].mxu0
        %v3051 = vadd.f32 0.0, %v3050
        %v3052 = vpop.f32.mrb[0].mxu0
        %v3053 = vpop.f32.mrb[0].mxu0
        %v3054 = vadd.f32 0.0, %v3053
        %v3055 = vpop.f32.mrb[0].mxu0
        %3056 = vmatprep.mubr.bf16.mxu0 0
        %3057 = vmatmul.mubr.bf16.gmra.mrb[0].mxu0 %v2831
        %v3058 = vpop.f32.mrb[0].mxu0
        %v3059 = vadd.f32 0.0, %v3058
        %v3060 = vpop.f32.mrb[0].mxu0
        %v3061 = vpop.f32.mrb[0].mxu0
        %v3062 = vadd.f32 0.0, %v3061
        %v3063 = vpop.f32.mrb[0].mxu0
        %3064 = vmatprep.mubr.bf16.mxu0 0
        %3065 = vmatmul.mubr.bf16.gmra.mrb[0].mxu0 %v2840
        %v3066 = vpop.f32.mrb[0].mxu0
        %v3067 = vadd.f32 0.0, %v3066
        %v3068 = vpop.f32.mrb[0].mxu0
        %v3069 = vpop.f32.mrb[0].mxu0
        %v3070 = vadd.f32 0.0, %v3069
        %v3071 = vpop.f32.mrb[0].mxu0
        %3072 = vmatprep.mubr.bf16.mxu0 0
        %3073 = vmatmul.mubr.bf16.gmra.mrb[0].mxu0 %v2849
        %v3074 = vpop.f32.mrb[0].mxu0
        %v3075 = vadd.f32 0.0, %v3074
        %v3076 = vpop.f32.mrb[0].mxu0
        %v3077 = vpop.f32.mrb[0].mxu0
        %v3078 = vadd.f32 0.0, %v3077
        %v3079 = vpop.f32.mrb[0].mxu0
        %3080 = vmatprep.mubr.bf16.mxu0 0
        %3081 = vmatmul.mubr.bf16.gmra.mrb[0].mxu0 %v2858
        %v3082 = vpop.f32.mrb[0].mxu0
        %v3083 = vadd.f32 0.0, %v3082
        %v3084 = vpop.f32.mrb[0].mxu0
        %v3085 = vpop.f32.mrb[0].mxu0
        %v3086 = vadd.f32 0.0, %v3085
        %v3087 = vpop.f32.mrb[0].mxu0
        %3088 = vmatprep.mubr.bf16.mxu0 0
        %3089 = vmatmul.mubr.bf16.gmra.mrb[0].mxu0 %v2867
        %v3090 = vpop.f32.mrb[0].mxu0
        %v3091 = vadd.f32 0.0, %v3090
        %v3092 = vpop.f32.mrb[0].mxu0
        %v3093 = vpop.f32.mrb[0].mxu0
        %v3094 = vadd.f32 0.0, %v3093
        %v3095 = vpop.f32.mrb[0].mxu0
        %3096 = vmatprep.mubr.bf16.mxu0 0
        %3097 = vmatmul.mubr.bf16.gmra.mrb[0].mxu0 %v2876
        %v3098 = vpop.f32.mrb[0].mxu0
        %v3099 = vadd.f32 0.0, %v3098
        %v3100 = vpop.f32.mrb[0].mxu0
        %v3101 = vpop.f32.mrb[0].mxu0
        %v3102 = vadd.f32 0.0, %v3101
        %v3103 = vpop.f32.mrb[0].mxu0
        %3104 = vmatprep.mubr.bf16.mxu0 0
        %3105 = vmatmul.mubr.bf16.gmra.mrb[0].mxu0 %v2885
        %v3106 = vpop.f32.mrb[0].mxu0
        %v3107 = vadd.f32 0.0, %v3106
        %v3108 = vpop.f32.mrb[0].mxu0
        %v3109 = vpop.f32.mrb[0].mxu0
        %v3110 = vadd.f32 0.0, %v3109
        %v3111 = vpop.f32.mrb[0].mxu0
        %3112 = vmatprep.mubr.bf16.mxu0 0
        %3113 = vmatmul.mubr.bf16.gmra.mrb[0].mxu0 %v2894
        %v3114 = vpop.f32.mrb[0].mxu0
        %v3115 = vadd.f32 0.0, %v3114
        %v3116 = vpop.f32.mrb[0].mxu0
        %v3117 = vpop.f32.mrb[0].mxu0
        %v3118 = vadd.f32 0.0, %v3117
        %v3119 = vpop.f32.mrb[0].mxu0
        %3120 = vmatprep.mubr.bf16.mxu0 0
        %3121 = vmatmul.mubr.bf16.gmra.mrb[0].mxu0 %v2903
        %v3122 = vpop.f32.mrb[0].mxu0
        %v3123 = vadd.f32 0.0, %v3122
        %v3124 = vpop.f32.mrb[0].mxu0
        %v3125 = vpop.f32.mrb[0].mxu0
        %v3126 = vadd.f32 0.0, %v3125
        %v3127 = vpop.f32.mrb[0].mxu0
        %3128 = vdwg.mxu0
        %v3129 = vadd.f32 %v2575, %v3003
        %v3130 = vadd.f32 %v2578, %v3006
        %v3131 = vadd.f32 %v2583, %v3011
        %v3132 = vadd.f32 %v2586, %v3014
        %v3133 = vadd.f32 %v2591, %v3019
        %v3134 = vadd.f32 %v2594, %v3022
        %v3135 = vadd.f32 %v2599, %v3027
        %v3136 = vadd.f32 %v2602, %v3030
        %v3137 = vadd.f32 %v2607, %v3035
        %v3138 = vadd.f32 %v2610, %v3038
        %v3139 = vadd.f32 %v2615, %v3043
        %v3140 = vadd.f32 %v2618, %v3046
        %v3141 = vadd.f32 %v2623, %v3051
        %v3142 = vadd.f32 %v2626, %v3054
        %v3143 = vadd.f32 %v2631, %v3059
        %v3144 = vadd.f32 %v2634, %v3062
        %v3145 = vadd.f32 %v2639, %v3067
        %v3146 = vadd.f32 %v2642, %v3070
        %v3147 = vadd.f32 %v2647, %v3075
        %v3148 = vadd.f32 %v2650, %v3078
        %v3149 = vadd.f32 %v2655, %v3083
        %v3150 = vadd.f32 %v2658, %v3086
        %v3151 = vadd.f32 %v2663, %v3091
        %v3152 = vadd.f32 %v2666, %v3094
        %v3153 = vadd.f32 %v2671, %v3099
        %v3154 = vadd.f32 %v2674, %v3102
        %v3155 = vadd.f32 %v2679, %v3107
        %v3156 = vadd.f32 %v2682, %v3110
        %v3157 = vadd.f32 %v2687, %v3115
        %v3158 = vadd.f32 %v2690, %v3118
        %v3159 = vadd.f32 %v2695, %v3123
        %v3160 = vadd.f32 %v2698, %v3126
        %v3161 = vld [vmem:[#allocation2] sm:$0xf0]
        %s3162 = scalar_lea.vmem [#allocation12], 64
        %v3163 = vld [vmem:[%s3162] sm:$0xf]
        %v3164 = vld [vmem:[%s3162 + $0x4] sm:$0xf]
        %v3165 = vld [vmem:[%s3162 + $0x8] sm:$0xf]
        %v3166 = vld [vmem:[%s3162 + $0xc] sm:$0xf]
        %v3167 = vld [vmem:[%s3162 + $0x10] sm:$0xf]
        %v3168 = vld [vmem:[%s3162 + $0x14] sm:$0xf]
        %v3169 = vld [vmem:[%s3162 + $0x18] sm:$0xf]
        %v3170 = vld [vmem:[%s3162 + $0x1c] sm:$0xf]
        %v3171 = vld [vmem:[%s3162 + $0x20] sm:$0xf]
        %v3172 = vld [vmem:[%s3162 + $0x24] sm:$0xf]
        %v3173 = vld [vmem:[%s3162 + $0x28] sm:$0xf]
        %v3174 = vld [vmem:[%s3162 + $0x2c] sm:$0xf]
        %v3175 = vld [vmem:[%s3162 + $0x30] sm:$0xf]
        %v3176 = vld [vmem:[%s3162 + $0x34] sm:$0xf]
        %v3177 = vld [vmem:[%s3162 + $0x38] sm:$0xf]
        %v3178 = vld [vmem:[%s3162 + $0x3c] sm:$0xf]
        %v3196 = vrot.slane %v3161, 4
        %v3197 = vrot.slane %v1523, 4
        %v3198 = vsel %vm911, %v3196, %v3197
        %v3199 = vrot.slane %v1524, 4
        %v3200 = vsel %vm911, %v3197, %v3199
        %v3201 = vrot.slane %v1525, 4
        %v3202 = vsel %vm911, %v3199, %v3201
        %v3203 = vrot.slane %v1526, 4
        %v3204 = vsel %vm911, %v3201, %v3203
        %v3205 = vrot.slane %v1527, 4
        %v3206 = vsel %vm911, %v3203, %v3205
        %v3207 = vrot.slane %v1528, 4
        %v3208 = vsel %vm911, %v3205, %v3207
        %v3209 = vrot.slane %v1529, 4
        %v3210 = vsel %vm911, %v3207, %v3209
        %v3211 = vrot.slane %v1530, 4
        %v3212 = vsel %vm911, %v3209, %v3211
        %v3213 = vrot.slane %v1531, 4
        %v3214 = vsel %vm911, %v3211, %v3213
        %v3215 = vrot.slane %v1532, 4
        %v3216 = vsel %vm911, %v3213, %v3215
        %v3217 = vrot.slane %v1533, 4
        %v3218 = vsel %vm911, %v3215, %v3217
        %v3219 = vrot.slane %v1534, 4
        %v3220 = vsel %vm911, %v3217, %v3219
        %v3221 = vrot.slane %v1535, 4
        %v3222 = vsel %vm911, %v3219, %v3221
        %v3223 = vrot.slane %v1536, 4
        %v3224 = vsel %vm911, %v3221, %v3223
        %v3225 = vrot.slane %v1537, 4
        %v3226 = vsel %vm911, %v3223, %v3225
        %v3227 = vrot.slane %v1538, 4
        %v3228 = vsel %vm911, %v3225, %v3227
        %v3261 = vunpack.c.l.b16 %v3163
        %v3262 = vunpack.c.l.b16 %v3164
        %v3263 = vunpack.c.l.b16 %v3165
        %v3264 = vunpack.c.l.b16 %v3166
        %v3265 = vunpack.c.l.b16 %v3167
        %v3266 = vunpack.c.l.b16 %v3168
        %v3267 = vunpack.c.l.b16 %v3169
        %v3268 = vunpack.c.l.b16 %v3170
        %v3269 = vunpack.c.l.b16 %v3171
        %v3270 = vunpack.c.l.b16 %v3172
        %v3271 = vunpack.c.l.b16 %v3173
        %v3272 = vunpack.c.l.b16 %v3174
        %v3273 = vunpack.c.l.b16 %v3175
        %v3274 = vunpack.c.l.b16 %v3176
        %v3275 = vunpack.c.l.b16 %v3177
        %v3276 = vunpack.c.l.b16 %v3178
        %v3277 = vpack.c.b16 %v3262, %v3261
        %v3278 = vpack.c.b16 %v3264, %v3263
        %v3279 = vpack.c.b16 %v3266, %v3265
        %v3280 = vpack.c.b16 %v3268, %v3267
        %v3281 = vpack.c.b16 %v3270, %v3269
        %v3282 = vpack.c.b16 %v3272, %v3271
        %v3283 = vpack.c.b16 %v3274, %v3273
        %v3284 = vpack.c.b16 %v3276, %v3275
        %3293 = vmatprep.subr.bf16.mxu0 0
        %3294 = vmatpush1.bf16.msra.mxu0 %v3277
        %3295 = vmatprep.subr.bf16.mxu0 0
        %3296 = vmatpush1.bf16.msra.mxu0 %v3278
        %3297 = vmatprep.subr.bf16.mxu0 0
        %3298 = vmatpush1.bf16.msra.mxu0 %v3279
        %3299 = vmatprep.subr.bf16.mxu0 0
        %3300 = vmatpush1.bf16.msra.mxu0 %v3280
        %3301 = vmatprep.subr.bf16.mxu0 0
        %3302 = vmatpush1.bf16.msra.mxu0 %v3281
        %3303 = vmatprep.subr.bf16.mxu0 0
        %3304 = vmatpush1.bf16.msra.mxu0 %v3282
        %3305 = vmatprep.subr.bf16.mxu0 0
        %3306 = vmatpush1.bf16.msra.mxu0 %v3283
        %3307 = vmatprep.subr.bf16.mxu0 0
        %3308 = vmatpush1.bf16.msra.mxu0 %v3284
        %3309 = vmatprep.subr.bf16.mxu0 0
        %3310 = vmatpush1.bf16.msra.mxu0 0
        %3311 = vmatprep.subr.bf16.mxu0 0
        %3312 = vmatpush1.bf16.msra.mxu0 0
        %3313 = vmatprep.subr.bf16.mxu0 0
        %3314 = vmatpush1.bf16.msra.mxu0 0
        %3315 = vmatprep.subr.bf16.mxu0 0
        %3316 = vmatpush1.bf16.msra.mxu0 0
        %3317 = vmatprep.subr.bf16.mxu0 0
        %3318 = vmatpush1.bf16.msra.mxu0 0
        %3319 = vmatprep.subr.bf16.mxu0 0
        %3320 = vmatpush1.bf16.msra.mxu0 0
        %3321 = vmatprep.subr.bf16.mxu0 0
        %3322 = vmatpush1.bf16.msra.mxu0 0
        %3323 = vmatprep.subr.bf16.mxu0 0
        %3324 = vmatpush1.bf16.msra.mxu0 0
        %3325 = vmatprep.mubr.bf16.mxu0 0
        %3326 = vmatmul.mubr.bf16.gmra.mrb[0].mxu0 %v3198
        %v3327 = vpop.f32.mrb[0].mxu0
        %v3328 = vadd.f32 0.0, %v3327
        %v3329 = vpop.f32.mrb[0].mxu0
        %v3330 = vpop.f32.mrb[0].mxu0
        %v3331 = vadd.f32 0.0, %v3330
        %v3332 = vpop.f32.mrb[0].mxu0
        %3333 = vmatprep.mubr.bf16.mxu0 0
        %3334 = vmatmul.mubr.bf16.gmra.mrb[0].mxu0 %v3200
        %v3335 = vpop.f32.mrb[0].mxu0
        %v3336 = vadd.f32 0.0, %v3335
        %v3337 = vpop.f32.mrb[0].mxu0
        %v3338 = vpop.f32.mrb[0].mxu0
        %v3339 = vadd.f32 0.0, %v3338
        %v3340 = vpop.f32.mrb[0].mxu0
        %3341 = vmatprep.mubr.bf16.mxu0 0
        %3342 = vmatmul.mubr.bf16.gmra.mrb[0].mxu0 %v3202
        %v3343 = vpop.f32.mrb[0].mxu0
        %v3344 = vadd.f32 0.0, %v3343
        %v3345 = vpop.f32.mrb[0].mxu0
        %v3346 = vpop.f32.mrb[0].mxu0
        %v3347 = vadd.f32 0.0, %v3346
        %v3348 = vpop.f32.mrb[0].mxu0
        %3349 = vmatprep.mubr.bf16.mxu0 0
        %3350 = vmatmul.mubr.bf16.gmra.mrb[0].mxu0 %v3204
        %v3351 = vpop.f32.mrb[0].mxu0
        %v3352 = vadd.f32 0.0, %v3351
        %v3353 = vpop.f32.mrb[0].mxu0
        %v3354 = vpop.f32.mrb[0].mxu0
        %v3355 = vadd.f32 0.0, %v3354
        %v3356 = vpop.f32.mrb[0].mxu0
        %3357 = vmatprep.mubr.bf16.mxu0 0
        %3358 = vmatmul.mubr.bf16.gmra.mrb[0].mxu0 %v3206
        %v3359 = vpop.f32.mrb[0].mxu0
        %v3360 = vadd.f32 0.0, %v3359
        %v3361 = vpop.f32.mrb[0].mxu0
        %v3362 = vpop.f32.mrb[0].mxu0
        %v3363 = vadd.f32 0.0, %v3362
        %v3364 = vpop.f32.mrb[0].mxu0
        %3365 = vmatprep.mubr.bf16.mxu0 0
        %3366 = vmatmul.mubr.bf16.gmra.mrb[0].mxu0 %v3208
        %v3367 = vpop.f32.mrb[0].mxu0
        %v3368 = vadd.f32 0.0, %v3367
        %v3369 = vpop.f32.mrb[0].mxu0
        %v3370 = vpop.f32.mrb[0].mxu0
        %v3371 = vadd.f32 0.0, %v3370
        %v3372 = vpop.f32.mrb[0].mxu0
        %3373 = vmatprep.mubr.bf16.mxu0 0
        %3374 = vmatmul.mubr.bf16.gmra.mrb[0].mxu0 %v3210
        %v3375 = vpop.f32.mrb[0].mxu0
        %v3376 = vadd.f32 0.0, %v3375
        %v3377 = vpop.f32.mrb[0].mxu0
        %v3378 = vpop.f32.mrb[0].mxu0
        %v3379 = vadd.f32 0.0, %v3378
        %v3380 = vpop.f32.mrb[0].mxu0
        %3381 = vmatprep.mubr.bf16.mxu0 0
        %3382 = vmatmul.mubr.bf16.gmra.mrb[0].mxu0 %v3212
        %v3383 = vpop.f32.mrb[0].mxu0
        %v3384 = vadd.f32 0.0, %v3383
        %v3385 = vpop.f32.mrb[0].mxu0
        %v3386 = vpop.f32.mrb[0].mxu0
        %v3387 = vadd.f32 0.0, %v3386
        %v3388 = vpop.f32.mrb[0].mxu0
        %3389 = vmatprep.mubr.bf16.mxu0 0
        %3390 = vmatmul.mubr.bf16.gmra.mrb[0].mxu0 %v3214
        %v3391 = vpop.f32.mrb[0].mxu0
        %v3392 = vadd.f32 0.0, %v3391
        %v3393 = vpop.f32.mrb[0].mxu0
        %v3394 = vpop.f32.mrb[0].mxu0
        %v3395 = vadd.f32 0.0, %v3394
        %v3396 = vpop.f32.mrb[0].mxu0
        %3397 = vmatprep.mubr.bf16.mxu0 0
        %3398 = vmatmul.mubr.bf16.gmra.mrb[0].mxu0 %v3216
        %v3399 = vpop.f32.mrb[0].mxu0
        %v3400 = vadd.f32 0.0, %v3399
        %v3401 = vpop.f32.mrb[0].mxu0
        %v3402 = vpop.f32.mrb[0].mxu0
        %v3403 = vadd.f32 0.0, %v3402
        %v3404 = vpop.f32.mrb[0].mxu0
        %3405 = vmatprep.mubr.bf16.mxu0 0
        %3406 = vmatmul.mubr.bf16.gmra.mrb[0].mxu0 %v3218
        %v3407 = vpop.f32.mrb[0].mxu0
        %v3408 = vadd.f32 0.0, %v3407
        %v3409 = vpop.f32.mrb[0].mxu0
        %v3410 = vpop.f32.mrb[0].mxu0
        %v3411 = vadd.f32 0.0, %v3410
        %v3412 = vpop.f32.mrb[0].mxu0
        %3413 = vmatprep.mubr.bf16.mxu0 0
        %3414 = vmatmul.mubr.bf16.gmra.mrb[0].mxu0 %v3220
        %v3415 = vpop.f32.mrb[0].mxu0
        %v3416 = vadd.f32 0.0, %v3415
        %v3417 = vpop.f32.mrb[0].mxu0
        %v3418 = vpop.f32.mrb[0].mxu0
        %v3419 = vadd.f32 0.0, %v3418
        %v3420 = vpop.f32.mrb[0].mxu0
        %3421 = vmatprep.mubr.bf16.mxu0 0
        %3422 = vmatmul.mubr.bf16.gmra.mrb[0].mxu0 %v3222
        %v3423 = vpop.f32.mrb[0].mxu0
        %v3424 = vadd.f32 0.0, %v3423
        %v3425 = vpop.f32.mrb[0].mxu0
        %v3426 = vpop.f32.mrb[0].mxu0
        %v3427 = vadd.f32 0.0, %v3426
        %v3428 = vpop.f32.mrb[0].mxu0
        %3429 = vmatprep.mubr.bf16.mxu0 0
        %3430 = vmatmul.mubr.bf16.gmra.mrb[0].mxu0 %v3224
        %v3431 = vpop.f32.mrb[0].mxu0
        %v3432 = vadd.f32 0.0, %v3431
        %v3433 = vpop.f32.mrb[0].mxu0
        %v3434 = vpop.f32.mrb[0].mxu0
        %v3435 = vadd.f32 0.0, %v3434
        %v3436 = vpop.f32.mrb[0].mxu0
        %3437 = vmatprep.mubr.bf16.mxu0 0
        %3438 = vmatmul.mubr.bf16.gmra.mrb[0].mxu0 %v3226
        %v3439 = vpop.f32.mrb[0].mxu0
        %v3440 = vadd.f32 0.0, %v3439
        %v3441 = vpop.f32.mrb[0].mxu0
        %v3442 = vpop.f32.mrb[0].mxu0
        %v3443 = vadd.f32 0.0, %v3442
        %v3444 = vpop.f32.mrb[0].mxu0
        %3445 = vmatprep.mubr.bf16.mxu0 0
        %3446 = vmatmul.mubr.bf16.gmra.mrb[0].mxu0 %v3228
        %v3447 = vpop.f32.mrb[0].mxu0
        %v3448 = vadd.f32 0.0, %v3447
        %v3449 = vpop.f32.mrb[0].mxu0
        %v3450 = vpop.f32.mrb[0].mxu0
        %v3451 = vadd.f32 0.0, %v3450
        %v3452 = vpop.f32.mrb[0].mxu0
        %3453 = vdwg.mxu0
        %v3454 = vadd.f32 %v3129, %v3328
        %v3455 = vadd.f32 %v3130, %v3331
        %v3456 = vadd.f32 %v3131, %v3336
        %v3457 = vadd.f32 %v3132, %v3339
        %v3458 = vadd.f32 %v3133, %v3344
        %v3459 = vadd.f32 %v3134, %v3347
        %v3460 = vadd.f32 %v3135, %v3352
        %v3461 = vadd.f32 %v3136, %v3355
        %v3462 = vadd.f32 %v3137, %v3360
        %v3463 = vadd.f32 %v3138, %v3363
        %v3464 = vadd.f32 %v3139, %v3368
        %v3465 = vadd.f32 %v3140, %v3371
        %v3466 = vadd.f32 %v3141, %v3376
        %v3467 = vadd.f32 %v3142, %v3379
        %v3468 = vadd.f32 %v3143, %v3384
        %v3469 = vadd.f32 %v3144, %v3387
        %v3470 = vadd.f32 %v3145, %v3392
        %v3471 = vadd.f32 %v3146, %v3395
        %v3472 = vadd.f32 %v3147, %v3400
        %v3473 = vadd.f32 %v3148, %v3403
        %v3474 = vadd.f32 %v3149, %v3408
        %v3475 = vadd.f32 %v3150, %v3411
        %v3476 = vadd.f32 %v3151, %v3416
        %v3477 = vadd.f32 %v3152, %v3419
        %v3478 = vadd.f32 %v3153, %v3424
        %v3479 = vadd.f32 %v3154, %v3427
        %v3480 = vadd.f32 %v3155, %v3432
        %v3481 = vadd.f32 %v3156, %v3435
        %v3482 = vadd.f32 %v3157, %v3440
        %v3483 = vadd.f32 %v3158, %v3443
        %v3484 = vadd.f32 %v3159, %v3448
        %v3485 = vadd.f32 %v3160, %v3451
        %v3486 = vld [vmem:[#allocation2 + $0x8] sm:$0xf0]
        %s3487 = scalar_lea.vmem [#allocation12], 256
        %v3488 = vld [vmem:[%s3487] sm:$0xf]
        %v3489 = vld [vmem:[%s3487 + $0x4] sm:$0xf]
        %v3490 = vld [vmem:[%s3487 + $0x8] sm:$0xf]
        %v3491 = vld [vmem:[%s3487 + $0xc] sm:$0xf]
        %v3492 = vld [vmem:[%s3487 + $0x10] sm:$0xf]
        %v3493 = vld [vmem:[%s3487 + $0x14] sm:$0xf]
        %v3494 = vld [vmem:[%s3487 + $0x18] sm:$0xf]
        %v3495 = vld [vmem:[%s3487 + $0x1c] sm:$0xf]
        %v3496 = vld [vmem:[%s3487 + $0x20] sm:$0xf]
        %v3497 = vld [vmem:[%s3487 + $0x24] sm:$0xf]
        %v3498 = vld [vmem:[%s3487 + $0x28] sm:$0xf]
        %v3499 = vld [vmem:[%s3487 + $0x2c] sm:$0xf]
        %v3500 = vld [vmem:[%s3487 + $0x30] sm:$0xf]
        %v3501 = vld [vmem:[%s3487 + $0x34] sm:$0xf]
        %v3502 = vld [vmem:[%s3487 + $0x38] sm:$0xf]
        %v3503 = vld [vmem:[%s3487 + $0x3c] sm:$0xf]
        %v3507 = vrot.slane %v3486, 4
        %v3508 = vsel %vm911, %v3507, %v3199
        %v3509 = vrot.slane %v1910, 4
        %v3510 = vsel %vm911, %v3225, %v3509
        %v3511 = vrot.slane %v1911, 4
        %v3512 = vsel %vm911, %v3509, %v3511
        %v3532 = vunpack.c.l.b16 %v3488
        %v3533 = vunpack.c.l.b16 %v3489
        %v3534 = vunpack.c.l.b16 %v3490
        %v3535 = vunpack.c.l.b16 %v3491
        %v3536 = vunpack.c.l.b16 %v3492
        %v3537 = vunpack.c.l.b16 %v3493
        %v3538 = vunpack.c.l.b16 %v3494
        %v3539 = vunpack.c.l.b16 %v3495
        %v3540 = vunpack.c.l.b16 %v3496
        %v3541 = vunpack.c.l.b16 %v3497
        %v3542 = vunpack.c.l.b16 %v3498
        %v3543 = vunpack.c.l.b16 %v3499
        %v3544 = vunpack.c.l.b16 %v3500
        %v3545 = vunpack.c.l.b16 %v3501
        %v3546 = vunpack.c.l.b16 %v3502
        %v3547 = vunpack.c.l.b16 %v3503
        %v3548 = vpack.c.b16 %v3533, %v3532
        %v3549 = vpack.c.b16 %v3535, %v3534
        %v3550 = vpack.c.b16 %v3537, %v3536
        %v3551 = vpack.c.b16 %v3539, %v3538
        %v3552 = vpack.c.b16 %v3541, %v3540
        %v3553 = vpack.c.b16 %v3543, %v3542
        %v3554 = vpack.c.b16 %v3545, %v3544
        %v3555 = vpack.c.b16 %v3547, %v3546
        %3564 = vmatprep.subr.bf16.mxu0 0
        %3565 = vmatpush1.bf16.msra.mxu0 %v3548
        %3566 = vmatprep.subr.bf16.mxu0 0
        %3567 = vmatpush1.bf16.msra.mxu0 %v3549
        %3568 = vmatprep.subr.bf16.mxu0 0
        %3569 = vmatpush1.bf16.msra.mxu0 %v3550
        %3570 = vmatprep.subr.bf16.mxu0 0
        %3571 = vmatpush1.bf16.msra.mxu0 %v3551
        %3572 = vmatprep.subr.bf16.mxu0 0
        %3573 = vmatpush1.bf16.msra.mxu0 %v3552
        %3574 = vmatprep.subr.bf16.mxu0 0
        %3575 = vmatpush1.bf16.msra.mxu0 %v3553
        %3576 = vmatprep.subr.bf16.mxu0 0
        %3577 = vmatpush1.bf16.msra.mxu0 %v3554
        %3578 = vmatprep.subr.bf16.mxu0 0
        %3579 = vmatpush1.bf16.msra.mxu0 %v3555
        %3580 = vmatprep.subr.bf16.mxu0 0
        %3581 = vmatpush1.bf16.msra.mxu0 0
        %3582 = vmatprep.subr.bf16.mxu0 0
        %3583 = vmatpush1.bf16.msra.mxu0 0
        %3584 = vmatprep.subr.bf16.mxu0 0
        %3585 = vmatpush1.bf16.msra.mxu0 0
        %3586 = vmatprep.subr.bf16.mxu0 0
        %3587 = vmatpush1.bf16.msra.mxu0 0
        %3588 = vmatprep.subr.bf16.mxu0 0
        %3589 = vmatpush1.bf16.msra.mxu0 0
        %3590 = vmatprep.subr.bf16.mxu0 0
        %3591 = vmatpush1.bf16.msra.mxu0 0
        %3592 = vmatprep.subr.bf16.mxu0 0
        %3593 = vmatpush1.bf16.msra.mxu0 0
        %3594 = vmatprep.subr.bf16.mxu0 0
        %3595 = vmatpush1.bf16.msra.mxu0 0
        %3596 = vmatprep.mubr.bf16.mxu0 0
        %3597 = vmatmul.mubr.bf16.gmra.mrb[0].mxu0 %v3508
        %v3598 = vpop.f32.mrb[0].mxu0
        %v3599 = vadd.f32 0.0, %v3598
        %v3600 = vpop.f32.mrb[0].mxu0
        %v3601 = vpop.f32.mrb[0].mxu0
        %v3602 = vadd.f32 0.0, %v3601
        %v3603 = vpop.f32.mrb[0].mxu0
        %3604 = vmatprep.mubr.bf16.mxu0 0
        %3605 = vmatmul.mubr.bf16.gmra.mrb[0].mxu0 %v3202
        %v3606 = vpop.f32.mrb[0].mxu0
        %v3607 = vadd.f32 0.0, %v3606
        %v3608 = vpop.f32.mrb[0].mxu0
        %v3609 = vpop.f32.mrb[0].mxu0
        %v3610 = vadd.f32 0.0, %v3609
        %v3611 = vpop.f32.mrb[0].mxu0
        %3612 = vmatprep.mubr.bf16.mxu0 0
        %3613 = vmatmul.mubr.bf16.gmra.mrb[0].mxu0 %v3204
        %v3614 = vpop.f32.mrb[0].mxu0
        %v3615 = vadd.f32 0.0, %v3614
        %v3616 = vpop.f32.mrb[0].mxu0
        %v3617 = vpop.f32.mrb[0].mxu0
        %v3618 = vadd.f32 0.0, %v3617
        %v3619 = vpop.f32.mrb[0].mxu0
        %3620 = vmatprep.mubr.bf16.mxu0 0
        %3621 = vmatmul.mubr.bf16.gmra.mrb[0].mxu0 %v3206
        %v3622 = vpop.f32.mrb[0].mxu0
        %v3623 = vadd.f32 0.0, %v3622
        %v3624 = vpop.f32.mrb[0].mxu0
        %v3625 = vpop.f32.mrb[0].mxu0
        %v3626 = vadd.f32 0.0, %v3625
        %v3627 = vpop.f32.mrb[0].mxu0
        %3628 = vmatprep.mubr.bf16.mxu0 0
        %3629 = vmatmul.mubr.bf16.gmra.mrb[0].mxu0 %v3208
        %v3630 = vpop.f32.mrb[0].mxu0
        %v3631 = vadd.f32 0.0, %v3630
        %v3632 = vpop.f32.mrb[0].mxu0
        %v3633 = vpop.f32.mrb[0].mxu0
        %v3634 = vadd.f32 0.0, %v3633
        %v3635 = vpop.f32.mrb[0].mxu0
        %3636 = vmatprep.mubr.bf16.mxu0 0
        %3637 = vmatmul.mubr.bf16.gmra.mrb[0].mxu0 %v3210
        %v3638 = vpop.f32.mrb[0].mxu0
        %v3639 = vadd.f32 0.0, %v3638
        %v3640 = vpop.f32.mrb[0].mxu0
        %v3641 = vpop.f32.mrb[0].mxu0
        %v3642 = vadd.f32 0.0, %v3641
        %v3643 = vpop.f32.mrb[0].mxu0
        %3644 = vmatprep.mubr.bf16.mxu0 0
        %3645 = vmatmul.mubr.bf16.gmra.mrb[0].mxu0 %v3212
        %v3646 = vpop.f32.mrb[0].mxu0
        %v3647 = vadd.f32 0.0, %v3646
        %v3648 = vpop.f32.mrb[0].mxu0
        %v3649 = vpop.f32.mrb[0].mxu0
        %v3650 = vadd.f32 0.0, %v3649
        %v3651 = vpop.f32.mrb[0].mxu0
        %3652 = vmatprep.mubr.bf16.mxu0 0
        %3653 = vmatmul.mubr.bf16.gmra.mrb[0].mxu0 %v3214
        %v3654 = vpop.f32.mrb[0].mxu0
        %v3655 = vadd.f32 0.0, %v3654
        %v3656 = vpop.f32.mrb[0].mxu0
        %v3657 = vpop.f32.mrb[0].mxu0
        %v3658 = vadd.f32 0.0, %v3657
        %v3659 = vpop.f32.mrb[0].mxu0
        %3660 = vmatprep.mubr.bf16.mxu0 0
        %3661 = vmatmul.mubr.bf16.gmra.mrb[0].mxu0 %v3216
        %v3662 = vpop.f32.mrb[0].mxu0
        %v3663 = vadd.f32 0.0, %v3662
        %v3664 = vpop.f32.mrb[0].mxu0
        %v3665 = vpop.f32.mrb[0].mxu0
        %v3666 = vadd.f32 0.0, %v3665
        %v3667 = vpop.f32.mrb[0].mxu0
        %3668 = vmatprep.mubr.bf16.mxu0 0
        %3669 = vmatmul.mubr.bf16.gmra.mrb[0].mxu0 %v3218
        %v3670 = vpop.f32.mrb[0].mxu0
        %v3671 = vadd.f32 0.0, %v3670
        %v3672 = vpop.f32.mrb[0].mxu0
        %v3673 = vpop.f32.mrb[0].mxu0
        %v3674 = vadd.f32 0.0, %v3673
        %v3675 = vpop.f32.mrb[0].mxu0
        %3676 = vmatprep.mubr.bf16.mxu0 0
        %3677 = vmatmul.mubr.bf16.gmra.mrb[0].mxu0 %v3220
        %v3678 = vpop.f32.mrb[0].mxu0
        %v3679 = vadd.f32 0.0, %v3678
        %v3680 = vpop.f32.mrb[0].mxu0
        %v3681 = vpop.f32.mrb[0].mxu0
        %v3682 = vadd.f32 0.0, %v3681
        %v3683 = vpop.f32.mrb[0].mxu0
        %3684 = vmatprep.mubr.bf16.mxu0 0
        %3685 = vmatmul.mubr.bf16.gmra.mrb[0].mxu0 %v3222
        %v3686 = vpop.f32.mrb[0].mxu0
        %v3687 = vadd.f32 0.0, %v3686
        %v3688 = vpop.f32.mrb[0].mxu0
        %v3689 = vpop.f32.mrb[0].mxu0
        %v3690 = vadd.f32 0.0, %v3689
        %v3691 = vpop.f32.mrb[0].mxu0
        %3692 = vmatprep.mubr.bf16.mxu0 0
        %3693 = vmatmul.mubr.bf16.gmra.mrb[0].mxu0 %v3224
        %v3694 = vpop.f32.mrb[0].mxu0
        %v3695 = vadd.f32 0.0, %v3694
        %v3696 = vpop.f32.mrb[0].mxu0
        %v3697 = vpop.f32.mrb[0].mxu0
        %v3698 = vadd.f32 0.0, %v3697
        %v3699 = vpop.f32.mrb[0].mxu0
        %3700 = vmatprep.mubr.bf16.mxu0 0
        %3701 = vmatmul.mubr.bf16.gmra.mrb[0].mxu0 %v3226
        %v3702 = vpop.f32.mrb[0].mxu0
        %v3703 = vadd.f32 0.0, %v3702
        %v3704 = vpop.f32.mrb[0].mxu0
        %v3705 = vpop.f32.mrb[0].mxu0
        %v3706 = vadd.f32 0.0, %v3705
        %v3707 = vpop.f32.mrb[0].mxu0
        %3708 = vmatprep.mubr.bf16.mxu0 0
        %3709 = vmatmul.mubr.bf16.gmra.mrb[0].mxu0 %v3510
        %v3710 = vpop.f32.mrb[0].mxu0
        %v3711 = vadd.f32 0.0, %v3710
        %v3712 = vpop.f32.mrb[0].mxu0
        %v3713 = vpop.f32.mrb[0].mxu0
        %v3714 = vadd.f32 0.0, %v3713
        %v3715 = vpop.f32.mrb[0].mxu0
        %3716 = vmatprep.mubr.bf16.mxu0 0
        %3717 = vmatmul.mubr.bf16.gmra.mrb[0].mxu0 %v3512
        %v3718 = vpop.f32.mrb[0].mxu0
        %v3719 = vadd.f32 0.0, %v3718
        %v3720 = vpop.f32.mrb[0].mxu0
        %v3721 = vpop.f32.mrb[0].mxu0
        %v3722 = vadd.f32 0.0, %v3721
        %v3723 = vpop.f32.mrb[0].mxu0
        %3724 = vdwg.mxu0
        %v3725 = vadd.f32 %v3454, %v3599
        %v3726 = vadd.f32 %v3455, %v3602
        %v3727 = vadd.f32 %v3456, %v3607
        %v3728 = vadd.f32 %v3457, %v3610
        %v3729 = vadd.f32 %v3458, %v3615
        %v3730 = vadd.f32 %v3459, %v3618
        %v3731 = vadd.f32 %v3460, %v3623
        %v3732 = vadd.f32 %v3461, %v3626
        %v3733 = vadd.f32 %v3462, %v3631
        %v3734 = vadd.f32 %v3463, %v3634
        %v3735 = vadd.f32 %v3464, %v3639
        %v3736 = vadd.f32 %v3465, %v3642
        %v3737 = vadd.f32 %v3466, %v3647
        %v3738 = vadd.f32 %v3467, %v3650
        %v3739 = vadd.f32 %v3468, %v3655
        %v3740 = vadd.f32 %v3469, %v3658
        %v3741 = vadd.f32 %v3470, %v3663
        %v3742 = vadd.f32 %v3471, %v3666
        %v3743 = vadd.f32 %v3472, %v3671
        %v3744 = vadd.f32 %v3473, %v3674
        %v3745 = vadd.f32 %v3474, %v3679
        %v3746 = vadd.f32 %v3475, %v3682
        %v3747 = vadd.f32 %v3476, %v3687
        %v3748 = vadd.f32 %v3477, %v3690
        %v3749 = vadd.f32 %v3478, %v3695
        %v3750 = vadd.f32 %v3479, %v3698
        %v3751 = vadd.f32 %v3480, %v3703
        %v3752 = vadd.f32 %v3481, %v3706
        %v3753 = vadd.f32 %v3482, %v3711
        %v3754 = vadd.f32 %v3483, %v3714
        %v3755 = vadd.f32 %v3484, %v3719
        %v3756 = vadd.f32 %v3485, %v3722
        %v3757 = vld [vmem:[#allocation2 + $0x10] sm:$0xf0]
        %s3758 = scalar_lea.vmem [#allocation12], 448
        %v3759 = vld [vmem:[%s3758] sm:$0xf]
        %v3760 = vld [vmem:[%s3758 + $0x4] sm:$0xf]
        %v3761 = vld [vmem:[%s3758 + $0x8] sm:$0xf]
        %v3762 = vld [vmem:[%s3758 + $0xc] sm:$0xf]
        %v3763 = vld [vmem:[%s3758 + $0x10] sm:$0xf]
        %v3764 = vld [vmem:[%s3758 + $0x14] sm:$0xf]
        %v3765 = vld [vmem:[%s3758 + $0x18] sm:$0xf]
        %v3766 = vld [vmem:[%s3758 + $0x1c] sm:$0xf]
        %v3767 = vld [vmem:[%s3758 + $0x20] sm:$0xf]
        %v3768 = vld [vmem:[%s3758 + $0x24] sm:$0xf]
        %v3769 = vld [vmem:[%s3758 + $0x28] sm:$0xf]
        %v3770 = vld [vmem:[%s3758 + $0x2c] sm:$0xf]
        %v3771 = vld [vmem:[%s3758 + $0x30] sm:$0xf]
        %v3772 = vld [vmem:[%s3758 + $0x34] sm:$0xf]
        %v3773 = vld [vmem:[%s3758 + $0x38] sm:$0xf]
        %v3774 = vld [vmem:[%s3758 + $0x3c] sm:$0xf]
        %v3792 = vrot.slane %v3757, 4
        %v3793 = vrot.slane %v2702, 4
        %v3794 = vsel %vm911, %v3792, %v3793
        %v3795 = vrot.slane %v2703, 4
        %v3796 = vsel %vm911, %v3793, %v3795
        %v3797 = vrot.slane %v2704, 4
        %v3798 = vsel %vm911, %v3795, %v3797
        %v3799 = vrot.slane %v2705, 4
        %v3800 = vsel %vm911, %v3797, %v3799
        %v3801 = vrot.slane %v2706, 4
        %v3802 = vsel %vm911, %v3799, %v3801
        %v3803 = vrot.slane %v2707, 4
        %v3804 = vsel %vm911, %v3801, %v3803
        %v3805 = vrot.slane %v2708, 4
        %v3806 = vsel %vm911, %v3803, %v3805
        %v3807 = vrot.slane %v2709, 4
        %v3808 = vsel %vm911, %v3805, %v3807
        %v3809 = vrot.slane %v2710, 4
        %v3810 = vsel %vm911, %v3807, %v3809
        %v3811 = vrot.slane %v2711, 4
        %v3812 = vsel %vm911, %v3809, %v3811
        %v3813 = vrot.slane %v2712, 4
        %v3814 = vsel %vm911, %v3811, %v3813
        %v3815 = vrot.slane %v2713, 4
        %v3816 = vsel %vm911, %v3813, %v3815
        %v3817 = vrot.slane %v2714, 4
        %v3818 = vsel %vm911, %v3815, %v3817
        %v3819 = vrot.slane %v2715, 4
        %v3820 = vsel %vm911, %v3817, %v3819
        %v3821 = vrot.slane %v2716, 4
        %v3822 = vsel %vm911, %v3819, %v3821
        %v3823 = vrot.slane %v2717, 4
        %v3824 = vsel %vm911, %v3821, %v3823
        %v3857 = vunpack.c.l.b16 %v3759
        %v3858 = vunpack.c.l.b16 %v3760
        %v3859 = vunpack.c.l.b16 %v3761
        %v3860 = vunpack.c.l.b16 %v3762
        %v3861 = vunpack.c.l.b16 %v3763
        %v3862 = vunpack.c.l.b16 %v3764
        %v3863 = vunpack.c.l.b16 %v3765
        %v3864 = vunpack.c.l.b16 %v3766
        %v3865 = vunpack.c.l.b16 %v3767
        %v3866 = vunpack.c.l.b16 %v3768
        %v3867 = vunpack.c.l.b16 %v3769
        %v3868 = vunpack.c.l.b16 %v3770
        %v3869 = vunpack.c.l.b16 %v3771
        %v3870 = vunpack.c.l.b16 %v3772
        %v3871 = vunpack.c.l.b16 %v3773
        %v3872 = vunpack.c.l.b16 %v3774
        %v3873 = vpack.c.b16 %v3858, %v3857
        %v3874 = vpack.c.b16 %v3860, %v3859
        %v3875 = vpack.c.b16 %v3862, %v3861
        %v3876 = vpack.c.b16 %v3864, %v3863
        %v3877 = vpack.c.b16 %v3866, %v3865
        %v3878 = vpack.c.b16 %v3868, %v3867
        %v3879 = vpack.c.b16 %v3870, %v3869
        %v3880 = vpack.c.b16 %v3872, %v3871
        %3889 = vmatprep.subr.bf16.mxu0 0
        %3890 = vmatpush1.bf16.msra.mxu0 %v3873
        %3891 = vmatprep.subr.bf16.mxu0 0
        %3892 = vmatpush1.bf16.msra.mxu0 %v3874
        %3893 = vmatprep.subr.bf16.mxu0 0
        %3894 = vmatpush1.bf16.msra.mxu0 %v3875
        %3895 = vmatprep.subr.bf16.mxu0 0
        %3896 = vmatpush1.bf16.msra.mxu0 %v3876
        %3897 = vmatprep.subr.bf16.mxu0 0
        %3898 = vmatpush1.bf16.msra.mxu0 %v3877
        %3899 = vmatprep.subr.bf16.mxu0 0
        %3900 = vmatpush1.bf16.msra.mxu0 %v3878
        %3901 = vmatprep.subr.bf16.mxu0 0
        %3902 = vmatpush1.bf16.msra.mxu0 %v3879
        %3903 = vmatprep.subr.bf16.mxu0 0
        %3904 = vmatpush1.bf16.msra.mxu0 %v3880
        %3905 = vmatprep.subr.bf16.mxu0 0
        %3906 = vmatpush1.bf16.msra.mxu0 0
        %3907 = vmatprep.subr.bf16.mxu0 0
        %3908 = vmatpush1.bf16.msra.mxu0 0
        %3909 = vmatprep.subr.bf16.mxu0 0
        %3910 = vmatpush1.bf16.msra.mxu0 0
        %3911 = vmatprep.subr.bf16.mxu0 0
        %3912 = vmatpush1.bf16.msra.mxu0 0
        %3913 = vmatprep.subr.bf16.mxu0 0
        %3914 = vmatpush1.bf16.msra.mxu0 0
        %3915 = vmatprep.subr.bf16.mxu0 0
        %3916 = vmatpush1.bf16.msra.mxu0 0
        %3917 = vmatprep.subr.bf16.mxu0 0
        %3918 = vmatpush1.bf16.msra.mxu0 0
        %3919 = vmatprep.subr.bf16.mxu0 0
        %3920 = vmatpush1.bf16.msra.mxu0 0
        %3921 = vmatprep.mubr.bf16.mxu0 0
        %3922 = vmatmul.mubr.bf16.gmra.mrb[0].mxu0 %v3794
        %v3923 = vpop.f32.mrb[0].mxu0
        %v3924 = vadd.f32 0.0, %v3923
        %v3925 = vpop.f32.mrb[0].mxu0
        %v3926 = vpop.f32.mrb[0].mxu0
        %v3927 = vadd.f32 0.0, %v3926
        %v3928 = vpop.f32.mrb[0].mxu0
        %3929 = vmatprep.mubr.bf16.mxu0 0
        %3930 = vmatmul.mubr.bf16.gmra.mrb[0].mxu0 %v3796
        %v3931 = vpop.f32.mrb[0].mxu0
        %v3932 = vadd.f32 0.0, %v3931
        %v3933 = vpop.f32.mrb[0].mxu0
        %v3934 = vpop.f32.mrb[0].mxu0
        %v3935 = vadd.f32 0.0, %v3934
        %v3936 = vpop.f32.mrb[0].mxu0
        %3937 = vmatprep.mubr.bf16.mxu0 0
        %3938 = vmatmul.mubr.bf16.gmra.mrb[0].mxu0 %v3798
        %v3939 = vpop.f32.mrb[0].mxu0
        %v3940 = vadd.f32 0.0, %v3939
        %v3941 = vpop.f32.mrb[0].mxu0
        %v3942 = vpop.f32.mrb[0].mxu0
        %v3943 = vadd.f32 0.0, %v3942
        %v3944 = vpop.f32.mrb[0].mxu0
        %3945 = vmatprep.mubr.bf16.mxu0 0
        %3946 = vmatmul.mubr.bf16.gmra.mrb[0].mxu0 %v3800
        %v3947 = vpop.f32.mrb[0].mxu0
        %v3948 = vadd.f32 0.0, %v3947
        %v3949 = vpop.f32.mrb[0].mxu0
        %v3950 = vpop.f32.mrb[0].mxu0
        %v3951 = vadd.f32 0.0, %v3950
        %v3952 = vpop.f32.mrb[0].mxu0
        %3953 = vmatprep.mubr.bf16.mxu0 0
        %3954 = vmatmul.mubr.bf16.gmra.mrb[0].mxu0 %v3802
        %v3955 = vpop.f32.mrb[0].mxu0
        %v3956 = vadd.f32 0.0, %v3955
        %v3957 = vpop.f32.mrb[0].mxu0
        %v3958 = vpop.f32.mrb[0].mxu0
        %v3959 = vadd.f32 0.0, %v3958
        %v3960 = vpop.f32.mrb[0].mxu0
        %3961 = vmatprep.mubr.bf16.mxu0 0
        %3962 = vmatmul.mubr.bf16.gmra.mrb[0].mxu0 %v3804
        %v3963 = vpop.f32.mrb[0].mxu0
        %v3964 = vadd.f32 0.0, %v3963
        %v3965 = vpop.f32.mrb[0].mxu0
        %v3966 = vpop.f32.mrb[0].mxu0
        %v3967 = vadd.f32 0.0, %v3966
        %v3968 = vpop.f32.mrb[0].mxu0
        %3969 = vmatprep.mubr.bf16.mxu0 0
        %3970 = vmatmul.mubr.bf16.gmra.mrb[0].mxu0 %v3806
        %v3971 = vpop.f32.mrb[0].mxu0
        %v3972 = vadd.f32 0.0, %v3971
        %v3973 = vpop.f32.mrb[0].mxu0
        %v3974 = vpop.f32.mrb[0].mxu0
        %v3975 = vadd.f32 0.0, %v3974
        %v3976 = vpop.f32.mrb[0].mxu0
        %3977 = vmatprep.mubr.bf16.mxu0 0
        %3978 = vmatmul.mubr.bf16.gmra.mrb[0].mxu0 %v3808
        %v3979 = vpop.f32.mrb[0].mxu0
        %v3980 = vadd.f32 0.0, %v3979
        %v3981 = vpop.f32.mrb[0].mxu0
        %v3982 = vpop.f32.mrb[0].mxu0
        %v3983 = vadd.f32 0.0, %v3982
        %v3984 = vpop.f32.mrb[0].mxu0
        %3985 = vmatprep.mubr.bf16.mxu0 0
        %3986 = vmatmul.mubr.bf16.gmra.mrb[0].mxu0 %v3810
        %v3987 = vpop.f32.mrb[0].mxu0
        %v3988 = vadd.f32 0.0, %v3987
        %v3989 = vpop.f32.mrb[0].mxu0
        %v3990 = vpop.f32.mrb[0].mxu0
        %v3991 = vadd.f32 0.0, %v3990
        %v3992 = vpop.f32.mrb[0].mxu0
        %3993 = vmatprep.mubr.bf16.mxu0 0
        %3994 = vmatmul.mubr.bf16.gmra.mrb[0].mxu0 %v3812
        %v3995 = vpop.f32.mrb[0].mxu0
        %v3996 = vadd.f32 0.0, %v3995
        %v3997 = vpop.f32.mrb[0].mxu0
        %v3998 = vpop.f32.mrb[0].mxu0
        %v3999 = vadd.f32 0.0, %v3998
        %v4000 = vpop.f32.mrb[0].mxu0
        %4001 = vmatprep.mubr.bf16.mxu0 0
        %4002 = vmatmul.mubr.bf16.gmra.mrb[0].mxu0 %v3814
        %v4003 = vpop.f32.mrb[0].mxu0
        %v4004 = vadd.f32 0.0, %v4003
        %v4005 = vpop.f32.mrb[0].mxu0
        %v4006 = vpop.f32.mrb[0].mxu0
        %v4007 = vadd.f32 0.0, %v4006
        %v4008 = vpop.f32.mrb[0].mxu0
        %4009 = vmatprep.mubr.bf16.mxu0 0
        %4010 = vmatmul.mubr.bf16.gmra.mrb[0].mxu0 %v3816
        %v4011 = vpop.f32.mrb[0].mxu0
        %v4012 = vadd.f32 0.0, %v4011
        %v4013 = vpop.f32.mrb[0].mxu0
        %v4014 = vpop.f32.mrb[0].mxu0
        %v4015 = vadd.f32 0.0, %v4014
        %v4016 = vpop.f32.mrb[0].mxu0
        %4017 = vmatprep.mubr.bf16.mxu0 0
        %4018 = vmatmul.mubr.bf16.gmra.mrb[0].mxu0 %v3818
        %v4019 = vpop.f32.mrb[0].mxu0
        %v4020 = vadd.f32 0.0, %v4019
        %v4021 = vpop.f32.mrb[0].mxu0
        %v4022 = vpop.f32.mrb[0].mxu0
        %v4023 = vadd.f32 0.0, %v4022
        %v4024 = vpop.f32.mrb[0].mxu0
        %4025 = vmatprep.mubr.bf16.mxu0 0
        %4026 = vmatmul.mubr.bf16.gmra.mrb[0].mxu0 %v3820
        %v4027 = vpop.f32.mrb[0].mxu0
        %v4028 = vadd.f32 0.0, %v4027
        %v4029 = vpop.f32.mrb[0].mxu0
        %v4030 = vpop.f32.mrb[0].mxu0
        %v4031 = vadd.f32 0.0, %v4030
        %v4032 = vpop.f32.mrb[0].mxu0
        %4033 = vmatprep.mubr.bf16.mxu0 0
        %4034 = vmatmul.mubr.bf16.gmra.mrb[0].mxu0 %v3822
        %v4035 = vpop.f32.mrb[0].mxu0
        %v4036 = vadd.f32 0.0, %v4035
        %v4037 = vpop.f32.mrb[0].mxu0
        %v4038 = vpop.f32.mrb[0].mxu0
        %v4039 = vadd.f32 0.0, %v4038
        %v4040 = vpop.f32.mrb[0].mxu0
        %4041 = vmatprep.mubr.bf16.mxu0 0
        %4042 = vmatmul.mubr.bf16.gmra.mrb[0].mxu0 %v3824
        %v4043 = vpop.f32.mrb[0].mxu0
        %v4044 = vadd.f32 0.0, %v4043
        %v4045 = vpop.f32.mrb[0].mxu0
        %v4046 = vpop.f32.mrb[0].mxu0
        %v4047 = vadd.f32 0.0, %v4046
        %v4048 = vpop.f32.mrb[0].mxu0
        %4049 = vdwg.mxu0
        %v4050 = vadd.f32 %v3725, %v3924
        %v4051 = vadd.f32 %v3726, %v3927
        %v4052 = vadd.f32 %v3727, %v3932
        %v4053 = vadd.f32 %v3728, %v3935
        %v4054 = vadd.f32 %v3729, %v3940
        %v4055 = vadd.f32 %v3730, %v3943
        %v4056 = vadd.f32 %v3731, %v3948
        %v4057 = vadd.f32 %v3732, %v3951
        %v4058 = vadd.f32 %v3733, %v3956
        %v4059 = vadd.f32 %v3734, %v3959
        %v4060 = vadd.f32 %v3735, %v3964
        %v4061 = vadd.f32 %v3736, %v3967
        %v4062 = vadd.f32 %v3737, %v3972
        %v4063 = vadd.f32 %v3738, %v3975
        %v4064 = vadd.f32 %v3739, %v3980
        %v4065 = vadd.f32 %v3740, %v3983
        %v4066 = vadd.f32 %v3741, %v3988
        %v4067 = vadd.f32 %v3742, %v3991
        %v4068 = vadd.f32 %v3743, %v3996
        %v4069 = vadd.f32 %v3744, %v3999
        %v4070 = vadd.f32 %v3745, %v4004
        %v4071 = vadd.f32 %v3746, %v4007
        %v4072 = vadd.f32 %v3747, %v4012
        %v4073 = vadd.f32 %v3748, %v4015
        %v4074 = vadd.f32 %v3749, %v4020
        %v4075 = vadd.f32 %v3750, %v4023
        %v4076 = vadd.f32 %v3751, %v4028
        %v4077 = vadd.f32 %v3752, %v4031
        %v4078 = vadd.f32 %v3753, %v4036
        %v4079 = vadd.f32 %v3754, %v4039
        %v4080 = vadd.f32 %v3755, %v4044
        %v4081 = vadd.f32 %v3756, %v4047
        %v4082 = vadd.s32 %v1362, 1
        %v4083 = vadd.s32 %v1363, 1
        %v4084 = vadd.s32 %v1364, 1
        %v4085 = vadd.s32 %v1365, 1
        %v4086 = vadd.s32 %v1366, 1
        %v4087 = vadd.s32 %v1367, 1
        %v4088 = vadd.s32 %v1368, 1
        %v4089 = vadd.s32 %v1369, 1
        %v4090 = vadd.s32 %v1370, 1
        %v4091 = vadd.s32 %v1371, 1
        %v4092 = vadd.s32 %v1372, 1
        %v4093 = vadd.s32 %v1373, 1
        %v4094 = vadd.s32 %v1374, 1
        %v4095 = vadd.s32 %v1375, 1
        %v4096 = vadd.s32 %v1376, 1
        %v4097 = vadd.s32 %v1377, 1
        %v4098 = vadd.s32 %v1378, 1
        %v4099 = vadd.s32 %v1379, 1
        %v4100 = vadd.s32 %v1380, 1
        %v4101 = vadd.s32 %v1381, 1
        %v4102 = vadd.s32 %v1382, 1
        %v4103 = vadd.s32 %v1383, 1
        %v4104 = vadd.s32 %v1384, 1
        %v4105 = vadd.s32 %v1385, 1
        %v4106 = vadd.s32 %v1386, 1
        %v4107 = vadd.s32 %v1387, 1
        %v4108 = vadd.s32 %v1388, 1
        %v4109 = vadd.s32 %v1389, 1
        %v4110 = vadd.s32 %v1390, 1
        %v4111 = vadd.s32 %v1391, 1
        %v4112 = vadd.s32 %v1392, 1
        %v4113 = vadd.s32 %v1393, 1
        %vm4114 = vcmp.ge.s32.totalorder %v4082, 0
        %vm4115 = vcmp.ge.s32.totalorder %v4083, 0
        %vm4116 = vcmp.ge.s32.totalorder %v4084, 0
        %vm4117 = vcmp.ge.s32.totalorder %v4085, 0
        %vm4118 = vcmp.ge.s32.totalorder %v4086, 0
        %vm4119 = vcmp.ge.s32.totalorder %v4087, 0
        %vm4120 = vcmp.ge.s32.totalorder %v4088, 0
        %vm4121 = vcmp.ge.s32.totalorder %v4089, 0
        %vm4122 = vcmp.ge.s32.totalorder %v4090, 0
        %vm4123 = vcmp.ge.s32.totalorder %v4091, 0
        %vm4124 = vcmp.ge.s32.totalorder %v4092, 0
        %vm4125 = vcmp.ge.s32.totalorder %v4093, 0
        %vm4126 = vcmp.ge.s32.totalorder %v4094, 0
        %vm4127 = vcmp.ge.s32.totalorder %v4095, 0
        %vm4128 = vcmp.ge.s32.totalorder %v4096, 0
        %vm4129 = vcmp.ge.s32.totalorder %v4097, 0
        %vm4130 = vcmp.ge.s32.totalorder %v4098, 0
        %vm4131 = vcmp.ge.s32.totalorder %v4099, 0
        %vm4132 = vcmp.ge.s32.totalorder %v4100, 0
        %vm4133 = vcmp.ge.s32.totalorder %v4101, 0
        %vm4134 = vcmp.ge.s32.totalorder %v4102, 0
        %vm4135 = vcmp.ge.s32.totalorder %v4103, 0
        %vm4136 = vcmp.ge.s32.totalorder %v4104, 0
        %vm4137 = vcmp.ge.s32.totalorder %v4105, 0
        %vm4138 = vcmp.ge.s32.totalorder %v4106, 0
        %vm4139 = vcmp.ge.s32.totalorder %v4107, 0
        %vm4140 = vcmp.ge.s32.totalorder %v4108, 0
        %vm4141 = vcmp.ge.s32.totalorder %v4109, 0
        %vm4142 = vcmp.ge.s32.totalorder %v4110, 0
        %vm4143 = vcmp.ge.s32.totalorder %v4111, 0
        %vm4144 = vcmp.ge.s32.totalorder %v4112, 0
        %vm4145 = vcmp.ge.s32.totalorder %v4113, 0
        %vm4146 = vcmp.lt.s32.totalorder %v4082, 16
        %vm4147 = vcmp.lt.s32.totalorder %v4083, 16
        %vm4148 = vcmp.lt.s32.totalorder %v4084, 16
        %vm4149 = vcmp.lt.s32.totalorder %v4085, 16
        %vm4150 = vcmp.lt.s32.totalorder %v4086, 16
        %vm4151 = vcmp.lt.s32.totalorder %v4087, 16
        %vm4152 = vcmp.lt.s32.totalorder %v4088, 16
        %vm4153 = vcmp.lt.s32.totalorder %v4089, 16
        %vm4154 = vcmp.lt.s32.totalorder %v4090, 16
        %vm4155 = vcmp.lt.s32.totalorder %v4091, 16
        %vm4156 = vcmp.lt.s32.totalorder %v4092, 16
        %vm4157 = vcmp.lt.s32.totalorder %v4093, 16
        %vm4158 = vcmp.lt.s32.totalorder %v4094, 16
        %vm4159 = vcmp.lt.s32.totalorder %v4095, 16
        %vm4160 = vcmp.lt.s32.totalorder %v4096, 16
        %vm4161 = vcmp.lt.s32.totalorder %v4097, 16
        %vm4162 = vcmp.lt.s32.totalorder %v4098, 16
        %vm4163 = vcmp.lt.s32.totalorder %v4099, 16
        %vm4164 = vcmp.lt.s32.totalorder %v4100, 16
        %vm4165 = vcmp.lt.s32.totalorder %v4101, 16
        %vm4166 = vcmp.lt.s32.totalorder %v4102, 16
        %vm4167 = vcmp.lt.s32.totalorder %v4103, 16
        %vm4168 = vcmp.lt.s32.totalorder %v4104, 16
        %vm4169 = vcmp.lt.s32.totalorder %v4105, 16
        %vm4170 = vcmp.lt.s32.totalorder %v4106, 16
        %vm4171 = vcmp.lt.s32.totalorder %v4107, 16
        %vm4172 = vcmp.lt.s32.totalorder %v4108, 16
        %vm4173 = vcmp.lt.s32.totalorder %v4109, 16
        %vm4174 = vcmp.lt.s32.totalorder %v4110, 16
        %vm4175 = vcmp.lt.s32.totalorder %v4111, 16
        %vm4176 = vcmp.lt.s32.totalorder %v4112, 16
        %vm4177 = vcmp.lt.s32.totalorder %v4113, 16
        %vm4178 = vmand %vm4114, %vm4146
        %vm4179 = vmand %vm4115, %vm4147
        %vm4180 = vmand %vm4116, %vm4148
        %vm4181 = vmand %vm4117, %vm4149
        %vm4182 = vmand %vm4118, %vm4150
        %vm4183 = vmand %vm4119, %vm4151
        %vm4184 = vmand %vm4120, %vm4152
        %vm4185 = vmand %vm4121, %vm4153
        %vm4186 = vmand %vm4122, %vm4154
        %vm4187 = vmand %vm4123, %vm4155
        %vm4188 = vmand %vm4124, %vm4156
        %vm4189 = vmand %vm4125, %vm4157
        %vm4190 = vmand %vm4126, %vm4158
        %vm4191 = vmand %vm4127, %vm4159
        %vm4192 = vmand %vm4128, %vm4160
        %vm4193 = vmand %vm4129, %vm4161
        %vm4194 = vmand %vm4130, %vm4162
        %vm4195 = vmand %vm4131, %vm4163
        %vm4196 = vmand %vm4132, %vm4164
        %vm4197 = vmand %vm4133, %vm4165
        %vm4198 = vmand %vm4134, %vm4166
        %vm4199 = vmand %vm4135, %vm4167
        %vm4200 = vmand %vm4136, %vm4168
        %vm4201 = vmand %vm4137, %vm4169
        %vm4202 = vmand %vm4138, %vm4170
        %vm4203 = vmand %vm4139, %vm4171
        %vm4204 = vmand %vm4140, %vm4172
        %vm4205 = vmand %vm4141, %vm4173
        %vm4206 = vmand %vm4142, %vm4174
        %vm4207 = vmand %vm4143, %vm4175
        %vm4208 = vmand %vm4144, %vm4176
        %vm4209 = vmand %vm4145, %vm4177
        %v4210 = vld [vmem:[#allocation2 + $0x80] sm:$0x1f]
        %v4211 = vsel %vm4178, 1, 0
        %v4212 = vsel %vm4179, 1, 0
        %v4213 = vsel %vm4180, 1, 0
        %v4214 = vsel %vm4181, 1, 0
        %v4215 = vsel %vm4182, 1, 0
        %v4216 = vsel %vm4183, 1, 0
        %v4217 = vsel %vm4184, 1, 0
        %v4218 = vsel %vm4185, 1, 0
        %v4219 = vsel %vm4186, 1, 0
        %v4220 = vsel %vm4187, 1, 0
        %v4221 = vsel %vm4188, 1, 0
        %v4222 = vsel %vm4189, 1, 0
        %v4223 = vsel %vm4190, 1, 0
        %v4224 = vsel %vm4191, 1, 0
        %v4225 = vsel %vm4192, 1, 0
        %v4226 = vsel %vm4193, 1, 0
        %v4227 = vsel %vm4194, 1, 0
        %v4228 = vsel %vm4195, 1, 0
        %v4229 = vsel %vm4196, 1, 0
        %v4230 = vsel %vm4197, 1, 0
        %v4231 = vsel %vm4198, 1, 0
        %v4232 = vsel %vm4199, 1, 0
        %v4233 = vsel %vm4200, 1, 0
        %v4234 = vsel %vm4201, 1, 0
        %v4235 = vsel %vm4202, 1, 0
        %v4236 = vsel %vm4203, 1, 0
        %v4237 = vsel %vm4204, 1, 0
        %v4238 = vsel %vm4205, 1, 0
        %v4239 = vsel %vm4206, 1, 0
        %v4240 = vsel %vm4207, 1, 0
        %v4241 = vsel %vm4208, 1, 0
        %v4242 = vsel %vm4209, 1, 0
        %vm4243 = vcmp.eq.s32.totalorder %v4211, 1
        %vm4244 = vcmp.eq.s32.totalorder %v4212, 1
        %vm4245 = vcmp.eq.s32.totalorder %v4213, 1
        %vm4246 = vcmp.eq.s32.totalorder %v4214, 1
        %vm4247 = vcmp.eq.s32.totalorder %v4215, 1
        %vm4248 = vcmp.eq.s32.totalorder %v4216, 1
        %vm4249 = vcmp.eq.s32.totalorder %v4217, 1
        %vm4250 = vcmp.eq.s32.totalorder %v4218, 1
        %vm4251 = vcmp.eq.s32.totalorder %v4219, 1
        %vm4252 = vcmp.eq.s32.totalorder %v4220, 1
        %vm4253 = vcmp.eq.s32.totalorder %v4221, 1
        %vm4254 = vcmp.eq.s32.totalorder %v4222, 1
        %vm4255 = vcmp.eq.s32.totalorder %v4223, 1
        %vm4256 = vcmp.eq.s32.totalorder %v4224, 1
        %vm4257 = vcmp.eq.s32.totalorder %v4225, 1
        %vm4258 = vcmp.eq.s32.totalorder %v4226, 1
        %vm4259 = vcmp.eq.s32.totalorder %v4227, 1
        %vm4260 = vcmp.eq.s32.totalorder %v4228, 1
        %vm4261 = vcmp.eq.s32.totalorder %v4229, 1
        %vm4262 = vcmp.eq.s32.totalorder %v4230, 1
        %vm4263 = vcmp.eq.s32.totalorder %v4231, 1
        %vm4264 = vcmp.eq.s32.totalorder %v4232, 1
        %vm4265 = vcmp.eq.s32.totalorder %v4233, 1
        %vm4266 = vcmp.eq.s32.totalorder %v4234, 1
        %vm4267 = vcmp.eq.s32.totalorder %v4235, 1
        %vm4268 = vcmp.eq.s32.totalorder %v4236, 1
        %vm4269 = vcmp.eq.s32.totalorder %v4237, 1
        %vm4270 = vcmp.eq.s32.totalorder %v4238, 1
        %vm4271 = vcmp.eq.s32.totalorder %v4239, 1
        %vm4272 = vcmp.eq.s32.totalorder %v4240, 1
        %vm4273 = vcmp.eq.s32.totalorder %v4241, 1
        %vm4274 = vcmp.eq.s32.totalorder %v4242, 1
        %vm4275 = vmpackc.low %vm4243, %vm4243
        %vm4276 = vmpackc.low %vm4244, %vm4244
        %vm4277 = vmpackc.low %vm4245, %vm4245
        %vm4278 = vmpackc.low %vm4246, %vm4246
        %vm4279 = vmpackc.low %vm4247, %vm4247
        %vm4280 = vmpackc.low %vm4248, %vm4248
        %vm4281 = vmpackc.low %vm4249, %vm4249
        %vm4282 = vmpackc.low %vm4250, %vm4250
        %vm4283 = vmpackc.low %vm4251, %vm4251
        %vm4284 = vmpackc.low %vm4252, %vm4252
        %vm4285 = vmpackc.low %vm4253, %vm4253
        %vm4286 = vmpackc.low %vm4254, %vm4254
        %vm4287 = vmpackc.low %vm4255, %vm4255
        %vm4288 = vmpackc.low %vm4256, %vm4256
        %vm4289 = vmpackc.low %vm4257, %vm4257
        %vm4290 = vmpackc.low %vm4258, %vm4258
        %vm4291 = vmpackc.low %vm4259, %vm4259
        %vm4292 = vmpackc.low %vm4260, %vm4260
        %vm4293 = vmpackc.low %vm4261, %vm4261
        %vm4294 = vmpackc.low %vm4262, %vm4262
        %vm4295 = vmpackc.low %vm4263, %vm4263
        %vm4296 = vmpackc.low %vm4264, %vm4264
        %vm4297 = vmpackc.low %vm4265, %vm4265
        %vm4298 = vmpackc.low %vm4266, %vm4266
        %vm4299 = vmpackc.low %vm4267, %vm4267
        %vm4300 = vmpackc.low %vm4268, %vm4268
        %vm4301 = vmpackc.low %vm4269, %vm4269
        %vm4302 = vmpackc.low %vm4270, %vm4270
        %vm4303 = vmpackc.low %vm4271, %vm4271
        %vm4304 = vmpackc.low %vm4272, %vm4272
        %vm4305 = vmpackc.low %vm4273, %vm4273
        %vm4306 = vmpackc.low %vm4274, %vm4274
        %v4307 = vsel %vm4275, 65537, 0
        %v4308 = vsel %vm4276, 65537, 0
        %v4309 = vsel %vm4277, 65537, 0
        %v4310 = vsel %vm4278, 65537, 0
        %v4311 = vsel %vm4279, 65537, 0
        %v4312 = vsel %vm4280, 65537, 0
        %v4313 = vsel %vm4281, 65537, 0
        %v4314 = vsel %vm4282, 65537, 0
        %v4315 = vsel %vm4283, 65537, 0
        %v4316 = vsel %vm4284, 65537, 0
        %v4317 = vsel %vm4285, 65537, 0
        %v4318 = vsel %vm4286, 65537, 0
        %v4319 = vsel %vm4287, 65537, 0
        %v4320 = vsel %vm4288, 65537, 0
        %v4321 = vsel %vm4289, 65537, 0
        %v4322 = vsel %vm4290, 65537, 0
        %v4323 = vsel %vm4291, 65537, 0
        %v4324 = vsel %vm4292, 65537, 0
        %v4325 = vsel %vm4293, 65537, 0
        %v4326 = vsel %vm4294, 65537, 0
        %v4327 = vsel %vm4295, 65537, 0
        %v4328 = vsel %vm4296, 65537, 0
        %v4329 = vsel %vm4297, 65537, 0
        %v4330 = vsel %vm4298, 65537, 0
        %v4331 = vsel %vm4299, 65537, 0
        %v4332 = vsel %vm4300, 65537, 0
        %v4333 = vsel %vm4301, 65537, 0
        %v4334 = vsel %vm4302, 65537, 0
        %v4335 = vsel %vm4303, 65537, 0
        %v4336 = vsel %vm4304, 65537, 0
        %v4337 = vsel %vm4305, 65537, 0
        %v4338 = vsel %vm4306, 65537, 0
        %v4339 = vunpack.c.l.b16 %v4307
        %v4340 = vunpack.c.l.b16 %v4308
        %v4341 = vunpack.c.l.b16 %v4309
        %v4342 = vunpack.c.l.b16 %v4310
        %v4343 = vunpack.c.l.b16 %v4311
        %v4344 = vunpack.c.l.b16 %v4312
        %v4345 = vunpack.c.l.b16 %v4313
        %v4346 = vunpack.c.l.b16 %v4314
        %v4347 = vunpack.c.l.b16 %v4315
        %v4348 = vunpack.c.l.b16 %v4316
        %v4349 = vunpack.c.l.b16 %v4317
        %v4350 = vunpack.c.l.b16 %v4318
        %v4351 = vunpack.c.l.b16 %v4319
        %v4352 = vunpack.c.l.b16 %v4320
        %v4353 = vunpack.c.l.b16 %v4321
        %v4354 = vunpack.c.l.b16 %v4322
        %v4355 = vunpack.c.l.b16 %v4323
        %v4356 = vunpack.c.l.b16 %v4324
        %v4357 = vunpack.c.l.b16 %v4325
        %v4358 = vunpack.c.l.b16 %v4326
        %v4359 = vunpack.c.l.b16 %v4327
        %v4360 = vunpack.c.l.b16 %v4328
        %v4361 = vunpack.c.l.b16 %v4329
        %v4362 = vunpack.c.l.b16 %v4330
        %v4363 = vunpack.c.l.b16 %v4331
        %v4364 = vunpack.c.l.b16 %v4332
        %v4365 = vunpack.c.l.b16 %v4333
        %v4366 = vunpack.c.l.b16 %v4334
        %v4367 = vunpack.c.l.b16 %v4335
        %v4368 = vunpack.c.l.b16 %v4336
        %v4369 = vunpack.c.l.b16 %v4337
        %v4370 = vunpack.c.l.b16 %v4338
        %v4371 = vpack.c.b16 %v4340, %v4339
        %v4372 = vpack.c.b16 %v4342, %v4341
        %v4373 = vpack.c.b16 %v4344, %v4343
        %v4374 = vpack.c.b16 %v4346, %v4345
        %v4375 = vpack.c.b16 %v4348, %v4347
        %v4376 = vpack.c.b16 %v4350, %v4349
        %v4377 = vpack.c.b16 %v4352, %v4351
        %v4378 = vpack.c.b16 %v4354, %v4353
        %v4379 = vpack.c.b16 %v4356, %v4355
        %v4380 = vpack.c.b16 %v4358, %v4357
        %v4381 = vpack.c.b16 %v4360, %v4359
        %v4382 = vpack.c.b16 %v4362, %v4361
        %v4383 = vpack.c.b16 %v4364, %v4363
        %v4384 = vpack.c.b16 %v4366, %v4365
        %v4385 = vpack.c.b16 %v4368, %v4367
        %v4386 = vpack.c.b16 %v4370, %v4369
        %v4388 = vshrl.u32 %v4371, 16
        %v4390 = vrot.slane %v4388, 3
        %v4391 = vshll.u32 %v4371, 16
        %v4393 = vrot.slane %v4391, 4
        %v4394 = vor.u32 %v4390, %v4393
        %v4396 = vshrl.u32 %v4372, 16
        %v4398 = vrot.slane %v4396, 3
        %v4399 = vshll.u32 %v4372, 16
        %v4401 = vrot.slane %v4399, 4
        %v4402 = vor.u32 %v4398, %v4401
        %v4403 = vsel %vm1946, %v4394, %v4402
        %v4405 = vshrl.u32 %v4373, 16
        %v4407 = vrot.slane %v4405, 3
        %v4408 = vshll.u32 %v4373, 16
        %v4410 = vrot.slane %v4408, 4
        %v4411 = vor.u32 %v4407, %v4410
        %v4412 = vsel %vm1946, %v4402, %v4411
        %v4414 = vshrl.u32 %v4374, 16
        %v4416 = vrot.slane %v4414, 3
        %v4417 = vshll.u32 %v4374, 16
        %v4419 = vrot.slane %v4417, 4
        %v4420 = vor.u32 %v4416, %v4419
        %v4421 = vsel %vm1946, %v4411, %v4420
        %v4423 = vshrl.u32 %v4375, 16
        %v4425 = vrot.slane %v4423, 3
        %v4426 = vshll.u32 %v4375, 16
        %v4428 = vrot.slane %v4426, 4
        %v4429 = vor.u32 %v4425, %v4428
        %v4430 = vsel %vm1946, %v4420, %v4429
        %v4432 = vshrl.u32 %v4376, 16
        %v4434 = vrot.slane %v4432, 3
        %v4435 = vshll.u32 %v4376, 16
        %v4437 = vrot.slane %v4435, 4
        %v4438 = vor.u32 %v4434, %v4437
        %v4439 = vsel %vm1946, %v4429, %v4438
        %v4441 = vshrl.u32 %v4377, 16
        %v4443 = vrot.slane %v4441, 3
        %v4444 = vshll.u32 %v4377, 16
        %v4446 = vrot.slane %v4444, 4
        %v4447 = vor.u32 %v4443, %v4446
        %v4448 = vsel %vm1946, %v4438, %v4447
        %v4450 = vshrl.u32 %v4378, 16
        %v4452 = vrot.slane %v4450, 3
        %v4453 = vshll.u32 %v4378, 16
        %v4455 = vrot.slane %v4453, 4
        %v4456 = vor.u32 %v4452, %v4455
        %v4457 = vsel %vm1946, %v4447, %v4456
        %v4459 = vshrl.u32 %v4379, 16
        %v4461 = vrot.slane %v4459, 3
        %v4462 = vshll.u32 %v4379, 16
        %v4464 = vrot.slane %v4462, 4
        %v4465 = vor.u32 %v4461, %v4464
        %v4466 = vsel %vm1946, %v4456, %v4465
        %v4468 = vshrl.u32 %v4380, 16
        %v4470 = vrot.slane %v4468, 3
        %v4471 = vshll.u32 %v4380, 16
        %v4473 = vrot.slane %v4471, 4
        %v4474 = vor.u32 %v4470, %v4473
        %v4475 = vsel %vm1946, %v4465, %v4474
        %v4477 = vshrl.u32 %v4381, 16
        %v4479 = vrot.slane %v4477, 3
        %v4480 = vshll.u32 %v4381, 16
        %v4482 = vrot.slane %v4480, 4
        %v4483 = vor.u32 %v4479, %v4482
        %v4484 = vsel %vm1946, %v4474, %v4483
        %v4486 = vshrl.u32 %v4382, 16
        %v4488 = vrot.slane %v4486, 3
        %v4489 = vshll.u32 %v4382, 16
        %v4491 = vrot.slane %v4489, 4
        %v4492 = vor.u32 %v4488, %v4491
        %v4493 = vsel %vm1946, %v4483, %v4492
        %v4495 = vshrl.u32 %v4383, 16
        %v4497 = vrot.slane %v4495, 3
        %v4498 = vshll.u32 %v4383, 16
        %v4500 = vrot.slane %v4498, 4
        %v4501 = vor.u32 %v4497, %v4500
        %v4502 = vsel %vm1946, %v4492, %v4501
        %v4504 = vshrl.u32 %v4384, 16
        %v4506 = vrot.slane %v4504, 3
        %v4507 = vshll.u32 %v4384, 16
        %v4509 = vrot.slane %v4507, 4
        %v4510 = vor.u32 %v4506, %v4509
        %v4511 = vsel %vm1946, %v4501, %v4510
        %v4513 = vshrl.u32 %v4385, 16
        %v4515 = vrot.slane %v4513, 3
        %v4516 = vshll.u32 %v4385, 16
        %v4518 = vrot.slane %v4516, 4
        %v4519 = vor.u32 %v4515, %v4518
        %v4520 = vsel %vm1946, %v4510, %v4519
        %v4522 = vshrl.u32 %v4386, 16
        %v4524 = vrot.slane %v4522, 3
        %v4525 = vshll.u32 %v4386, 16
        %v4527 = vrot.slane %v4525, 4
        %v4528 = vor.u32 %v4524, %v4527
        %v4529 = vsel %vm1946, %v4519, %v4528
        %vm4530 = vcmp.ne.s16.totalorder %v4394, 0
        %vm4531 = vcmp.ne.s16.totalorder %v4403, 0
        %vm4532 = vcmp.ne.s16.totalorder %v4412, 0
        %vm4533 = vcmp.ne.s16.totalorder %v4421, 0
        %vm4534 = vcmp.ne.s16.totalorder %v4430, 0
        %vm4535 = vcmp.ne.s16.totalorder %v4439, 0
        %vm4536 = vcmp.ne.s16.totalorder %v4448, 0
        %vm4537 = vcmp.ne.s16.totalorder %v4457, 0
        %vm4538 = vcmp.ne.s16.totalorder %v4466, 0
        %vm4539 = vcmp.ne.s16.totalorder %v4475, 0
        %vm4540 = vcmp.ne.s16.totalorder %v4484, 0
        %vm4541 = vcmp.ne.s16.totalorder %v4493, 0
        %vm4542 = vcmp.ne.s16.totalorder %v4502, 0
        %vm4543 = vcmp.ne.s16.totalorder %v4511, 0
        %vm4544 = vcmp.ne.s16.totalorder %v4520, 0
        %vm4545 = vcmp.ne.s16.totalorder %v4529, 0
        %vm4546 = vcmp.ne.s16.totalorder %v4528, 0
        %v4547 = vsel %vm4530, %v3161, 0
        %v4548 = vsel %vm4531, %v1523, 0
        %v4549 = vsel %vm4532, %v1524, 0
        %v4550 = vsel %vm4533, %v1525, 0
        %v4551 = vsel %vm4534, %v1526, 0
        %v4552 = vsel %vm4535, %v1527, 0
        %v4553 = vsel %vm4536, %v1528, 0
        %v4554 = vsel %vm4537, %v1529, 0
        %v4555 = vsel %vm4538, %v1530, 0
        %v4556 = vsel %vm4539, %v1531, 0
        %v4557 = vsel %vm4540, %v1532, 0
        %v4558 = vsel %vm4541, %v1533, 0
        %v4559 = vsel %vm4542, %v1534, 0
        %v4560 = vsel %vm4543, %v1535, 0
        %v4561 = vsel %vm4544, %v1536, 0
        %v4562 = vsel %vm4545, %v1537, 0
        %v4563 = vsel %vm4546, %v4210, 0
        %s4564 = scalar_lea.vmem [#allocation12], 128
        %v4565 = vld [vmem:[%s4564] sm:$0xf]
        %v4566 = vld [vmem:[%s4564 + $0x4] sm:$0xf]
        %v4567 = vld [vmem:[%s4564 + $0x8] sm:$0xf]
        %v4568 = vld [vmem:[%s4564 + $0xc] sm:$0xf]
        %v4569 = vld [vmem:[%s4564 + $0x10] sm:$0xf]
        %v4570 = vld [vmem:[%s4564 + $0x14] sm:$0xf]
        %v4571 = vld [vmem:[%s4564 + $0x18] sm:$0xf]
        %v4572 = vld [vmem:[%s4564 + $0x1c] sm:$0xf]
        %v4573 = vld [vmem:[%s4564 + $0x20] sm:$0xf]
        %v4574 = vld [vmem:[%s4564 + $0x24] sm:$0xf]
        %v4575 = vld [vmem:[%s4564 + $0x28] sm:$0xf]
        %v4576 = vld [vmem:[%s4564 + $0x2c] sm:$0xf]
        %v4577 = vld [vmem:[%s4564 + $0x30] sm:$0xf]
        %v4578 = vld [vmem:[%s4564 + $0x34] sm:$0xf]
        %v4579 = vld [vmem:[%s4564 + $0x38] sm:$0xf]
        %v4580 = vld [vmem:[%s4564 + $0x3c] sm:$0xf]
        %v4582 = vshrl.u32 %v4547, 16
        %v4584 = vrot.slane %v4582, 4
        %v4585 = vshll.u32 %v4547, 16
        %v4587 = vrot.slane %v4585, 5
        %v4588 = vor.u32 %v4584, %v4587
        %v4590 = vshrl.u32 %v4548, 16
        %v4592 = vrot.slane %v4590, 4
        %v4593 = vshll.u32 %v4548, 16
        %v4595 = vrot.slane %v4593, 5
        %v4596 = vor.u32 %v4592, %v4595
        %v4597 = vsel %vm1715, %v4588, %v4596
        %v4599 = vshrl.u32 %v4549, 16
        %v4601 = vrot.slane %v4599, 4
        %v4602 = vshll.u32 %v4549, 16
        %v4604 = vrot.slane %v4602, 5
        %v4605 = vor.u32 %v4601, %v4604
        %v4606 = vsel %vm1715, %v4596, %v4605
        %v4608 = vshrl.u32 %v4550, 16
        %v4610 = vrot.slane %v4608, 4
        %v4611 = vshll.u32 %v4550, 16
        %v4613 = vrot.slane %v4611, 5
        %v4614 = vor.u32 %v4610, %v4613
        %v4615 = vsel %vm1715, %v4605, %v4614
        %v4617 = vshrl.u32 %v4551, 16
        %v4619 = vrot.slane %v4617, 4
        %v4620 = vshll.u32 %v4551, 16
        %v4622 = vrot.slane %v4620, 5
        %v4623 = vor.u32 %v4619, %v4622
        %v4624 = vsel %vm1715, %v4614, %v4623
        %v4626 = vshrl.u32 %v4552, 16
        %v4628 = vrot.slane %v4626, 4
        %v4629 = vshll.u32 %v4552, 16
        %v4631 = vrot.slane %v4629, 5
        %v4632 = vor.u32 %v4628, %v4631
        %v4633 = vsel %vm1715, %v4623, %v4632
        %v4635 = vshrl.u32 %v4553, 16
        %v4637 = vrot.slane %v4635, 4
        %v4638 = vshll.u32 %v4553, 16
        %v4640 = vrot.slane %v4638, 5
        %v4641 = vor.u32 %v4637, %v4640
        %v4642 = vsel %vm1715, %v4632, %v4641
        %v4644 = vshrl.u32 %v4554, 16
        %v4646 = vrot.slane %v4644, 4
        %v4647 = vshll.u32 %v4554, 16
        %v4649 = vrot.slane %v4647, 5
        %v4650 = vor.u32 %v4646, %v4649
        %v4651 = vsel %vm1715, %v4641, %v4650
        %v4653 = vshrl.u32 %v4555, 16
        %v4655 = vrot.slane %v4653, 4
        %v4656 = vshll.u32 %v4555, 16
        %v4658 = vrot.slane %v4656, 5
        %v4659 = vor.u32 %v4655, %v4658
        %v4660 = vsel %vm1715, %v4650, %v4659
        %v4662 = vshrl.u32 %v4556, 16
        %v4664 = vrot.slane %v4662, 4
        %v4665 = vshll.u32 %v4556, 16
        %v4667 = vrot.slane %v4665, 5
        %v4668 = vor.u32 %v4664, %v4667
        %v4669 = vsel %vm1715, %v4659, %v4668
        %v4671 = vshrl.u32 %v4557, 16
        %v4673 = vrot.slane %v4671, 4
        %v4674 = vshll.u32 %v4557, 16
        %v4676 = vrot.slane %v4674, 5
        %v4677 = vor.u32 %v4673, %v4676
        %v4678 = vsel %vm1715, %v4668, %v4677
        %v4680 = vshrl.u32 %v4558, 16
        %v4682 = vrot.slane %v4680, 4
        %v4683 = vshll.u32 %v4558, 16
        %v4685 = vrot.slane %v4683, 5
        %v4686 = vor.u32 %v4682, %v4685
        %v4687 = vsel %vm1715, %v4677, %v4686
        %v4689 = vshrl.u32 %v4559, 16
        %v4691 = vrot.slane %v4689, 4
        %v4692 = vshll.u32 %v4559, 16
        %v4694 = vrot.slane %v4692, 5
        %v4695 = vor.u32 %v4691, %v4694
        %v4696 = vsel %vm1715, %v4686, %v4695
        %v4698 = vshrl.u32 %v4560, 16
        %v4700 = vrot.slane %v4698, 4
        %v4701 = vshll.u32 %v4560, 16
        %v4703 = vrot.slane %v4701, 5
        %v4704 = vor.u32 %v4700, %v4703
        %v4705 = vsel %vm1715, %v4695, %v4704
        %v4707 = vshrl.u32 %v4561, 16
        %v4709 = vrot.slane %v4707, 4
        %v4710 = vshll.u32 %v4561, 16
        %v4712 = vrot.slane %v4710, 5
        %v4713 = vor.u32 %v4709, %v4712
        %v4714 = vsel %vm1715, %v4704, %v4713
        %v4716 = vshrl.u32 %v4562, 16
        %v4718 = vrot.slane %v4716, 4
        %v4719 = vshll.u32 %v4562, 16
        %v4721 = vrot.slane %v4719, 5
        %v4722 = vor.u32 %v4718, %v4721
        %v4723 = vsel %vm1715, %v4713, %v4722
        %v4725 = vshrl.u32 %v4563, 16
        %v4727 = vrot.slane %v4725, 4
        %v4728 = vshll.u32 %v4563, 16
        %v4730 = vrot.slane %v4728, 5
        %v4731 = vor.u32 %v4727, %v4730
        %v4732 = vsel %vm1715, %v4722, %v4731
        %v4765 = vunpack.c.l.b16 %v4565
        %v4766 = vunpack.c.l.b16 %v4566
        %v4767 = vunpack.c.l.b16 %v4567
        %v4768 = vunpack.c.l.b16 %v4568
        %v4769 = vunpack.c.l.b16 %v4569
        %v4770 = vunpack.c.l.b16 %v4570
        %v4771 = vunpack.c.l.b16 %v4571
        %v4772 = vunpack.c.l.b16 %v4572
        %v4773 = vunpack.c.l.b16 %v4573
        %v4774 = vunpack.c.l.b16 %v4574
        %v4775 = vunpack.c.l.b16 %v4575
        %v4776 = vunpack.c.l.b16 %v4576
        %v4777 = vunpack.c.l.b16 %v4577
        %v4778 = vunpack.c.l.b16 %v4578
        %v4779 = vunpack.c.l.b16 %v4579
        %v4780 = vunpack.c.l.b16 %v4580
        %v4781 = vpack.c.b16 %v4766, %v4765
        %v4782 = vpack.c.b16 %v4768, %v4767
        %v4783 = vpack.c.b16 %v4770, %v4769
        %v4784 = vpack.c.b16 %v4772, %v4771
        %v4785 = vpack.c.b16 %v4774, %v4773
        %v4786 = vpack.c.b16 %v4776, %v4775
        %v4787 = vpack.c.b16 %v4778, %v4777
        %v4788 = vpack.c.b16 %v4780, %v4779
        %4797 = vmatprep.subr.bf16.mxu0 0
        %4798 = vmatpush1.bf16.msra.mxu0 %v4781
        %4799 = vmatprep.subr.bf16.mxu0 0
        %4800 = vmatpush1.bf16.msra.mxu0 %v4782
        %4801 = vmatprep.subr.bf16.mxu0 0
        %4802 = vmatpush1.bf16.msra.mxu0 %v4783
        %4803 = vmatprep.subr.bf16.mxu0 0
        %4804 = vmatpush1.bf16.msra.mxu0 %v4784
        %4805 = vmatprep.subr.bf16.mxu0 0
        %4806 = vmatpush1.bf16.msra.mxu0 %v4785
        %4807 = vmatprep.subr.bf16.mxu0 0
        %4808 = vmatpush1.bf16.msra.mxu0 %v4786
        %4809 = vmatprep.subr.bf16.mxu0 0
        %4810 = vmatpush1.bf16.msra.mxu0 %v4787
        %4811 = vmatprep.subr.bf16.mxu0 0
        %4812 = vmatpush1.bf16.msra.mxu0 %v4788
        %4813 = vmatprep.subr.bf16.mxu0 0
        %4814 = vmatpush1.bf16.msra.mxu0 0
        %4815 = vmatprep.subr.bf16.mxu0 0
        %4816 = vmatpush1.bf16.msra.mxu0 0
        %4817 = vmatprep.subr.bf16.mxu0 0
        %4818 = vmatpush1.bf16.msra.mxu0 0
        %4819 = vmatprep.subr.bf16.mxu0 0
        %4820 = vmatpush1.bf16.msra.mxu0 0
        %4821 = vmatprep.subr.bf16.mxu0 0
        %4822 = vmatpush1.bf16.msra.mxu0 0
        %4823 = vmatprep.subr.bf16.mxu0 0
        %4824 = vmatpush1.bf16.msra.mxu0 0
        %4825 = vmatprep.subr.bf16.mxu0 0
        %4826 = vmatpush1.bf16.msra.mxu0 0
        %4827 = vmatprep.subr.bf16.mxu0 0
        %4828 = vmatpush1.bf16.msra.mxu0 0
        %4829 = vmatprep.mubr.bf16.mxu0 0
        %4830 = vmatmul.mubr.bf16.gmra.mrb[0].mxu0 %v4597
        %v4831 = vpop.f32.mrb[0].mxu0
        %v4832 = vadd.f32 0.0, %v4831
        %v4833 = vpop.f32.mrb[0].mxu0
        %v4834 = vpop.f32.mrb[0].mxu0
        %v4835 = vadd.f32 0.0, %v4834
        %v4836 = vpop.f32.mrb[0].mxu0
        %4837 = vmatprep.mubr.bf16.mxu0 0
        %4838 = vmatmul.mubr.bf16.gmra.mrb[0].mxu0 %v4606
        %v4839 = vpop.f32.mrb[0].mxu0
        %v4840 = vadd.f32 0.0, %v4839
        %v4841 = vpop.f32.mrb[0].mxu0
        %v4842 = vpop.f32.mrb[0].mxu0
        %v4843 = vadd.f32 0.0, %v4842
        %v4844 = vpop.f32.mrb[0].mxu0
        %4845 = vmatprep.mubr.bf16.mxu0 0
        %4846 = vmatmul.mubr.bf16.gmra.mrb[0].mxu0 %v4615
        %v4847 = vpop.f32.mrb[0].mxu0
        %v4848 = vadd.f32 0.0, %v4847
        %v4849 = vpop.f32.mrb[0].mxu0
        %v4850 = vpop.f32.mrb[0].mxu0
        %v4851 = vadd.f32 0.0, %v4850
        %v4852 = vpop.f32.mrb[0].mxu0
        %4853 = vmatprep.mubr.bf16.mxu0 0
        %4854 = vmatmul.mubr.bf16.gmra.mrb[0].mxu0 %v4624
        %v4855 = vpop.f32.mrb[0].mxu0
        %v4856 = vadd.f32 0.0, %v4855
        %v4857 = vpop.f32.mrb[0].mxu0
        %v4858 = vpop.f32.mrb[0].mxu0
        %v4859 = vadd.f32 0.0, %v4858
        %v4860 = vpop.f32.mrb[0].mxu0
        %4861 = vmatprep.mubr.bf16.mxu0 0
        %4862 = vmatmul.mubr.bf16.gmra.mrb[0].mxu0 %v4633
        %v4863 = vpop.f32.mrb[0].mxu0
        %v4864 = vadd.f32 0.0, %v4863
        %v4865 = vpop.f32.mrb[0].mxu0
        %v4866 = vpop.f32.mrb[0].mxu0
        %v4867 = vadd.f32 0.0, %v4866
        %v4868 = vpop.f32.mrb[0].mxu0
        %4869 = vmatprep.mubr.bf16.mxu0 0
        %4870 = vmatmul.mubr.bf16.gmra.mrb[0].mxu0 %v4642
        %v4871 = vpop.f32.mrb[0].mxu0
        %v4872 = vadd.f32 0.0, %v4871
        %v4873 = vpop.f32.mrb[0].mxu0
        %v4874 = vpop.f32.mrb[0].mxu0
        %v4875 = vadd.f32 0.0, %v4874
        %v4876 = vpop.f32.mrb[0].mxu0
        %4877 = vmatprep.mubr.bf16.mxu0 0
        %4878 = vmatmul.mubr.bf16.gmra.mrb[0].mxu0 %v4651
        %v4879 = vpop.f32.mrb[0].mxu0
        %v4880 = vadd.f32 0.0, %v4879
        %v4881 = vpop.f32.mrb[0].mxu0
        %v4882 = vpop.f32.mrb[0].mxu0
        %v4883 = vadd.f32 0.0, %v4882
        %v4884 = vpop.f32.mrb[0].mxu0
        %4885 = vmatprep.mubr.bf16.mxu0 0
        %4886 = vmatmul.mubr.bf16.gmra.mrb[0].mxu0 %v4660
        %v4887 = vpop.f32.mrb[0].mxu0
        %v4888 = vadd.f32 0.0, %v4887
        %v4889 = vpop.f32.mrb[0].mxu0
        %v4890 = vpop.f32.mrb[0].mxu0
        %v4891 = vadd.f32 0.0, %v4890
        %v4892 = vpop.f32.mrb[0].mxu0
        %4893 = vmatprep.mubr.bf16.mxu0 0
        %4894 = vmatmul.mubr.bf16.gmra.mrb[0].mxu0 %v4669
        %v4895 = vpop.f32.mrb[0].mxu0
        %v4896 = vadd.f32 0.0, %v4895
        %v4897 = vpop.f32.mrb[0].mxu0
        %v4898 = vpop.f32.mrb[0].mxu0
        %v4899 = vadd.f32 0.0, %v4898
        %v4900 = vpop.f32.mrb[0].mxu0
        %4901 = vmatprep.mubr.bf16.mxu0 0
        %4902 = vmatmul.mubr.bf16.gmra.mrb[0].mxu0 %v4678
        %v4903 = vpop.f32.mrb[0].mxu0
        %v4904 = vadd.f32 0.0, %v4903
        %v4905 = vpop.f32.mrb[0].mxu0
        %v4906 = vpop.f32.mrb[0].mxu0
        %v4907 = vadd.f32 0.0, %v4906
        %v4908 = vpop.f32.mrb[0].mxu0
        %4909 = vmatprep.mubr.bf16.mxu0 0
        %4910 = vmatmul.mubr.bf16.gmra.mrb[0].mxu0 %v4687
        %v4911 = vpop.f32.mrb[0].mxu0
        %v4912 = vadd.f32 0.0, %v4911
        %v4913 = vpop.f32.mrb[0].mxu0
        %v4914 = vpop.f32.mrb[0].mxu0
        %v4915 = vadd.f32 0.0, %v4914
        %v4916 = vpop.f32.mrb[0].mxu0
        %4917 = vmatprep.mubr.bf16.mxu0 0
        %4918 = vmatmul.mubr.bf16.gmra.mrb[0].mxu0 %v4696
        %v4919 = vpop.f32.mrb[0].mxu0
        %v4920 = vadd.f32 0.0, %v4919
        %v4921 = vpop.f32.mrb[0].mxu0
        %v4922 = vpop.f32.mrb[0].mxu0
        %v4923 = vadd.f32 0.0, %v4922
        %v4924 = vpop.f32.mrb[0].mxu0
        %4925 = vmatprep.mubr.bf16.mxu0 0
        %4926 = vmatmul.mubr.bf16.gmra.mrb[0].mxu0 %v4705
        %v4927 = vpop.f32.mrb[0].mxu0
        %v4928 = vadd.f32 0.0, %v4927
        %v4929 = vpop.f32.mrb[0].mxu0
        %v4930 = vpop.f32.mrb[0].mxu0
        %v4931 = vadd.f32 0.0, %v4930
        %v4932 = vpop.f32.mrb[0].mxu0
        %4933 = vmatprep.mubr.bf16.mxu0 0
        %4934 = vmatmul.mubr.bf16.gmra.mrb[0].mxu0 %v4714
        %v4935 = vpop.f32.mrb[0].mxu0
        %v4936 = vadd.f32 0.0, %v4935
        %v4937 = vpop.f32.mrb[0].mxu0
        %v4938 = vpop.f32.mrb[0].mxu0
        %v4939 = vadd.f32 0.0, %v4938
        %v4940 = vpop.f32.mrb[0].mxu0
        %4941 = vmatprep.mubr.bf16.mxu0 0
        %4942 = vmatmul.mubr.bf16.gmra.mrb[0].mxu0 %v4723
        %v4943 = vpop.f32.mrb[0].mxu0
        %v4944 = vadd.f32 0.0, %v4943
        %v4945 = vpop.f32.mrb[0].mxu0
        %v4946 = vpop.f32.mrb[0].mxu0
        %v4947 = vadd.f32 0.0, %v4946
        %v4948 = vpop.f32.mrb[0].mxu0
        %4949 = vmatprep.mubr.bf16.mxu0 0
        %4950 = vmatmul.mubr.bf16.gmra.mrb[0].mxu0 %v4732
        %v4951 = vpop.f32.mrb[0].mxu0
        %v4952 = vadd.f32 0.0, %v4951
        %v4953 = vpop.f32.mrb[0].mxu0
        %v4954 = vpop.f32.mrb[0].mxu0
        %v4955 = vadd.f32 0.0, %v4954
        %v4956 = vpop.f32.mrb[0].mxu0
        %4957 = vdwg.mxu0
        %v4958 = vadd.f32 %v4050, %v4832
        %v4959 = vadd.f32 %v4051, %v4835
        %v4960 = vadd.f32 %v4052, %v4840
        %v4961 = vadd.f32 %v4053, %v4843
        %v4962 = vadd.f32 %v4054, %v4848
        %v4963 = vadd.f32 %v4055, %v4851
        %v4964 = vadd.f32 %v4056, %v4856
        %v4965 = vadd.f32 %v4057, %v4859
        %v4966 = vadd.f32 %v4058, %v4864
        %v4967 = vadd.f32 %v4059, %v4867
        %v4968 = vadd.f32 %v4060, %v4872
        %v4969 = vadd.f32 %v4061, %v4875
        %v4970 = vadd.f32 %v4062, %v4880
        %v4971 = vadd.f32 %v4063, %v4883
        %v4972 = vadd.f32 %v4064, %v4888
        %v4973 = vadd.f32 %v4065, %v4891
        %v4974 = vadd.f32 %v4066, %v4896
        %v4975 = vadd.f32 %v4067, %v4899
        %v4976 = vadd.f32 %v4068, %v4904
        %v4977 = vadd.f32 %v4069, %v4907
        %v4978 = vadd.f32 %v4070, %v4912
        %v4979 = vadd.f32 %v4071, %v4915
        %v4980 = vadd.f32 %v4072, %v4920
        %v4981 = vadd.f32 %v4073, %v4923
        %v4982 = vadd.f32 %v4074, %v4928
        %v4983 = vadd.f32 %v4075, %v4931
        %v4984 = vadd.f32 %v4076, %v4936
        %v4985 = vadd.f32 %v4077, %v4939
        %v4986 = vadd.f32 %v4078, %v4944
        %v4987 = vadd.f32 %v4079, %v4947
        %v4988 = vadd.f32 %v4080, %v4952
        %v4989 = vadd.f32 %v4081, %v4955
        %v4990 = vld [vmem:[#allocation2 + $0x88] sm:$0x1f]
        %v4991 = vsel %vm4530, %v3486, 0
        %v4992 = vsel %vm4531, %v1524, 0
        %v4993 = vsel %vm4532, %v1525, 0
        %v4994 = vsel %vm4533, %v1526, 0
        %v4995 = vsel %vm4534, %v1527, 0
        %v4996 = vsel %vm4535, %v1528, 0
        %v4997 = vsel %vm4536, %v1529, 0
        %v4998 = vsel %vm4537, %v1530, 0
        %v4999 = vsel %vm4538, %v1531, 0
        %v5000 = vsel %vm4539, %v1532, 0
        %v5001 = vsel %vm4540, %v1533, 0
        %v5002 = vsel %vm4541, %v1534, 0
        %v5003 = vsel %vm4542, %v1535, 0
        %v5004 = vsel %vm4543, %v1536, 0
        %v5005 = vsel %vm4544, %v1537, 0
        %v5006 = vsel %vm4545, %v1910, 0
        %v5007 = vsel %vm4546, %v4990, 0
        %s5008 = scalar_lea.vmem [#allocation12], 320
        %v5009 = vld [vmem:[%s5008] sm:$0xf]
        %v5010 = vld [vmem:[%s5008 + $0x4] sm:$0xf]
        %v5011 = vld [vmem:[%s5008 + $0x8] sm:$0xf]
        %v5012 = vld [vmem:[%s5008 + $0xc] sm:$0xf]
        %v5013 = vld [vmem:[%s5008 + $0x10] sm:$0xf]
        %v5014 = vld [vmem:[%s5008 + $0x14] sm:$0xf]
        %v5015 = vld [vmem:[%s5008 + $0x18] sm:$0xf]
        %v5016 = vld [vmem:[%s5008 + $0x1c] sm:$0xf]
        %v5017 = vld [vmem:[%s5008 + $0x20] sm:$0xf]
        %v5018 = vld [vmem:[%s5008 + $0x24] sm:$0xf]
        %v5019 = vld [vmem:[%s5008 + $0x28] sm:$0xf]
        %v5020 = vld [vmem:[%s5008 + $0x2c] sm:$0xf]
        %v5021 = vld [vmem:[%s5008 + $0x30] sm:$0xf]
        %v5022 = vld [vmem:[%s5008 + $0x34] sm:$0xf]
        %v5023 = vld [vmem:[%s5008 + $0x38] sm:$0xf]
        %v5024 = vld [vmem:[%s5008 + $0x3c] sm:$0xf]
        %v5026 = vshrl.u32 %v4991, 16
        %v5028 = vrot.slane %v5026, 4
        %v5029 = vshll.u32 %v4991, 16
        %v5031 = vrot.slane %v5029, 5
        %v5032 = vor.u32 %v5028, %v5031
        %v5034 = vshrl.u32 %v4992, 16
        %v5036 = vrot.slane %v5034, 4
        %v5037 = vshll.u32 %v4992, 16
        %v5039 = vrot.slane %v5037, 5
        %v5040 = vor.u32 %v5036, %v5039
        %v5041 = vsel %vm1715, %v5032, %v5040
        %v5043 = vshrl.u32 %v4993, 16
        %v5045 = vrot.slane %v5043, 4
        %v5046 = vshll.u32 %v4993, 16
        %v5048 = vrot.slane %v5046, 5
        %v5049 = vor.u32 %v5045, %v5048
        %v5050 = vsel %vm1715, %v5040, %v5049
        %v5052 = vshrl.u32 %v4994, 16
        %v5054 = vrot.slane %v5052, 4
        %v5055 = vshll.u32 %v4994, 16
        %v5057 = vrot.slane %v5055, 5
        %v5058 = vor.u32 %v5054, %v5057
        %v5059 = vsel %vm1715, %v5049, %v5058
        %v5061 = vshrl.u32 %v4995, 16
        %v5063 = vrot.slane %v5061, 4
        %v5064 = vshll.u32 %v4995, 16
        %v5066 = vrot.slane %v5064, 5
        %v5067 = vor.u32 %v5063, %v5066
        %v5068 = vsel %vm1715, %v5058, %v5067
        %v5070 = vshrl.u32 %v4996, 16
        %v5072 = vrot.slane %v5070, 4
        %v5073 = vshll.u32 %v4996, 16
        %v5075 = vrot.slane %v5073, 5
        %v5076 = vor.u32 %v5072, %v5075
        %v5077 = vsel %vm1715, %v5067, %v5076
        %v5079 = vshrl.u32 %v4997, 16
        %v5081 = vrot.slane %v5079, 4
        %v5082 = vshll.u32 %v4997, 16
        %v5084 = vrot.slane %v5082, 5
        %v5085 = vor.u32 %v5081, %v5084
        %v5086 = vsel %vm1715, %v5076, %v5085
        %v5088 = vshrl.u32 %v4998, 16
        %v5090 = vrot.slane %v5088, 4
        %v5091 = vshll.u32 %v4998, 16
        %v5093 = vrot.slane %v5091, 5
        %v5094 = vor.u32 %v5090, %v5093
        %v5095 = vsel %vm1715, %v5085, %v5094
        %v5097 = vshrl.u32 %v4999, 16
        %v5099 = vrot.slane %v5097, 4
        %v5100 = vshll.u32 %v4999, 16
        %v5102 = vrot.slane %v5100, 5
        %v5103 = vor.u32 %v5099, %v5102
        %v5104 = vsel %vm1715, %v5094, %v5103
        %v5106 = vshrl.u32 %v5000, 16
        %v5108 = vrot.slane %v5106, 4
        %v5109 = vshll.u32 %v5000, 16
        %v5111 = vrot.slane %v5109, 5
        %v5112 = vor.u32 %v5108, %v5111
        %v5113 = vsel %vm1715, %v5103, %v5112
        %v5115 = vshrl.u32 %v5001, 16
        %v5117 = vrot.slane %v5115, 4
        %v5118 = vshll.u32 %v5001, 16
        %v5120 = vrot.slane %v5118, 5
        %v5121 = vor.u32 %v5117, %v5120
        %v5122 = vsel %vm1715, %v5112, %v5121
        %v5124 = vshrl.u32 %v5002, 16
        %v5126 = vrot.slane %v5124, 4
        %v5127 = vshll.u32 %v5002, 16
        %v5129 = vrot.slane %v5127, 5
        %v5130 = vor.u32 %v5126, %v5129
        %v5131 = vsel %vm1715, %v5121, %v5130
        %v5133 = vshrl.u32 %v5003, 16
        %v5135 = vrot.slane %v5133, 4
        %v5136 = vshll.u32 %v5003, 16
        %v5138 = vrot.slane %v5136, 5
        %v5139 = vor.u32 %v5135, %v5138
        %v5140 = vsel %vm1715, %v5130, %v5139
        %v5142 = vshrl.u32 %v5004, 16
        %v5144 = vrot.slane %v5142, 4
        %v5145 = vshll.u32 %v5004, 16
        %v5147 = vrot.slane %v5145, 5
        %v5148 = vor.u32 %v5144, %v5147
        %v5149 = vsel %vm1715, %v5139, %v5148
        %v5151 = vshrl.u32 %v5005, 16
        %v5153 = vrot.slane %v5151, 4
        %v5154 = vshll.u32 %v5005, 16
        %v5156 = vrot.slane %v5154, 5
        %v5157 = vor.u32 %v5153, %v5156
        %v5158 = vsel %vm1715, %v5148, %v5157
        %v5160 = vshrl.u32 %v5006, 16
        %v5162 = vrot.slane %v5160, 4
        %v5163 = vshll.u32 %v5006, 16
        %v5165 = vrot.slane %v5163, 5
        %v5166 = vor.u32 %v5162, %v5165
        %v5167 = vsel %vm1715, %v5157, %v5166
        %v5169 = vshrl.u32 %v5007, 16
        %v5171 = vrot.slane %v5169, 4
        %v5172 = vshll.u32 %v5007, 16
        %v5174 = vrot.slane %v5172, 5
        %v5175 = vor.u32 %v5171, %v5174
        %v5176 = vsel %vm1715, %v5166, %v5175
        %v5209 = vunpack.c.l.b16 %v5009
        %v5210 = vunpack.c.l.b16 %v5010
        %v5211 = vunpack.c.l.b16 %v5011
        %v5212 = vunpack.c.l.b16 %v5012
        %v5213 = vunpack.c.l.b16 %v5013
        %v5214 = vunpack.c.l.b16 %v5014
        %v5215 = vunpack.c.l.b16 %v5015
        %v5216 = vunpack.c.l.b16 %v5016
        %v5217 = vunpack.c.l.b16 %v5017
        %v5218 = vunpack.c.l.b16 %v5018
        %v5219 = vunpack.c.l.b16 %v5019
        %v5220 = vunpack.c.l.b16 %v5020
        %v5221 = vunpack.c.l.b16 %v5021
        %v5222 = vunpack.c.l.b16 %v5022
        %v5223 = vunpack.c.l.b16 %v5023
        %v5224 = vunpack.c.l.b16 %v5024
        %v5225 = vpack.c.b16 %v5210, %v5209
        %v5226 = vpack.c.b16 %v5212, %v5211
        %v5227 = vpack.c.b16 %v5214, %v5213
        %v5228 = vpack.c.b16 %v5216, %v5215
        %v5229 = vpack.c.b16 %v5218, %v5217
        %v5230 = vpack.c.b16 %v5220, %v5219
        %v5231 = vpack.c.b16 %v5222, %v5221
        %v5232 = vpack.c.b16 %v5224, %v5223
        %5241 = vmatprep.subr.bf16.mxu0 0
        %5242 = vmatpush1.bf16.msra.mxu0 %v5225
        %5243 = vmatprep.subr.bf16.mxu0 0
        %5244 = vmatpush1.bf16.msra.mxu0 %v5226
        %5245 = vmatprep.subr.bf16.mxu0 0
        %5246 = vmatpush1.bf16.msra.mxu0 %v5227
        %5247 = vmatprep.subr.bf16.mxu0 0
        %5248 = vmatpush1.bf16.msra.mxu0 %v5228
        %5249 = vmatprep.subr.bf16.mxu0 0
        %5250 = vmatpush1.bf16.msra.mxu0 %v5229
        %5251 = vmatprep.subr.bf16.mxu0 0
        %5252 = vmatpush1.bf16.msra.mxu0 %v5230
        %5253 = vmatprep.subr.bf16.mxu0 0
        %5254 = vmatpush1.bf16.msra.mxu0 %v5231
        %5255 = vmatprep.subr.bf16.mxu0 0
        %5256 = vmatpush1.bf16.msra.mxu0 %v5232
        %5257 = vmatprep.subr.bf16.mxu0 0
        %5258 = vmatpush1.bf16.msra.mxu0 0
        %5259 = vmatprep.subr.bf16.mxu0 0
        %5260 = vmatpush1.bf16.msra.mxu0 0
        %5261 = vmatprep.subr.bf16.mxu0 0
        %5262 = vmatpush1.bf16.msra.mxu0 0
        %5263 = vmatprep.subr.bf16.mxu0 0
        %5264 = vmatpush1.bf16.msra.mxu0 0
        %5265 = vmatprep.subr.bf16.mxu0 0
        %5266 = vmatpush1.bf16.msra.mxu0 0
        %5267 = vmatprep.subr.bf16.mxu0 0
        %5268 = vmatpush1.bf16.msra.mxu0 0
        %5269 = vmatprep.subr.bf16.mxu0 0
        %5270 = vmatpush1.bf16.msra.mxu0 0
        %5271 = vmatprep.subr.bf16.mxu0 0
        %5272 = vmatpush1.bf16.msra.mxu0 0
        %5273 = vmatprep.mubr.bf16.mxu0 0
        %5274 = vmatmul.mubr.bf16.gmra.mrb[0].mxu0 %v5041
        %v5275 = vpop.f32.mrb[0].mxu0
        %v5276 = vadd.f32 0.0, %v5275
        %v5277 = vpop.f32.mrb[0].mxu0
        %v5278 = vpop.f32.mrb[0].mxu0
        %v5279 = vadd.f32 0.0, %v5278
        %v5280 = vpop.f32.mrb[0].mxu0
        %5281 = vmatprep.mubr.bf16.mxu0 0
        %5282 = vmatmul.mubr.bf16.gmra.mrb[0].mxu0 %v5050
        %v5283 = vpop.f32.mrb[0].mxu0
        %v5284 = vadd.f32 0.0, %v5283
        %v5285 = vpop.f32.mrb[0].mxu0
        %v5286 = vpop.f32.mrb[0].mxu0
        %v5287 = vadd.f32 0.0, %v5286
        %v5288 = vpop.f32.mrb[0].mxu0
        %5289 = vmatprep.mubr.bf16.mxu0 0
        %5290 = vmatmul.mubr.bf16.gmra.mrb[0].mxu0 %v5059
        %v5291 = vpop.f32.mrb[0].mxu0
        %v5292 = vadd.f32 0.0, %v5291
        %v5293 = vpop.f32.mrb[0].mxu0
        %v5294 = vpop.f32.mrb[0].mxu0
        %v5295 = vadd.f32 0.0, %v5294
        %v5296 = vpop.f32.mrb[0].mxu0
        %5297 = vmatprep.mubr.bf16.mxu0 0
        %5298 = vmatmul.mubr.bf16.gmra.mrb[0].mxu0 %v5068
        %v5299 = vpop.f32.mrb[0].mxu0
        %v5300 = vadd.f32 0.0, %v5299
        %v5301 = vpop.f32.mrb[0].mxu0
        %v5302 = vpop.f32.mrb[0].mxu0
        %v5303 = vadd.f32 0.0, %v5302
        %v5304 = vpop.f32.mrb[0].mxu0
        %5305 = vmatprep.mubr.bf16.mxu0 0
        %5306 = vmatmul.mubr.bf16.gmra.mrb[0].mxu0 %v5077
        %v5307 = vpop.f32.mrb[0].mxu0
        %v5308 = vadd.f32 0.0, %v5307
        %v5309 = vpop.f32.mrb[0].mxu0
        %v5310 = vpop.f32.mrb[0].mxu0
        %v5311 = vadd.f32 0.0, %v5310
        %v5312 = vpop.f32.mrb[0].mxu0
        %5313 = vmatprep.mubr.bf16.mxu0 0
        %5314 = vmatmul.mubr.bf16.gmra.mrb[0].mxu0 %v5086
        %v5315 = vpop.f32.mrb[0].mxu0
        %v5316 = vadd.f32 0.0, %v5315
        %v5317 = vpop.f32.mrb[0].mxu0
        %v5318 = vpop.f32.mrb[0].mxu0
        %v5319 = vadd.f32 0.0, %v5318
        %v5320 = vpop.f32.mrb[0].mxu0
        %5321 = vmatprep.mubr.bf16.mxu0 0
        %5322 = vmatmul.mubr.bf16.gmra.mrb[0].mxu0 %v5095
        %v5323 = vpop.f32.mrb[0].mxu0
        %v5324 = vadd.f32 0.0, %v5323
        %v5325 = vpop.f32.mrb[0].mxu0
        %v5326 = vpop.f32.mrb[0].mxu0
        %v5327 = vadd.f32 0.0, %v5326
        %v5328 = vpop.f32.mrb[0].mxu0
        %5329 = vmatprep.mubr.bf16.mxu0 0
        %5330 = vmatmul.mubr.bf16.gmra.mrb[0].mxu0 %v5104
        %v5331 = vpop.f32.mrb[0].mxu0
        %v5332 = vadd.f32 0.0, %v5331
        %v5333 = vpop.f32.mrb[0].mxu0
        %v5334 = vpop.f32.mrb[0].mxu0
        %v5335 = vadd.f32 0.0, %v5334
        %v5336 = vpop.f32.mrb[0].mxu0
        %5337 = vmatprep.mubr.bf16.mxu0 0
        %5338 = vmatmul.mubr.bf16.gmra.mrb[0].mxu0 %v5113
        %v5339 = vpop.f32.mrb[0].mxu0
        %v5340 = vadd.f32 0.0, %v5339
        %v5341 = vpop.f32.mrb[0].mxu0
        %v5342 = vpop.f32.mrb[0].mxu0
        %v5343 = vadd.f32 0.0, %v5342
        %v5344 = vpop.f32.mrb[0].mxu0
        %5345 = vmatprep.mubr.bf16.mxu0 0
        %5346 = vmatmul.mubr.bf16.gmra.mrb[0].mxu0 %v5122
        %v5347 = vpop.f32.mrb[0].mxu0
        %v5348 = vadd.f32 0.0, %v5347
        %v5349 = vpop.f32.mrb[0].mxu0
        %v5350 = vpop.f32.mrb[0].mxu0
        %v5351 = vadd.f32 0.0, %v5350
        %v5352 = vpop.f32.mrb[0].mxu0
        %5353 = vmatprep.mubr.bf16.mxu0 0
        %5354 = vmatmul.mubr.bf16.gmra.mrb[0].mxu0 %v5131
        %v5355 = vpop.f32.mrb[0].mxu0
        %v5356 = vadd.f32 0.0, %v5355
        %v5357 = vpop.f32.mrb[0].mxu0
        %v5358 = vpop.f32.mrb[0].mxu0
        %v5359 = vadd.f32 0.0, %v5358
        %v5360 = vpop.f32.mrb[0].mxu0
        %5361 = vmatprep.mubr.bf16.mxu0 0
        %5362 = vmatmul.mubr.bf16.gmra.mrb[0].mxu0 %v5140
        %v5363 = vpop.f32.mrb[0].mxu0
        %v5364 = vadd.f32 0.0, %v5363
        %v5365 = vpop.f32.mrb[0].mxu0
        %v5366 = vpop.f32.mrb[0].mxu0
        %v5367 = vadd.f32 0.0, %v5366
        %v5368 = vpop.f32.mrb[0].mxu0
        %5369 = vmatprep.mubr.bf16.mxu0 0
        %5370 = vmatmul.mubr.bf16.gmra.mrb[0].mxu0 %v5149
        %v5371 = vpop.f32.mrb[0].mxu0
        %v5372 = vadd.f32 0.0, %v5371
        %v5373 = vpop.f32.mrb[0].mxu0
        %v5374 = vpop.f32.mrb[0].mxu0
        %v5375 = vadd.f32 0.0, %v5374
        %v5376 = vpop.f32.mrb[0].mxu0
        %5377 = vmatprep.mubr.bf16.mxu0 0
        %5378 = vmatmul.mubr.bf16.gmra.mrb[0].mxu0 %v5158
        %v5379 = vpop.f32.mrb[0].mxu0
        %v5380 = vadd.f32 0.0, %v5379
        %v5381 = vpop.f32.mrb[0].mxu0
        %v5382 = vpop.f32.mrb[0].mxu0
        %v5383 = vadd.f32 0.0, %v5382
        %v5384 = vpop.f32.mrb[0].mxu0
        %5385 = vmatprep.mubr.bf16.mxu0 0
        %5386 = vmatmul.mubr.bf16.gmra.mrb[0].mxu0 %v5167
        %v5387 = vpop.f32.mrb[0].mxu0
        %v5388 = vadd.f32 0.0, %v5387
        %v5389 = vpop.f32.mrb[0].mxu0
        %v5390 = vpop.f32.mrb[0].mxu0
        %v5391 = vadd.f32 0.0, %v5390
        %v5392 = vpop.f32.mrb[0].mxu0
        %5393 = vmatprep.mubr.bf16.mxu0 0
        %5394 = vmatmul.mubr.bf16.gmra.mrb[0].mxu0 %v5176
        %v5395 = vpop.f32.mrb[0].mxu0
        %v5396 = vadd.f32 0.0, %v5395
        %v5397 = vpop.f32.mrb[0].mxu0
        %v5398 = vpop.f32.mrb[0].mxu0
        %v5399 = vadd.f32 0.0, %v5398
        %v5400 = vpop.f32.mrb[0].mxu0
        %5401 = vdwg.mxu0
        %v5402 = vadd.f32 %v4958, %v5276
        %v5403 = vadd.f32 %v4959, %v5279
        %v5404 = vadd.f32 %v4960, %v5284
        %v5405 = vadd.f32 %v4961, %v5287
        %v5406 = vadd.f32 %v4962, %v5292
        %v5407 = vadd.f32 %v4963, %v5295
        %v5408 = vadd.f32 %v4964, %v5300
        %v5409 = vadd.f32 %v4965, %v5303
        %v5410 = vadd.f32 %v4966, %v5308
        %v5411 = vadd.f32 %v4967, %v5311
        %v5412 = vadd.f32 %v4968, %v5316
        %v5413 = vadd.f32 %v4969, %v5319
        %v5414 = vadd.f32 %v4970, %v5324
        %v5415 = vadd.f32 %v4971, %v5327
        %v5416 = vadd.f32 %v4972, %v5332
        %v5417 = vadd.f32 %v4973, %v5335
        %v5418 = vadd.f32 %v4974, %v5340
        %v5419 = vadd.f32 %v4975, %v5343
        %v5420 = vadd.f32 %v4976, %v5348
        %v5421 = vadd.f32 %v4977, %v5351
        %v5422 = vadd.f32 %v4978, %v5356
        %v5423 = vadd.f32 %v4979, %v5359
        %v5424 = vadd.f32 %v4980, %v5364
        %v5425 = vadd.f32 %v4981, %v5367
        %v5426 = vadd.f32 %v4982, %v5372
        %v5427 = vadd.f32 %v4983, %v5375
        %v5428 = vadd.f32 %v4984, %v5380
        %v5429 = vadd.f32 %v4985, %v5383
        %v5430 = vadd.f32 %v4986, %v5388
        %v5431 = vadd.f32 %v4987, %v5391
        %v5432 = vadd.f32 %v4988, %v5396
        %v5433 = vadd.f32 %v4989, %v5399
        %v5434 = vld [vmem:[#allocation2 + $0x90] sm:$0x1f]
        %v5435 = vsel %vm4530, %v3757, 0
        %v5436 = vsel %vm4531, %v2702, 0
        %v5437 = vsel %vm4532, %v2703, 0
        %v5438 = vsel %vm4533, %v2704, 0
        %v5439 = vsel %vm4534, %v2705, 0
        %v5440 = vsel %vm4535, %v2706, 0
        %v5441 = vsel %vm4536, %v2707, 0
        %v5442 = vsel %vm4537, %v2708, 0
        %v5443 = vsel %vm4538, %v2709, 0
        %v5444 = vsel %vm4539, %v2710, 0
        %v5445 = vsel %vm4540, %v2711, 0
        %v5446 = vsel %vm4541, %v2712, 0
        %v5447 = vsel %vm4542, %v2713, 0
        %v5448 = vsel %vm4543, %v2714, 0
        %v5449 = vsel %vm4544, %v2715, 0
        %v5450 = vsel %vm4545, %v2716, 0
        %v5451 = vsel %vm4546, %v5434, 0
        %s5452 = scalar_lea.vmem [#allocation12], 512
        %v5453 = vld [vmem:[%s5452] sm:$0xf]
        %v5454 = vld [vmem:[%s5452 + $0x4] sm:$0xf]
        %v5455 = vld [vmem:[%s5452 + $0x8] sm:$0xf]
        %v5456 = vld [vmem:[%s5452 + $0xc] sm:$0xf]
        %v5457 = vld [vmem:[%s5452 + $0x10] sm:$0xf]
        %v5458 = vld [vmem:[%s5452 + $0x14] sm:$0xf]
        %v5459 = vld [vmem:[%s5452 + $0x18] sm:$0xf]
        %v5460 = vld [vmem:[%s5452 + $0x1c] sm:$0xf]
        %v5461 = vld [vmem:[%s5452 + $0x20] sm:$0xf]
        %v5462 = vld [vmem:[%s5452 + $0x24] sm:$0xf]
        %v5463 = vld [vmem:[%s5452 + $0x28] sm:$0xf]
        %v5464 = vld [vmem:[%s5452 + $0x2c] sm:$0xf]
        %v5465 = vld [vmem:[%s5452 + $0x30] sm:$0xf]
        %v5466 = vld [vmem:[%s5452 + $0x34] sm:$0xf]
        %v5467 = vld [vmem:[%s5452 + $0x38] sm:$0xf]
        %v5468 = vld [vmem:[%s5452 + $0x3c] sm:$0xf]
        %v5470 = vshrl.u32 %v5435, 16
        %v5472 = vrot.slane %v5470, 4
        %v5473 = vshll.u32 %v5435, 16
        %v5475 = vrot.slane %v5473, 5
        %v5476 = vor.u32 %v5472, %v5475
        %v5478 = vshrl.u32 %v5436, 16
        %v5480 = vrot.slane %v5478, 4
        %v5481 = vshll.u32 %v5436, 16
        %v5483 = vrot.slane %v5481, 5
        %v5484 = vor.u32 %v5480, %v5483
        %v5485 = vsel %vm1715, %v5476, %v5484
        %v5487 = vshrl.u32 %v5437, 16
        %v5489 = vrot.slane %v5487, 4
        %v5490 = vshll.u32 %v5437, 16
        %v5492 = vrot.slane %v5490, 5
        %v5493 = vor.u32 %v5489, %v5492
        %v5494 = vsel %vm1715, %v5484, %v5493
        %v5496 = vshrl.u32 %v5438, 16
        %v5498 = vrot.slane %v5496, 4
        %v5499 = vshll.u32 %v5438, 16
        %v5501 = vrot.slane %v5499, 5
        %v5502 = vor.u32 %v5498, %v5501
        %v5503 = vsel %vm1715, %v5493, %v5502
        %v5505 = vshrl.u32 %v5439, 16
        %v5507 = vrot.slane %v5505, 4
        %v5508 = vshll.u32 %v5439, 16
        %v5510 = vrot.slane %v5508, 5
        %v5511 = vor.u32 %v5507, %v5510
        %v5512 = vsel %vm1715, %v5502, %v5511
        %v5514 = vshrl.u32 %v5440, 16
        %v5516 = vrot.slane %v5514, 4
        %v5517 = vshll.u32 %v5440, 16
        %v5519 = vrot.slane %v5517, 5
        %v5520 = vor.u32 %v5516, %v5519
        %v5521 = vsel %vm1715, %v5511, %v5520
        %v5523 = vshrl.u32 %v5441, 16
        %v5525 = vrot.slane %v5523, 4
        %v5526 = vshll.u32 %v5441, 16
        %v5528 = vrot.slane %v5526, 5
        %v5529 = vor.u32 %v5525, %v5528
        %v5530 = vsel %vm1715, %v5520, %v5529
        %v5532 = vshrl.u32 %v5442, 16
        %v5534 = vrot.slane %v5532, 4
        %v5535 = vshll.u32 %v5442, 16
        %v5537 = vrot.slane %v5535, 5
        %v5538 = vor.u32 %v5534, %v5537
        %v5539 = vsel %vm1715, %v5529, %v5538
        %v5541 = vshrl.u32 %v5443, 16
        %v5543 = vrot.slane %v5541, 4
        %v5544 = vshll.u32 %v5443, 16
        %v5546 = vrot.slane %v5544, 5
        %v5547 = vor.u32 %v5543, %v5546
        %v5548 = vsel %vm1715, %v5538, %v5547
        %v5550 = vshrl.u32 %v5444, 16
        %v5552 = vrot.slane %v5550, 4
        %v5553 = vshll.u32 %v5444, 16
        %v5555 = vrot.slane %v5553, 5
        %v5556 = vor.u32 %v5552, %v5555
        %v5557 = vsel %vm1715, %v5547, %v5556
        %v5559 = vshrl.u32 %v5445, 16
        %v5561 = vrot.slane %v5559, 4
        %v5562 = vshll.u32 %v5445, 16
        %v5564 = vrot.slane %v5562, 5
        %v5565 = vor.u32 %v5561, %v5564
        %v5566 = vsel %vm1715, %v5556, %v5565
        %v5568 = vshrl.u32 %v5446, 16
        %v5570 = vrot.slane %v5568, 4
        %v5571 = vshll.u32 %v5446, 16
        %v5573 = vrot.slane %v5571, 5
        %v5574 = vor.u32 %v5570, %v5573
        %v5575 = vsel %vm1715, %v5565, %v5574
        %v5577 = vshrl.u32 %v5447, 16
        %v5579 = vrot.slane %v5577, 4
        %v5580 = vshll.u32 %v5447, 16
        %v5582 = vrot.slane %v5580, 5
        %v5583 = vor.u32 %v5579, %v5582
        %v5584 = vsel %vm1715, %v5574, %v5583
        %v5586 = vshrl.u32 %v5448, 16
        %v5588 = vrot.slane %v5586, 4
        %v5589 = vshll.u32 %v5448, 16
        %v5591 = vrot.slane %v5589, 5
        %v5592 = vor.u32 %v5588, %v5591
        %v5593 = vsel %vm1715, %v5583, %v5592
        %v5595 = vshrl.u32 %v5449, 16
        %v5597 = vrot.slane %v5595, 4
        %v5598 = vshll.u32 %v5449, 16
        %v5600 = vrot.slane %v5598, 5
        %v5601 = vor.u32 %v5597, %v5600
        %v5602 = vsel %vm1715, %v5592, %v5601
        %v5604 = vshrl.u32 %v5450, 16
        %v5606 = vrot.slane %v5604, 4
        %v5607 = vshll.u32 %v5450, 16
        %v5609 = vrot.slane %v5607, 5
        %v5610 = vor.u32 %v5606, %v5609
        %v5611 = vsel %vm1715, %v5601, %v5610
        %v5613 = vshrl.u32 %v5451, 16
        %v5615 = vrot.slane %v5613, 4
        %v5616 = vshll.u32 %v5451, 16
        %v5618 = vrot.slane %v5616, 5
        %v5619 = vor.u32 %v5615, %v5618
        %v5620 = vsel %vm1715, %v5610, %v5619
        %v5653 = vunpack.c.l.b16 %v5453
        %v5654 = vunpack.c.l.b16 %v5454
        %v5655 = vunpack.c.l.b16 %v5455
        %v5656 = vunpack.c.l.b16 %v5456
        %v5657 = vunpack.c.l.b16 %v5457
        %v5658 = vunpack.c.l.b16 %v5458
        %v5659 = vunpack.c.l.b16 %v5459
        %v5660 = vunpack.c.l.b16 %v5460
        %v5661 = vunpack.c.l.b16 %v5461
        %v5662 = vunpack.c.l.b16 %v5462
        %v5663 = vunpack.c.l.b16 %v5463
        %v5664 = vunpack.c.l.b16 %v5464
        %v5665 = vunpack.c.l.b16 %v5465
        %v5666 = vunpack.c.l.b16 %v5466
        %v5667 = vunpack.c.l.b16 %v5467
        %v5668 = vunpack.c.l.b16 %v5468
        %v5669 = vpack.c.b16 %v5654, %v5653
        %v5670 = vpack.c.b16 %v5656, %v5655
        %v5671 = vpack.c.b16 %v5658, %v5657
        %v5672 = vpack.c.b16 %v5660, %v5659
        %v5673 = vpack.c.b16 %v5662, %v5661
        %v5674 = vpack.c.b16 %v5664, %v5663
        %v5675 = vpack.c.b16 %v5666, %v5665
        %v5676 = vpack.c.b16 %v5668, %v5667
        %5685 = vmatprep.subr.bf16.mxu0 0
        %5686 = vmatpush1.bf16.msra.mxu0 %v5669
        %5687 = vmatprep.subr.bf16.mxu0 0
        %5688 = vmatpush1.bf16.msra.mxu0 %v5670
        %5689 = vmatprep.subr.bf16.mxu0 0
        %5690 = vmatpush1.bf16.msra.mxu0 %v5671
        %5691 = vmatprep.subr.bf16.mxu0 0
        %5692 = vmatpush1.bf16.msra.mxu0 %v5672
        %5693 = vmatprep.subr.bf16.mxu0 0
        %5694 = vmatpush1.bf16.msra.mxu0 %v5673
        %5695 = vmatprep.subr.bf16.mxu0 0
        %5696 = vmatpush1.bf16.msra.mxu0 %v5674
        %5697 = vmatprep.subr.bf16.mxu0 0
        %5698 = vmatpush1.bf16.msra.mxu0 %v5675
        %5699 = vmatprep.subr.bf16.mxu0 0
        %5700 = vmatpush1.bf16.msra.mxu0 %v5676
        %5701 = vmatprep.subr.bf16.mxu0 0
        %5702 = vmatpush1.bf16.msra.mxu0 0
        %5703 = vmatprep.subr.bf16.mxu0 0
        %5704 = vmatpush1.bf16.msra.mxu0 0
        %5705 = vmatprep.subr.bf16.mxu0 0
        %5706 = vmatpush1.bf16.msra.mxu0 0
        %5707 = vmatprep.subr.bf16.mxu0 0
        %5708 = vmatpush1.bf16.msra.mxu0 0
        %5709 = vmatprep.subr.bf16.mxu0 0
        %5710 = vmatpush1.bf16.msra.mxu0 0
        %5711 = vmatprep.subr.bf16.mxu0 0
        %5712 = vmatpush1.bf16.msra.mxu0 0
        %5713 = vmatprep.subr.bf16.mxu0 0
        %5714 = vmatpush1.bf16.msra.mxu0 0
        %5715 = vmatprep.subr.bf16.mxu0 0
        %5716 = vmatpush1.bf16.msra.mxu0 0
        %5717 = vmatprep.mubr.bf16.mxu0 0
        %5718 = vmatmul.mubr.bf16.gmra.mrb[0].mxu0 %v5485
        %v5719 = vpop.f32.mrb[0].mxu0
        %v5720 = vadd.f32 0.0, %v5719
        %v5721 = vpop.f32.mrb[0].mxu0
        %v5722 = vpop.f32.mrb[0].mxu0
        %v5723 = vadd.f32 0.0, %v5722
        %v5724 = vpop.f32.mrb[0].mxu0
        %5725 = vmatprep.mubr.bf16.mxu0 0
        %5726 = vmatmul.mubr.bf16.gmra.mrb[0].mxu0 %v5494
        %v5727 = vpop.f32.mrb[0].mxu0
        %v5728 = vadd.f32 0.0, %v5727
        %v5729 = vpop.f32.mrb[0].mxu0
        %v5730 = vpop.f32.mrb[0].mxu0
        %v5731 = vadd.f32 0.0, %v5730
        %v5732 = vpop.f32.mrb[0].mxu0
        %5733 = vmatprep.mubr.bf16.mxu0 0
        %5734 = vmatmul.mubr.bf16.gmra.mrb[0].mxu0 %v5503
        %v5735 = vpop.f32.mrb[0].mxu0
        %v5736 = vadd.f32 0.0, %v5735
        %v5737 = vpop.f32.mrb[0].mxu0
        %v5738 = vpop.f32.mrb[0].mxu0
        %v5739 = vadd.f32 0.0, %v5738
        %v5740 = vpop.f32.mrb[0].mxu0
        %5741 = vmatprep.mubr.bf16.mxu0 0
        %5742 = vmatmul.mubr.bf16.gmra.mrb[0].mxu0 %v5512
        %v5743 = vpop.f32.mrb[0].mxu0
        %v5744 = vadd.f32 0.0, %v5743
        %v5745 = vpop.f32.mrb[0].mxu0
        %v5746 = vpop.f32.mrb[0].mxu0
        %v5747 = vadd.f32 0.0, %v5746
        %v5748 = vpop.f32.mrb[0].mxu0
        %5749 = vmatprep.mubr.bf16.mxu0 0
        %5750 = vmatmul.mubr.bf16.gmra.mrb[0].mxu0 %v5521
        %v5751 = vpop.f32.mrb[0].mxu0
        %v5752 = vadd.f32 0.0, %v5751
        %v5753 = vpop.f32.mrb[0].mxu0
        %v5754 = vpop.f32.mrb[0].mxu0
        %v5755 = vadd.f32 0.0, %v5754
        %v5756 = vpop.f32.mrb[0].mxu0
        %5757 = vmatprep.mubr.bf16.mxu0 0
        %5758 = vmatmul.mubr.bf16.gmra.mrb[0].mxu0 %v5530
        %v5759 = vpop.f32.mrb[0].mxu0
        %v5760 = vadd.f32 0.0, %v5759
        %v5761 = vpop.f32.mrb[0].mxu0
        %v5762 = vpop.f32.mrb[0].mxu0
        %v5763 = vadd.f32 0.0, %v5762
        %v5764 = vpop.f32.mrb[0].mxu0
        %5765 = vmatprep.mubr.bf16.mxu0 0
        %5766 = vmatmul.mubr.bf16.gmra.mrb[0].mxu0 %v5539
        %v5767 = vpop.f32.mrb[0].mxu0
        %v5768 = vadd.f32 0.0, %v5767
        %v5769 = vpop.f32.mrb[0].mxu0
        %v5770 = vpop.f32.mrb[0].mxu0
        %v5771 = vadd.f32 0.0, %v5770
        %v5772 = vpop.f32.mrb[0].mxu0
        %5773 = vmatprep.mubr.bf16.mxu0 0
        %5774 = vmatmul.mubr.bf16.gmra.mrb[0].mxu0 %v5548
        %v5775 = vpop.f32.mrb[0].mxu0
        %v5776 = vadd.f32 0.0, %v5775
        %v5777 = vpop.f32.mrb[0].mxu0
        %v5778 = vpop.f32.mrb[0].mxu0
        %v5779 = vadd.f32 0.0, %v5778
        %v5780 = vpop.f32.mrb[0].mxu0
        %5781 = vmatprep.mubr.bf16.mxu0 0
        %5782 = vmatmul.mubr.bf16.gmra.mrb[0].mxu0 %v5557
        %v5783 = vpop.f32.mrb[0].mxu0
        %v5784 = vadd.f32 0.0, %v5783
        %v5785 = vpop.f32.mrb[0].mxu0
        %v5786 = vpop.f32.mrb[0].mxu0
        %v5787 = vadd.f32 0.0, %v5786
        %v5788 = vpop.f32.mrb[0].mxu0
        %5789 = vmatprep.mubr.bf16.mxu0 0
        %5790 = vmatmul.mubr.bf16.gmra.mrb[0].mxu0 %v5566
        %v5791 = vpop.f32.mrb[0].mxu0
        %v5792 = vadd.f32 0.0, %v5791
        %v5793 = vpop.f32.mrb[0].mxu0
        %v5794 = vpop.f32.mrb[0].mxu0
        %v5795 = vadd.f32 0.0, %v5794
        %v5796 = vpop.f32.mrb[0].mxu0
        %5797 = vmatprep.mubr.bf16.mxu0 0
        %5798 = vmatmul.mubr.bf16.gmra.mrb[0].mxu0 %v5575
        %v5799 = vpop.f32.mrb[0].mxu0
        %v5800 = vadd.f32 0.0, %v5799
        %v5801 = vpop.f32.mrb[0].mxu0
        %v5802 = vpop.f32.mrb[0].mxu0
        %v5803 = vadd.f32 0.0, %v5802
        %v5804 = vpop.f32.mrb[0].mxu0
        %5805 = vmatprep.mubr.bf16.mxu0 0
        %5806 = vmatmul.mubr.bf16.gmra.mrb[0].mxu0 %v5584
        %v5807 = vpop.f32.mrb[0].mxu0
        %v5808 = vadd.f32 0.0, %v5807
        %v5809 = vpop.f32.mrb[0].mxu0
        %v5810 = vpop.f32.mrb[0].mxu0
        %v5811 = vadd.f32 0.0, %v5810
        %v5812 = vpop.f32.mrb[0].mxu0
        %5813 = vmatprep.mubr.bf16.mxu0 0
        %5814 = vmatmul.mubr.bf16.gmra.mrb[0].mxu0 %v5593
        %v5815 = vpop.f32.mrb[0].mxu0
        %v5816 = vadd.f32 0.0, %v5815
        %v5817 = vpop.f32.mrb[0].mxu0
        %v5818 = vpop.f32.mrb[0].mxu0
        %v5819 = vadd.f32 0.0, %v5818
        %v5820 = vpop.f32.mrb[0].mxu0
        %5821 = vmatprep.mubr.bf16.mxu0 0
        %5822 = vmatmul.mubr.bf16.gmra.mrb[0].mxu0 %v5602
        %v5823 = vpop.f32.mrb[0].mxu0
        %v5824 = vadd.f32 0.0, %v5823
        %v5825 = vpop.f32.mrb[0].mxu0
        %v5826 = vpop.f32.mrb[0].mxu0
        %v5827 = vadd.f32 0.0, %v5826
        %v5828 = vpop.f32.mrb[0].mxu0
        %5829 = vmatprep.mubr.bf16.mxu0 0
        %5830 = vmatmul.mubr.bf16.gmra.mrb[0].mxu0 %v5611
        %v5831 = vpop.f32.mrb[0].mxu0
        %v5832 = vadd.f32 0.0, %v5831
        %v5833 = vpop.f32.mrb[0].mxu0
        %v5834 = vpop.f32.mrb[0].mxu0
        %v5835 = vadd.f32 0.0, %v5834
        %v5836 = vpop.f32.mrb[0].mxu0
        %5837 = vmatprep.mubr.bf16.mxu0 0
        %5838 = vmatmul.mubr.bf16.gmra.mrb[0].mxu0 %v5620
        %v5839 = vpop.f32.mrb[0].mxu0
        %v5840 = vadd.f32 0.0, %v5839
        %v5841 = vpop.f32.mrb[0].mxu0
        %v5842 = vpop.f32.mrb[0].mxu0
        %v5843 = vadd.f32 0.0, %v5842
        %v5844 = vpop.f32.mrb[0].mxu0
        %5845 = vdwg.mxu0
        %v5846 = vadd.f32 %v5402, %v5720
        %v5847 = vadd.f32 %v5403, %v5723
        %v5848 = vadd.f32 %v5404, %v5728
        %v5849 = vadd.f32 %v5405, %v5731
        %v5850 = vadd.f32 %v5406, %v5736
        %v5851 = vadd.f32 %v5407, %v5739
        %v5852 = vadd.f32 %v5408, %v5744
        %v5853 = vadd.f32 %v5409, %v5747
        %v5854 = vadd.f32 %v5410, %v5752
        %v5855 = vadd.f32 %v5411, %v5755
        %v5856 = vadd.f32 %v5412, %v5760
        %v5857 = vadd.f32 %v5413, %v5763
        %v5858 = vadd.f32 %v5414, %v5768
        %v5859 = vadd.f32 %v5415, %v5771
        %v5860 = vadd.f32 %v5416, %v5776
        %v5861 = vadd.f32 %v5417, %v5779
        %v5862 = vadd.f32 %v5418, %v5784
        %v5863 = vadd.f32 %v5419, %v5787
        %v5864 = vadd.f32 %v5420, %v5792
        %v5865 = vadd.f32 %v5421, %v5795
        %v5866 = vadd.f32 %v5422, %v5800
        %v5867 = vadd.f32 %v5423, %v5803
        %v5868 = vadd.f32 %v5424, %v5808
        %v5869 = vadd.f32 %v5425, %v5811
        %v5870 = vadd.f32 %v5426, %v5816
        %v5871 = vadd.f32 %v5427, %v5819
        %v5872 = vadd.f32 %v5428, %v5824
        %v5873 = vadd.f32 %v5429, %v5827
        %v5874 = vadd.f32 %v5430, %v5832
        %v5875 = vadd.f32 %v5431, %v5835
        %v5876 = vadd.f32 %v5432, %v5840
        %v5877 = vadd.f32 %v5433, %v5843
        %v5878 = vld [vmem:[#allocation14] sm:$0x1]
        %v5880 = vlaneseq
        %v5881 = vshrl.u32 %v5880, 7
        %v5882 = vsub.s32 0, %v5881
        %v5883 = vrot.slane %v5878, %v5882
        %v5885 = vadd.f32 %v5846, %v5883
        %v5886 = vadd.f32 %v5847, %v5883
        %v5887 = vadd.f32 %v5848, %v5883
        %v5888 = vadd.f32 %v5849, %v5883
        %v5889 = vadd.f32 %v5850, %v5883
        %v5890 = vadd.f32 %v5851, %v5883
        %v5891 = vadd.f32 %v5852, %v5883
        %v5892 = vadd.f32 %v5853, %v5883
        %v5893 = vadd.f32 %v5854, %v5883
        %v5894 = vadd.f32 %v5855, %v5883
        %v5895 = vadd.f32 %v5856, %v5883
        %v5896 = vadd.f32 %v5857, %v5883
        %v5897 = vadd.f32 %v5858, %v5883
        %v5898 = vadd.f32 %v5859, %v5883
        %v5899 = vadd.f32 %v5860, %v5883
        %v5900 = vadd.f32 %v5861, %v5883
        %v5901 = vadd.f32 %v5862, %v5883
        %v5902 = vadd.f32 %v5863, %v5883
        %v5903 = vadd.f32 %v5864, %v5883
        %v5904 = vadd.f32 %v5865, %v5883
        %v5905 = vadd.f32 %v5866, %v5883
        %v5906 = vadd.f32 %v5867, %v5883
        %v5907 = vadd.f32 %v5868, %v5883
        %v5908 = vadd.f32 %v5869, %v5883
        %v5909 = vadd.f32 %v5870, %v5883
        %v5910 = vadd.f32 %v5871, %v5883
        %v5911 = vadd.f32 %v5872, %v5883
        %v5912 = vadd.f32 %v5873, %v5883
        %v5913 = vadd.f32 %v5874, %v5883
        %v5914 = vadd.f32 %v5875, %v5883
        %v5915 = vadd.f32 %v5876, %v5883
        %v5916 = vadd.f32 %v5877, %v5883
        %v5917 = vmax.f32 %v5885, 0.0
        %v5918 = vmax.f32 %v5886, 0.0
        %v5919 = vmax.f32 %v5887, 0.0
        %v5920 = vmax.f32 %v5888, 0.0
        %v5921 = vmax.f32 %v5889, 0.0
        %v5922 = vmax.f32 %v5890, 0.0
        %v5923 = vmax.f32 %v5891, 0.0
        %v5924 = vmax.f32 %v5892, 0.0
        %v5925 = vmax.f32 %v5893, 0.0
        %v5926 = vmax.f32 %v5894, 0.0
        %v5927 = vmax.f32 %v5895, 0.0
        %v5928 = vmax.f32 %v5896, 0.0
        %v5929 = vmax.f32 %v5897, 0.0
        %v5930 = vmax.f32 %v5898, 0.0
        %v5931 = vmax.f32 %v5899, 0.0
        %v5932 = vmax.f32 %v5900, 0.0
        %v5933 = vmax.f32 %v5901, 0.0
        %v5934 = vmax.f32 %v5902, 0.0
        %v5935 = vmax.f32 %v5903, 0.0
        %v5936 = vmax.f32 %v5904, 0.0
        %v5937 = vmax.f32 %v5905, 0.0
        %v5938 = vmax.f32 %v5906, 0.0
        %v5939 = vmax.f32 %v5907, 0.0
        %v5940 = vmax.f32 %v5908, 0.0
        %v5941 = vmax.f32 %v5909, 0.0
        %v5942 = vmax.f32 %v5910, 0.0
        %v5943 = vmax.f32 %v5911, 0.0
        %v5944 = vmax.f32 %v5912, 0.0
        %v5945 = vmax.f32 %v5913, 0.0
        %v5946 = vmax.f32 %v5914, 0.0
        %v5947 = vmax.f32 %v5915, 0.0
        %v5948 = vmax.f32 %v5916, 0.0
        %v5949 = vpack.c.bf16 %v5918, %v5917
        %v5950 = vpack.c.bf16 %v5920, %v5919
        %v5951 = vpack.c.bf16 %v5922, %v5921
        %v5952 = vpack.c.bf16 %v5924, %v5923
        %v5953 = vpack.c.bf16 %v5926, %v5925
        %v5954 = vpack.c.bf16 %v5928, %v5927
        %v5955 = vpack.c.bf16 %v5930, %v5929
        %v5956 = vpack.c.bf16 %v5932, %v5931
        %v5957 = vpack.c.bf16 %v5934, %v5933
        %v5958 = vpack.c.bf16 %v5936, %v5935
        %v5959 = vpack.c.bf16 %v5938, %v5937
        %v5960 = vpack.c.bf16 %v5940, %v5939
        %v5961 = vpack.c.bf16 %v5942, %v5941
        %v5962 = vpack.c.bf16 %v5944, %v5943
        %v5963 = vpack.c.bf16 %v5946, %v5945
        %v5964 = vpack.c.bf16 %v5948, %v5947
        %v5965 = vld [vmem:[#allocation15] sm:$0xf]
        %v5966 = vld [vmem:[#allocation15 + $0x4] sm:$0xf]
        %v5967 = vld [vmem:[#allocation15 + $0x8] sm:$0xf]
        %v5968 = vld [vmem:[#allocation15 + $0xc] sm:$0xf]
        %v5969 = vld [vmem:[#allocation15 + $0x10] sm:$0xf]
        %v5970 = vld [vmem:[#allocation15 + $0x14] sm:$0xf]
        %v5971 = vld [vmem:[#allocation15 + $0x18] sm:$0xf]
        %v5972 = vld [vmem:[#allocation15 + $0x1c] sm:$0xf]
        %v5973 = vld [vmem:[#allocation15 + $0x20] sm:$0xf]
        %v5974 = vld [vmem:[#allocation15 + $0x24] sm:$0xf]
        %v5975 = vld [vmem:[#allocation15 + $0x28] sm:$0xf]
        %v5976 = vld [vmem:[#allocation15 + $0x2c] sm:$0xf]
        %v5977 = vld [vmem:[#allocation15 + $0x30] sm:$0xf]
        %v5978 = vld [vmem:[#allocation15 + $0x34] sm:$0xf]
        %v5979 = vld [vmem:[#allocation15 + $0x38] sm:$0xf]
        %v5980 = vld [vmem:[#allocation15 + $0x3c] sm:$0xf]
        %v5997 = vunpack.c.l.b16 %v5965
        %v5998 = vunpack.c.l.b16 %v5966
        %v5999 = vunpack.c.l.b16 %v5967
        %v6000 = vunpack.c.l.b16 %v5968
        %v6001 = vunpack.c.l.b16 %v5969
        %v6002 = vunpack.c.l.b16 %v5970
        %v6003 = vunpack.c.l.b16 %v5971
        %v6004 = vunpack.c.l.b16 %v5972
        %v6005 = vunpack.c.l.b16 %v5973
        %v6006 = vunpack.c.l.b16 %v5974
        %v6007 = vunpack.c.l.b16 %v5975
        %v6008 = vunpack.c.l.b16 %v5976
        %v6009 = vunpack.c.l.b16 %v5977
        %v6010 = vunpack.c.l.b16 %v5978
        %v6011 = vunpack.c.l.b16 %v5979
        %v6012 = vunpack.c.l.b16 %v5980
        %v6013 = vpack.c.b16 %v5998, %v5997
        %v6014 = vpack.c.b16 %v6000, %v5999
        %v6015 = vpack.c.b16 %v6002, %v6001
        %v6016 = vpack.c.b16 %v6004, %v6003
        %v6017 = vpack.c.b16 %v6006, %v6005
        %v6018 = vpack.c.b16 %v6008, %v6007
        %v6019 = vpack.c.b16 %v6010, %v6009
        %v6020 = vpack.c.b16 %v6012, %v6011
        %6029 = vmatprep.subr.bf16.mxu0 0
        %6030 = vmatpush1.bf16.msra.mxu0 %v6013
        %6031 = vmatprep.subr.bf16.mxu0 0
        %6032 = vmatpush1.bf16.msra.mxu0 %v6014
        %6033 = vmatprep.subr.bf16.mxu0 0
        %6034 = vmatpush1.bf16.msra.mxu0 %v6015
        %6035 = vmatprep.subr.bf16.mxu0 0
        %6036 = vmatpush1.bf16.msra.mxu0 %v6016
        %6037 = vmatprep.subr.bf16.mxu0 0
        %6038 = vmatpush1.bf16.msra.mxu0 %v6017
        %6039 = vmatprep.subr.bf16.mxu0 0
        %6040 = vmatpush1.bf16.msra.mxu0 %v6018
        %6041 = vmatprep.subr.bf16.mxu0 0
        %6042 = vmatpush1.bf16.msra.mxu0 %v6019
        %6043 = vmatprep.subr.bf16.mxu0 0
        %6044 = vmatpush1.bf16.msra.mxu0 %v6020
        %6045 = vmatprep.subr.bf16.mxu0 0
        %6046 = vmatpush1.bf16.msra.mxu0 0
        %6047 = vmatprep.subr.bf16.mxu0 0
        %6048 = vmatpush1.bf16.msra.mxu0 0
        %6049 = vmatprep.subr.bf16.mxu0 0
        %6050 = vmatpush1.bf16.msra.mxu0 0
        %6051 = vmatprep.subr.bf16.mxu0 0
        %6052 = vmatpush1.bf16.msra.mxu0 0
        %6053 = vmatprep.subr.bf16.mxu0 0
        %6054 = vmatpush1.bf16.msra.mxu0 0
        %6055 = vmatprep.subr.bf16.mxu0 0
        %6056 = vmatpush1.bf16.msra.mxu0 0
        %6057 = vmatprep.subr.bf16.mxu0 0
        %6058 = vmatpush1.bf16.msra.mxu0 0
        %6059 = vmatprep.subr.bf16.mxu0 0
        %6060 = vmatpush1.bf16.msra.mxu0 0
        %6061 = vmatprep.mubr.bf16.mxu0 0
        %6062 = vmatmul.mubr.bf16.gmra.mrb[0].mxu0 %v5949
        %v6063 = vpop.f32.mrb[0].mxu0
        %v6064 = vadd.f32 0.0, %v6063
        %v6065 = vpop.f32.mrb[0].mxu0
        %v6066 = vpop.f32.mrb[0].mxu0
        %v6067 = vadd.f32 0.0, %v6066
        %v6068 = vpop.f32.mrb[0].mxu0
        %6069 = vmatprep.mubr.bf16.mxu0 0
        %6070 = vmatmul.mubr.bf16.gmra.mrb[0].mxu0 %v5950
        %v6071 = vpop.f32.mrb[0].mxu0
        %v6072 = vadd.f32 0.0, %v6071
        %v6073 = vpop.f32.mrb[0].mxu0
        %v6074 = vpop.f32.mrb[0].mxu0
        %v6075 = vadd.f32 0.0, %v6074
        %v6076 = vpop.f32.mrb[0].mxu0
        %6077 = vmatprep.mubr.bf16.mxu0 0
        %6078 = vmatmul.mubr.bf16.gmra.mrb[0].mxu0 %v5951
        %v6079 = vpop.f32.mrb[0].mxu0
        %v6080 = vadd.f32 0.0, %v6079
        %v6081 = vpop.f32.mrb[0].mxu0
        %v6082 = vpop.f32.mrb[0].mxu0
        %v6083 = vadd.f32 0.0, %v6082
        %v6084 = vpop.f32.mrb[0].mxu0
        %6085 = vmatprep.mubr.bf16.mxu0 0
        %6086 = vmatmul.mubr.bf16.gmra.mrb[0].mxu0 %v5952
        %v6087 = vpop.f32.mrb[0].mxu0
        %v6088 = vadd.f32 0.0, %v6087
        %v6089 = vpop.f32.mrb[0].mxu0
        %v6090 = vpop.f32.mrb[0].mxu0
        %v6091 = vadd.f32 0.0, %v6090
        %v6092 = vpop.f32.mrb[0].mxu0
        %6093 = vmatprep.mubr.bf16.mxu0 0
        %6094 = vmatmul.mubr.bf16.gmra.mrb[0].mxu0 %v5953
        %v6095 = vpop.f32.mrb[0].mxu0
        %v6096 = vadd.f32 0.0, %v6095
        %v6097 = vpop.f32.mrb[0].mxu0
        %v6098 = vpop.f32.mrb[0].mxu0
        %v6099 = vadd.f32 0.0, %v6098
        %v6100 = vpop.f32.mrb[0].mxu0
        %6101 = vmatprep.mubr.bf16.mxu0 0
        %6102 = vmatmul.mubr.bf16.gmra.mrb[0].mxu0 %v5954
        %v6103 = vpop.f32.mrb[0].mxu0
        %v6104 = vadd.f32 0.0, %v6103
        %v6105 = vpop.f32.mrb[0].mxu0
        %v6106 = vpop.f32.mrb[0].mxu0
        %v6107 = vadd.f32 0.0, %v6106
        %v6108 = vpop.f32.mrb[0].mxu0
        %6109 = vmatprep.mubr.bf16.mxu0 0
        %6110 = vmatmul.mubr.bf16.gmra.mrb[0].mxu0 %v5955
        %v6111 = vpop.f32.mrb[0].mxu0
        %v6112 = vadd.f32 0.0, %v6111
        %v6113 = vpop.f32.mrb[0].mxu0
        %v6114 = vpop.f32.mrb[0].mxu0
        %v6115 = vadd.f32 0.0, %v6114
        %v6116 = vpop.f32.mrb[0].mxu0
        %6117 = vmatprep.mubr.bf16.mxu0 0
        %6118 = vmatmul.mubr.bf16.gmra.mrb[0].mxu0 %v5956
        %v6119 = vpop.f32.mrb[0].mxu0
        %v6120 = vadd.f32 0.0, %v6119
        %v6121 = vpop.f32.mrb[0].mxu0
        %v6122 = vpop.f32.mrb[0].mxu0
        %v6123 = vadd.f32 0.0, %v6122
        %v6124 = vpop.f32.mrb[0].mxu0
        %6125 = vmatprep.mubr.bf16.mxu0 0
        %6126 = vmatmul.mubr.bf16.gmra.mrb[0].mxu0 %v5957
        %v6127 = vpop.f32.mrb[0].mxu0
        %v6128 = vadd.f32 0.0, %v6127
        %v6129 = vpop.f32.mrb[0].mxu0
        %v6130 = vpop.f32.mrb[0].mxu0
        %v6131 = vadd.f32 0.0, %v6130
        %v6132 = vpop.f32.mrb[0].mxu0
        %6133 = vmatprep.mubr.bf16.mxu0 0
        %6134 = vmatmul.mubr.bf16.gmra.mrb[0].mxu0 %v5958
        %v6135 = vpop.f32.mrb[0].mxu0
        %v6136 = vadd.f32 0.0, %v6135
        %v6137 = vpop.f32.mrb[0].mxu0
        %v6138 = vpop.f32.mrb[0].mxu0
        %v6139 = vadd.f32 0.0, %v6138
        %v6140 = vpop.f32.mrb[0].mxu0
        %6141 = vmatprep.mubr.bf16.mxu0 0
        %6142 = vmatmul.mubr.bf16.gmra.mrb[0].mxu0 %v5959
        %v6143 = vpop.f32.mrb[0].mxu0
        %v6144 = vadd.f32 0.0, %v6143
        %v6145 = vpop.f32.mrb[0].mxu0
        %v6146 = vpop.f32.mrb[0].mxu0
        %v6147 = vadd.f32 0.0, %v6146
        %v6148 = vpop.f32.mrb[0].mxu0
        %6149 = vmatprep.mubr.bf16.mxu0 0
        %6150 = vmatmul.mubr.bf16.gmra.mrb[0].mxu0 %v5960
        %v6151 = vpop.f32.mrb[0].mxu0
        %v6152 = vadd.f32 0.0, %v6151
        %v6153 = vpop.f32.mrb[0].mxu0
        %v6154 = vpop.f32.mrb[0].mxu0
        %v6155 = vadd.f32 0.0, %v6154
        %v6156 = vpop.f32.mrb[0].mxu0
        %6157 = vmatprep.mubr.bf16.mxu0 0
        %6158 = vmatmul.mubr.bf16.gmra.mrb[0].mxu0 %v5961
        %v6159 = vpop.f32.mrb[0].mxu0
        %v6160 = vadd.f32 0.0, %v6159
        %v6161 = vpop.f32.mrb[0].mxu0
        %v6162 = vpop.f32.mrb[0].mxu0
        %v6163 = vadd.f32 0.0, %v6162
        %v6164 = vpop.f32.mrb[0].mxu0
        %6165 = vmatprep.mubr.bf16.mxu0 0
        %6166 = vmatmul.mubr.bf16.gmra.mrb[0].mxu0 %v5962
        %v6167 = vpop.f32.mrb[0].mxu0
        %v6168 = vadd.f32 0.0, %v6167
        %v6169 = vpop.f32.mrb[0].mxu0
        %v6170 = vpop.f32.mrb[0].mxu0
        %v6171 = vadd.f32 0.0, %v6170
        %v6172 = vpop.f32.mrb[0].mxu0
        %6173 = vmatprep.mubr.bf16.mxu0 0
        %6174 = vmatmul.mubr.bf16.gmra.mrb[0].mxu0 %v5963
        %v6175 = vpop.f32.mrb[0].mxu0
        %v6176 = vadd.f32 0.0, %v6175
        %v6177 = vpop.f32.mrb[0].mxu0
        %v6178 = vpop.f32.mrb[0].mxu0
        %v6179 = vadd.f32 0.0, %v6178
        %v6180 = vpop.f32.mrb[0].mxu0
        %6181 = vmatprep.mubr.bf16.mxu0 0
        %6182 = vmatmul.mubr.bf16.gmra.mrb[0].mxu0 %v5964
        %v6183 = vpop.f32.mrb[0].mxu0
        %v6184 = vadd.f32 0.0, %v6183
        %v6185 = vpop.f32.mrb[0].mxu0
        %v6186 = vpop.f32.mrb[0].mxu0
        %v6187 = vadd.f32 0.0, %v6186
        %v6188 = vpop.f32.mrb[0].mxu0
        %6189 = vdwg.mxu0
        %v6190 = vpack.c.bf16 %v6067, %v6064
        %v6191 = vpack.c.bf16 %v6075, %v6072
        %v6192 = vpack.c.bf16 %v6083, %v6080
        %v6193 = vpack.c.bf16 %v6091, %v6088
        %v6194 = vpack.c.bf16 %v6099, %v6096
        %v6195 = vpack.c.bf16 %v6107, %v6104
        %v6196 = vpack.c.bf16 %v6115, %v6112
        %v6197 = vpack.c.bf16 %v6123, %v6120
        %v6198 = vpack.c.bf16 %v6131, %v6128
        %v6199 = vpack.c.bf16 %v6139, %v6136
        %v6200 = vpack.c.bf16 %v6147, %v6144
        %v6201 = vpack.c.bf16 %v6155, %v6152
        %v6202 = vpack.c.bf16 %v6163, %v6160
        %v6203 = vpack.c.bf16 %v6171, %v6168
        %v6204 = vpack.c.bf16 %v6179, %v6176
        %v6205 = vpack.c.bf16 %v6187, %v6184
        %v6222 = vunpack.c.l.b16 %v6190
        %v6223 = vunpack.c.h.b16 %v6190
        %v6224 = vunpack.c.l.b16 %v6191
        %v6225 = vunpack.c.h.b16 %v6191
        %v6226 = vunpack.c.l.b16 %v6192
        %v6227 = vunpack.c.h.b16 %v6192
        %v6228 = vunpack.c.l.b16 %v6193
        %v6229 = vunpack.c.h.b16 %v6193
        %v6230 = vunpack.c.l.b16 %v6194
        %v6231 = vunpack.c.h.b16 %v6194
        %v6232 = vunpack.c.l.b16 %v6195
        %v6233 = vunpack.c.h.b16 %v6195
        %v6234 = vunpack.c.l.b16 %v6196
        %v6235 = vunpack.c.h.b16 %v6196
        %v6236 = vunpack.c.l.b16 %v6197
        %v6237 = vunpack.c.h.b16 %v6197
        %v6238 = vunpack.c.l.b16 %v6198
        %v6239 = vunpack.c.h.b16 %v6198
        %v6240 = vunpack.c.l.b16 %v6199
        %v6241 = vunpack.c.h.b16 %v6199
        %v6242 = vunpack.c.l.b16 %v6200
        %v6243 = vunpack.c.h.b16 %v6200
        %v6244 = vunpack.c.l.b16 %v6201
        %v6245 = vunpack.c.h.b16 %v6201
        %v6246 = vunpack.c.l.b16 %v6202
        %v6247 = vunpack.c.h.b16 %v6202
        %v6248 = vunpack.c.l.b16 %v6203
        %v6249 = vunpack.c.h.b16 %v6203
        %v6250 = vunpack.c.l.b16 %v6204
        %v6251 = vunpack.c.h.b16 %v6204
        %v6252 = vunpack.c.l.b16 %v6205
        %v6253 = vunpack.c.h.b16 %v6205
        %v6254 = vpack.c.b16 %v6222, %v6222
        %v6255 = vpack.c.b16 %v6223, %v6223
        %v6256 = vpack.c.b16 %v6224, %v6224
        %v6257 = vpack.c.b16 %v6225, %v6225
        %v6258 = vpack.c.b16 %v6226, %v6226
        %v6259 = vpack.c.b16 %v6227, %v6227
        %v6260 = vpack.c.b16 %v6228, %v6228
        %v6261 = vpack.c.b16 %v6229, %v6229
        %v6262 = vpack.c.b16 %v6230, %v6230
        %v6263 = vpack.c.b16 %v6231, %v6231
        %v6264 = vpack.c.b16 %v6232, %v6232
        %v6265 = vpack.c.b16 %v6233, %v6233
        %v6266 = vpack.c.b16 %v6234, %v6234
        %v6267 = vpack.c.b16 %v6235, %v6235
        %v6268 = vpack.c.b16 %v6236, %v6236
        %v6269 = vpack.c.b16 %v6237, %v6237
        %v6270 = vpack.c.b16 %v6238, %v6238
        %v6271 = vpack.c.b16 %v6239, %v6239
        %v6272 = vpack.c.b16 %v6240, %v6240
        %v6273 = vpack.c.b16 %v6241, %v6241
        %v6274 = vpack.c.b16 %v6242, %v6242
        %v6275 = vpack.c.b16 %v6243, %v6243
        %v6276 = vpack.c.b16 %v6244, %v6244
        %v6277 = vpack.c.b16 %v6245, %v6245
        %v6278 = vpack.c.b16 %v6246, %v6246
        %v6279 = vpack.c.b16 %v6247, %v6247
        %v6280 = vpack.c.b16 %v6248, %v6248
        %v6281 = vpack.c.b16 %v6249, %v6249
        %v6282 = vpack.c.b16 %v6250, %v6250
        %v6283 = vpack.c.b16 %v6251, %v6251
        %v6284 = vpack.c.b16 %v6252, %v6252
        %v6285 = vpack.c.b16 %v6253, %v6253
        %6318 = vst [vmem:[%s417] sm:$0xf] %v6254
        %6319 = vst [vmem:[%s417 + $0x4] sm:$0xf] %v6255
        %6320 = vst [vmem:[%s417 + $0x8] sm:$0xf] %v6256
        %6321 = vst [vmem:[%s417 + $0xc] sm:$0xf] %v6257
        %6322 = vst [vmem:[%s417 + $0x10] sm:$0xf] %v6258
        %6323 = vst [vmem:[%s417 + $0x14] sm:$0xf] %v6259
        %6324 = vst [vmem:[%s417 + $0x18] sm:$0xf] %v6260
        %6325 = vst [vmem:[%s417 + $0x1c] sm:$0xf] %v6261
        %6326 = vst [vmem:[%s417 + $0x20] sm:$0xf] %v6262
        %6327 = vst [vmem:[%s417 + $0x24] sm:$0xf] %v6263
        %6328 = vst [vmem:[%s417 + $0x28] sm:$0xf] %v6264
        %6329 = vst [vmem:[%s417 + $0x2c] sm:$0xf] %v6265
        %6330 = vst [vmem:[%s417 + $0x30] sm:$0xf] %v6266
        %6331 = vst [vmem:[%s417 + $0x34] sm:$0xf] %v6267
        %6332 = vst [vmem:[%s417 + $0x38] sm:$0xf] %v6268
        %6333 = vst [vmem:[%s417 + $0x3c] sm:$0xf] %v6269
        %6334 = vst [vmem:[%s417 + $0x40] sm:$0xf] %v6270
        %6335 = vst [vmem:[%s417 + $0x44] sm:$0xf] %v6271
        %6336 = vst [vmem:[%s417 + $0x48] sm:$0xf] %v6272
        %6337 = vst [vmem:[%s417 + $0x4c] sm:$0xf] %v6273
        %6338 = vst [vmem:[%s417 + $0x50] sm:$0xf] %v6274
        %6339 = vst [vmem:[%s417 + $0x54] sm:$0xf] %v6275
        %6340 = vst [vmem:[%s417 + $0x58] sm:$0xf] %v6276
        %6341 = vst [vmem:[%s417 + $0x5c] sm:$0xf] %v6277
        %6342 = vst [vmem:[%s417 + $0x60] sm:$0xf] %v6278
        %6343 = vst [vmem:[%s417 + $0x64] sm:$0xf] %v6279
        %6344 = vst [vmem:[%s417 + $0x68] sm:$0xf] %v6280
        %6345 = vst [vmem:[%s417 + $0x6c] sm:$0xf] %v6281
        %6346 = vst [vmem:[%s417 + $0x70] sm:$0xf] %v6282
        %6347 = vst [vmem:[%s417 + $0x74] sm:$0xf] %v6283
        %6348 = vst [vmem:[%s417 + $0x78] sm:$0xf] %v6284
        %6349 = vst [vmem:[%s417 + $0x7c] sm:$0xf] %v6285
        %s6350 = sand.u32 %s210, 1
        %s6351 = scalar_lea.sflag [#allocation5], %s6350
        %s6352 = sand.u32 %s210, 1
        %s6353 = smul.addr %s6352, 128
        %s6354 = scalar_lea.vmem [#allocation17], %s6353
        // Predicated region
        $region85: #{tpu_custom_call.1} parent=51 // pred_check
          %p6355 = pneg %p220
        $region86: #{tpu_custom_call.1} parent=51 // pred_check_branch
          %6357 = sbr.rel (%p6355) target = $region88
        $region87: #{tpu_custom_call.1} parent=51 // pred_region
          %s6359 = ssub.s32 2048, 2048
          %6360 = vsyncadd %s6351, %s6359
          %s6361 = smul.addr %s29, 32
          %s6362 = smul.addr %s6361, 64
          %s6363 = scalar_lea.hbm %s8, %s6362
          %s6364 = sshll.u32 %s6354, 4
          %s6365 = int_to_ptr.vmem [resolvable:$true] %s6364
          %6370 = dma.vmem_to_hbm [thread:$0]  %s6365, 2048, %s6363, %s6351, 64, 64, 4
        $region88: #{tpu_custom_call.1} parent=51 // pred_fallthru
          _
      $region52: #{tpu_custom_call.1} parent=5 // pred_fallthru
        _
      %p6371 = scmp.le.s32.totalorder 2, %s24
      // Predicated region
      $region89: #{tpu_custom_call.1} parent=5 // pred_check
        %p6372 = pneg %p6371
      $region90: #{tpu_custom_call.1} parent=5 // pred_check_branch
        %6374 = sbr.rel (%p6372) target = $region92
      $region91: #{tpu_custom_call.1} parent=5 // pred_region
        %s6375 = ssub.s32 %s24, 2
        // Predicated region
        $region93: #{tpu_custom_call.1} parent=91 // pred_check
          %p6376 = pneg %p226
        $region94: #{tpu_custom_call.1} parent=91 // pred_check_branch
          %6378 = sbr.rel (%p6376) target = $region96
        $region95: #{tpu_custom_call.1} parent=91 // pred_region
          %s6379 = sand.u32 %s211, 1
          %s6380 = scalar_lea.sflag [#allocation5], %s6379
          %s6381 = sand.u32 %s211, 1
          %s6382 = smul.addr %s6381, 128
          %s6383 = scalar_lea.vmem [#allocation17], %s6382
          %6384 = dma.done %s6380, 2048
        $region96: #{tpu_custom_call.1} parent=91 // pred_fallthru
          _
      $region92: #{tpu_custom_call.1} parent=5 // pred_fallthru
        _
    $region6: #{tpu_custom_call.1} parent=1 // loop_footer
      %s28 = sadd.s32 1, %s24
    $region7: #{tpu_custom_call.1} parent=1 // loop_footer_branch
      %23 = sbr.rel target = $region3
    $region8: #{tpu_custom_call.1} parent=1 // loop_exit
      _
    %6385 = vsyncpa [#allocation4], 1
    %s6386 = scalar_lea.sflag [#allocation4], 1
    %6387 = vsyncpa %s6386, 1
    %6388 = vsyncpa [#allocation7], 1
    %6389 = vsyncpa [#allocation10], 1
    %6390 = vsyncpa [#allocation13], 1
    %6391 = vsyncpa [#allocation16], 1
    %6392 = vsyncpa [#allocation5], 1
    %s6393 = scalar_lea.sflag [#allocation5], 1
    %6394 = vsyncpa %s6393, 1

</llo_original>
